<compile_context>
chip_gen: v6e
topology: v6e:2x2x1
jax: 0.10.0
libtpu: 0.0.40
codegen_flags: <defaults>
</compile_context>

<pallas_src>
import functools

import jax
import jax.numpy as jnp
from jax.experimental import pallas as pl
from jax.experimental.pallas import tpu as pltpu


# ----------------------------------------------------------------------------
# In-script cfg (replaces parse_cfg(cfgfile_path); no file reads).
# ----------------------------------------------------------------------------
CFG_BLOCKS = [
    {'type': 'net', 'channels': '4', 'height': '16', 'width': '16'},
    {'type': 'convolutional', 'batch_normalize': '1', 'filters': '8',  'size': '3', 'stride': '1', 'pad': '1', 'activation': 'leaky'},   # 0: (N,8,16,16)
    {'type': 'convolutional', 'batch_normalize': '1', 'filters': '16', 'size': '3', 'stride': '2', 'pad': '1', 'activation': 'leaky'},   # 1: (N,16,8,8)
    {'type': 'convolutional', 'batch_normalize': '1', 'filters': '8',  'size': '1', 'stride': '1', 'pad': '1', 'activation': 'leaky'},   # 2: (N,8,8,8)
    {'type': 'convolutional', 'batch_normalize': '1', 'filters': '16', 'size': '3', 'stride': '1', 'pad': '1', 'activation': 'leaky'},   # 3: (N,16,8,8)
    {'type': 'shortcut', 'from': '-3', 'activation': 'linear'},                                                                          # 4: (N,16,8,8)
    {'type': 'convolutional', 'filters': '21', 'size': '1', 'stride': '1', 'pad': '1', 'activation': 'linear'},                          # 5: (N,21,8,8)
    {'type': 'yolo', 'mask': '0,1,2', 'anchors': '2,3, 4,5, 6,7, 8,9, 10,11, 12,13', 'classes': '2', 'num': '6'},                        # 6: (N,192,7)
    {'type': 'route', 'layers': '-3'},                                                                                                   # 7: (N,16,8,8)
    {'type': 'convolutional', 'batch_normalize': '1', 'filters': '8',  'size': '1', 'stride': '1', 'pad': '1', 'activation': 'leaky'},   # 8: (N,8,8,8)
    {'type': 'upsample', 'stride': '2'},                                                                                                 # 9: (N,8,16,16)
    {'type': 'route', 'layers': '-1, -10'},                                                                                              # 10: (N,16,16,16)
    {'type': 'convolutional', 'batch_normalize': '1', 'filters': '16', 'size': '3', 'stride': '1', 'pad': '1', 'activation': 'leaky'},   # 11: (N,16,16,16)
    {'type': 'convolutional', 'filters': '21', 'size': '1', 'stride': '1', 'pad': '1', 'activation': 'linear'},                          # 12: (N,21,16,16)
    {'type': 'yolo', 'mask': '3,4,5', 'anchors': '2,3, 4,5, 6,7, 8,9, 10,11, 12,13', 'classes': '2', 'num': '6'},                        # 13: (N,768,7)
]


def _mosaic_params(**kw):
    # Version-robust constructor for Mosaic compiler params.
    cls = getattr(pltpu, "CompilerParams", None)
    if cls is None:
        cls = getattr(pltpu, "TPUCompilerParams")
    return cls(**kw)


# ----------------------------------------------------------------------------
# Pallas kernels
# ----------------------------------------------------------------------------
def _conv_mm_kernel(p_ref, w_ref, s_ref, b_ref, *rest, leaky, has_res):
    # p_ref: (tm, K) bf16 im2col patches (batch folded into M)
    # w_ref: (K, Cout) bf16 ; s_ref/b_ref: (1, Cout) fp32 folded BN scale / bias
    # optional r_ref: (tm, Cout) fp32 residual (fused shortcut, added AFTER activation)
    if has_res:
        r_ref, o_ref = rest
    else:
        (o_ref,) = rest
    y = jnp.dot(p_ref[...], w_ref[...], preferred_element_type=jnp.float32)  # MXU, f32 acc
    y = y * s_ref[...] + b_ref[...]
    if leaky:
        y = jnp.where(y > 0, y, 0.1 * y)            # LeakyReLU(0.1)
    if has_res:
        y = y + r_ref[...]                          # shortcut: add after activation
    o_ref[...] = y


def _yolo_kernel(p_ref, g_ref, o_ref, *, stride):
    # p_ref: (N, B, M) raw predictions, attributes on sublanes, M=A*g*g lane-dense
    # g_ref: (4, M) = [cx; cy; pw; ph]
    p = p_ref[...]
    gi = g_ref[...]
    sig = jax.nn.sigmoid(p)                         # EUP exp path, numerically stable
    ex = jnp.exp(p)
    cx = gi[0, :][None, None, :]
    cy = gi[1, :][None, None, :]
    pw = gi[2, :][None, None, :]
    ph = gi[3, :][None, None, :]
    bx = (sig + cx) * stride
    by = (sig + cy) * stride
    bw = ex * pw * stride
    bh = ex * ph * stride
    row = jax.lax.broadcasted_iota(jnp.int32, p.shape, 1)   # attribute index (sublane axis)
    out = jnp.where(row == 0, bx,
          jnp.where(row == 1, by,
          jnp.where(row == 2, bw,
          jnp.where(row == 3, bh, sig))))          # rows >=4: conf / class sigmoids
    o_ref[...] = out


# ----------------------------------------------------------------------------
# Wrappers (glue + pallas_call)
# ----------------------------------------------------------------------------
def conv2d_pallas(x, w, scale, bias, stride, pad, leaky, residual=None):
    """x: (N,H,W,Cin) NHWC; w: (KH,KW,Cin,Cout); scale/bias: (1,Cout) fp32;
    residual: optional (N,Ho,Wo,Cout) fp32 added after activation (fused shortcut)."""
    N, H, W, Cin = x.shape
    KH, KW, _, Cout = w.shape
    xp = jnp.pad(x, ((0, 0), (pad, pad), (pad, pad), (0, 0)))
    Hp, Wp = H + 2 * pad, W + 2 * pad
    Ho = (Hp - KH) // stride + 1
    Wo = (Wp - KW) // stride + 1

    # im2col (XLA glue): column order (kh, kw, cin) matches w.reshape below
    cols = []
    for kh in range(KH):
        for kw in range(KW):
            cols.append(xp[:, kh:kh + (Ho - 1) * stride + 1:stride,
                           kw:kw + (Wo - 1) * stride + 1:stride, :])
    K = KH * KW * Cin
    M = N * Ho * Wo                                   # batch folded into M
    patches = jnp.concatenate(cols, axis=-1).reshape(M, K).astype(jnp.bfloat16)
    wm = w.reshape(K, Cout).astype(jnp.bfloat16)

    # split M across two "parallel" grid blocks (v7x has 2 TensorCores per chip)
    msplit = 2 if (M % 16 == 0) else 1
    tm = M // msplit

    has_res = residual is not None
    kern = functools.partial(_conv_mm_kernel, leaky=leaky, has_res=has_res)

    inputs = [patches, wm, scale, bias]
    in_specs = [
        pl.BlockSpec((tm, K), lambda i: (i, 0)),
        pl.BlockSpec((K, Cout), lambda i: (0, 0)),
        pl.BlockSpec((1, Cout), lambda i: (0, 0)),
        pl.BlockSpec((1, Cout), lambda i: (0, 0)),
    ]
    if has_res:
        inputs.append(residual.reshape(M, Cout).astype(jnp.float32))
        in_specs.append(pl.BlockSpec((tm, Cout), lambda i: (i, 0)))

    out = pl.pallas_call(
        kern,
        out_shape=jax.ShapeDtypeStruct((M, Cout), jnp.float32),
        grid=(msplit,),
        in_specs=in_specs,
        out_specs=pl.BlockSpec((tm, Cout), lambda i: (i, 0)),
        compiler_params=_mosaic_params(dimension_semantics=("parallel",)),
    )(*inputs)
    return out.reshape(N, Ho, Wo, Cout)


def yolo_decode_pallas(feat_nhwc, anchors, num_classes, img_dim):
    N, g, g2, C = feat_nhwc.shape
    assert g == g2
    A = len(anchors)
    B = 5 + num_classes
    assert C == A * B
    stride = img_dim / g
    M = A * g * g

    # Reproduce PyTorch view(bs,A,B,g,g).permute(0,1,3,4,2) ordering, but laid out as
    # (N, B, M) with m = a*g*g + i*g + j so M sits on the lane axis (lane-dense stores).
    pred = feat_nhwc.reshape(N, g, g, A, B).transpose(0, 4, 3, 1, 2).reshape(N, B, M)

    gy, gx = jnp.meshgrid(jnp.arange(g, dtype=jnp.float32),
                          jnp.arange(g, dtype=jnp.float32), indexing='ij')
    cx = jnp.tile(gx.reshape(-1), A)
    cy = jnp.tile(gy.reshape(-1), A)
    anc = jnp.array(anchors, dtype=jnp.float32) / stride
    pw = jnp.repeat(anc[:, 0], g * g)
    ph = jnp.repeat(anc[:, 1], g * g)
    ginfo = jnp.stack([cx, cy, pw, ph], axis=0)       # (4, M)

    kern = functools.partial(_yolo_kernel, stride=float(stride))
    out_bm = pl.pallas_call(
        kern,
        out_shape=jax.ShapeDtypeStruct((N, B, M), jnp.float32),
        grid=(1,),
        in_specs=[pl.BlockSpec((N, B, M), lambda i: (0, 0, 0)),
                  pl.BlockSpec((4, M), lambda i: (0, 0))],
        out_specs=pl.BlockSpec((N, B, M), lambda i: (0, 0, 0)),
    )(pred, ginfo)
    return jnp.transpose(out_bm, (0, 2, 1))           # -> (N, M, B) like PyTorch output


# ----------------------------------------------------------------------------
# Deterministic parameter init (mirrors create_modules shapes; BN folded to
# eval-mode scale/bias using running stats, eps=1e-5).
# ----------------------------------------------------------------------------
def init_params(blocks, key):
    params = []
    ch = []
    cur = int(blocks[0]['channels'])
    for i, b in enumerate(blocks[1:]):
        t = b['type']
        if t == 'convolutional':
            cin = cur
            cout = int(b['filters'])
            k = int(b['size'])
            kk = jax.random.fold_in(key, i)
            w = 0.05 * jax.random.normal(jax.random.fold_in(kk, 0), (k, k, cin, cout), jnp.float32)
            if int(b.get('batch_normalize', 0)):
                gamma = 1.0 + 0.1 * jax.random.normal(jax.random.fold_in(kk, 1), (cout,), jnp.float32)
                beta = 0.1 * jax.random.normal(jax.random.fold_in(kk, 2), (cout,), jnp.float32)
                rmean = 0.05 * jax.random.normal(jax.random.fold_in(kk, 3), (cout,), jnp.float32)
                rvar = 1.0 + 0.1 * jax.random.uniform(jax.random.fold_in(kk, 4), (cout,), jnp.float32)
                scale = gamma / jnp.sqrt(rvar + 1e-5)
                bias = beta - rmean * scale
            else:
                scale = jnp.ones((cout,), jnp.float32)
                bias = 0.1 * jax.random.normal(jax.random.fold_in(kk, 5), (cout,), jnp.float32)
            params.append({'w': w, 'scale': scale.reshape(1, cout), 'bias': bias.reshape(1, cout)})
            cur = cout
        elif t == 'upsample':
            params.append(None)
        elif t == 'shortcut':
            params.append(None)
            cur = ch[i - 1]
        elif t == 'route':
            layers = [int(l) for l in b['layers'].split(',')]
            cur = sum(ch[l] for l in layers)
            params.append(None)
        elif t == 'yolo':
            params.append(None)
        ch.append(cur)
    return params


# ----------------------------------------------------------------------------
# DarkNet.forward (inference path)
# ----------------------------------------------------------------------------
def darknet_forward(x_nchw, blocks, params):
    x = jnp.transpose(x_nchw, (0, 2, 3, 1))            # NCHW -> NHWC
    img_dim = int(blocks[0]['height'])
    mods = blocks[1:]
    outputs = []
    yolo_out = []
    fused_shortcut = set()
    for i, b in enumerate(mods):
        t = b['type']
        if t == 'convolutional':
            p = params[i]
            k = int(b['size'])
            stride = int(b['stride'])
            pad = (k - 1) // 2 if int(b['pad']) else 0
            leaky = b['activation'] == 'leaky'
            residual = None
            # Fuse a following shortcut's add into this conv's epilogue when its
            # other operand is already computed.
            if i + 1 < len(mods) and mods[i + 1]['type'] == 'shortcut':
                ridx = i + 1 + int(mods[i + 1]['from'])
                if 0 <= ridx <= i - 1:
                    residual = outputs[ridx]
                    fused_shortcut.add(i + 1)
            x = conv2d_pallas(x, p['w'], p['scale'], p['bias'], stride, pad, leaky, residual)
        elif t == 'upsample':
            s = int(b['stride'])
            x = jnp.repeat(jnp.repeat(x, s, axis=1), s, axis=2)   # nearest-neighbor (glue)
        elif t == 'shortcut':
            if i in fused_shortcut:
                x = outputs[i - 1]                     # add already done in conv epilogue
            else:
                x = outputs[i - 1] + outputs[i + int(b['from'])]  # plain jnp; XLA fuses
        elif t == 'route':
            layers = [int(l) for l in b['layers'].split(',')]
            x = jnp.concatenate([outputs[l] for l in layers], axis=-1)  # channel concat (glue)
        elif t == 'yolo':
            mask = [int(m) for m in b['mask'].split(',')]
            a = [int(v) for v in b['anchors'].split(',')]
            anchors = [(a[j], a[j + 1]) for j in range(0, len(a), 2)]
            anchors = [anchors[m] for m in mask]
            num_classes = int(b['classes'])
            x = yolo_decode_pallas(x, anchors, num_classes, img_dim)
            yolo_out.append(x)
        outputs.append(x)
    return jnp.concatenate(yolo_out, axis=1)            # == torch.cat(yolo_output, 1)


if __name__ == "__main__":
    key = jax.random.PRNGKey(0)
    x = jax.random.normal(jax.random.fold_in(key, 999), (2, 4, 16, 16), jnp.float32)  # NCHW
    params = init_params(CFG_BLOCKS, jax.random.fold_in(key, 1))

    fwd = jax.jit(lambda xx: darknet_forward(xx, CFG_BLOCKS, params))
    out = fwd(x)
    jax.block_until_ready(out)

    # two yolo heads: 3*8*8 + 3*16*16 = 960 boxes, 5 + 2 classes = 7 attrs
    assert out.shape == (2, 960, 7), out.shape
    assert bool(jnp.all(jnp.isfinite(out)))
    print("KERNEL_OK")
</pallas_src>

<mosaic_0001>
module attributes {stable_mosaic.version = 11 : i64} {
  func.func @_conv_mm_kernel(%arg0: i32, %arg1: memref<256x36xbf16, #tpu.memory_space<vmem>>, %arg2: memref<36x8xbf16, #tpu.memory_space<vmem>>, %arg3: memref<1x8xf32, #tpu.memory_space<vmem>>, %arg4: memref<1x8xf32, #tpu.memory_space<vmem>>, %arg5: memref<256x8xf32, #tpu.memory_space<vmem>>) attributes {dimension_semantics = [#tpu.dimension_semantics<parallel>], iteration_bounds = array<i64: 2>, scalar_prefetch = 0 : i64, scratch_operands = 0 : i64, tpu.core_type = #tpu.core_type<tc>, window_params = [{transform_indices = @transform_0, window_bounds = array<i64: 256, 36>}, {pipeline_mode = #tpu.pipeline_mode<synchronous>, transform_indices = @transform_1, window_bounds = array<i64: 36, 8>}, {pipeline_mode = #tpu.pipeline_mode<synchronous>, transform_indices = @transform_2, window_bounds = array<i64: 1, 8>}, {pipeline_mode = #tpu.pipeline_mode<synchronous>, transform_indices = @transform_3, window_bounds = array<i64: 1, 8>}, {transform_indices = @transform_4, window_bounds = array<i64: 256, 8>}]} {
    %c0 = arith.constant 0 : index
    %c0_0 = arith.constant 0 : index
    %0 = vector.load %arg1[%c0, %c0_0] : memref<256x36xbf16, #tpu.memory_space<vmem>>, vector<256x36xbf16>
    %c0_1 = arith.constant 0 : index
    %c0_2 = arith.constant 0 : index
    %1 = vector.load %arg2[%c0_1, %c0_2] : memref<36x8xbf16, #tpu.memory_space<vmem>>, vector<36x8xbf16>
    %cst = arith.constant dense<0.000000e+00> : vector<256x8xf32>
    %2 = tpu.matmul %0, %1, %cst {dimension_numbers = #tpu.dot_dimension_numbers<[1], [0], [0], [1], [0, 0, 1, 1], [], []>} : vector<256x36xbf16>, vector<36x8xbf16>, vector<256x8xf32> -> vector<256x8xf32>
    %c0_3 = arith.constant 0 : index
    %c0_4 = arith.constant 0 : index
    %3 = vector.load %arg3[%c0_3, %c0_4] : memref<1x8xf32, #tpu.memory_space<vmem>>, vector<1x8xf32>
    %4 = vector.broadcast %3 : vector<1x8xf32> to vector<256x8xf32>
    %5 = arith.mulf %2, %4 : vector<256x8xf32>
    %c0_5 = arith.constant 0 : index
    %c0_6 = arith.constant 0 : index
    %6 = vector.load %arg4[%c0_5, %c0_6] : memref<1x8xf32, #tpu.memory_space<vmem>>, vector<1x8xf32>
    %7 = vector.broadcast %6 : vector<1x8xf32> to vector<256x8xf32>
    %8 = arith.addf %5, %7 : vector<256x8xf32>
    %cst_7 = arith.constant 0.000000e+00 : f32
    %9 = vector.broadcast %cst_7 : f32 to vector<256x8xf32>
    %10 = arith.cmpf ogt, %8, %9 : vector<256x8xf32>
    %cst_8 = arith.constant 1.000000e-01 : f32
    %11 = vector.broadcast %cst_8 : f32 to vector<256x8xf32>
    %12 = arith.mulf %11, %8 : vector<256x8xf32>
    %13 = arith.select %10, %8, %12 : vector<256x8xi1>, vector<256x8xf32>
    %c0_9 = arith.constant 0 : index
    %c0_10 = arith.constant 0 : index
    %14 = vector.load %arg5[%c0_9, %c0_10] : memref<256x8xf32, #tpu.memory_space<vmem>>, vector<256x8xf32>
    tpu.vector_store %arg5[%c0_9, %c0_10], %13 {strides = array<i32>} : memref<256x8xf32, #tpu.memory_space<vmem>>, vector<256x8xf32>,
    return
  }
  func.func @transform_0(%arg0: i32) -> (i32, i32) {
    %c0_i32 = arith.constant 0 : i32
    %c0_i32_0 = arith.constant 0 : i32
    return %arg0, %c0_i32 : i32, i32
  }
  func.func @transform_1(%arg0: i32) -> (i32, i32) {
    %c0_i32 = arith.constant 0 : i32
    %c0_i32_0 = arith.constant 0 : i32
    %c0_i32_1 = arith.constant 0 : i32
    return %c0_i32, %c0_i32_0 : i32, i32
  }
  func.func @transform_2(%arg0: i32) -> (i32, i32) {
    %c0_i32 = arith.constant 0 : i32
    %c0_i32_0 = arith.constant 0 : i32
    %c0_i32_1 = arith.constant 0 : i32
    return %c0_i32, %c0_i32_0 : i32, i32
  }
  func.func @transform_3(%arg0: i32) -> (i32, i32) {
    %c0_i32 = arith.constant 0 : i32
    %c0_i32_0 = arith.constant 0 : i32
    %c0_i32_1 = arith.constant 0 : i32
    return %c0_i32, %c0_i32_0 : i32, i32
  }
  func.func @transform_4(%arg0: i32) -> (i32, i32) {
    %c0_i32 = arith.constant 0 : i32
    %c0_i32_0 = arith.constant 0 : i32
    return %arg0, %c0_i32 : i32, i32
  }
}

module attributes {stable_mosaic.version = 11 : i64} {
  func.func @_conv_mm_kernel(%arg0: i32, %arg1: memref<64x16xbf16, #tpu.memory_space<vmem>>, %arg2: memref<16x8xbf16, #tpu.memory_space<vmem>>, %arg3: memref<1x8xf32, #tpu.memory_space<vmem>>, %arg4: memref<1x8xf32, #tpu.memory_space<vmem>>, %arg5: memref<64x8xf32, #tpu.memory_space<vmem>>) attributes {dimension_semantics = [#tpu.dimension_semantics<parallel>], iteration_bounds = array<i64: 2>, scalar_prefetch = 0 : i64, scratch_operands = 0 : i64, tpu.core_type = #tpu.core_type<tc>, window_params = [{transform_indices = @transform_0, window_bounds = array<i64: 64, 16>}, {pipeline_mode = #tpu.pipeline_mode<synchronous>, transform_indices = @transform_1, window_bounds = array<i64: 16, 8>}, {pipeline_mode = #tpu.pipeline_mode<synchronous>, transform_indices = @transform_2, window_bounds = array<i64: 1, 8>}, {pipeline_mode = #tpu.pipeline_mode<synchronous>, transform_indices = @transform_3, window_bounds = array<i64: 1, 8>}, {transform_indices = @transform_4, window_bounds = array<i64: 64, 8>}]} {
    %c0 = arith.constant 0 : index
    %c0_0 = arith.constant 0 : index
    %0 = vector.load %arg1[%c0, %c0_0] : memref<64x16xbf16, #tpu.memory_space<vmem>>, vector<64x16xbf16>
    %c0_1 = arith.constant 0 : index
    %c0_2 = arith.constant 0 : index
    %1 = vector.load %arg2[%c0_1, %c0_2] : memref<16x8xbf16, #tpu.memory_space<vmem>>, vector<16x8xbf16>
    %cst = arith.constant dense<0.000000e+00> : vector<64x8xf32>
    %2 = tpu.matmul %0, %1, %cst {dimension_numbers = #tpu.dot_dimension_numbers<[1], [0], [0], [1], [0, 0, 1, 1], [], []>} : vector<64x16xbf16>, vector<16x8xbf16>, vector<64x8xf32> -> vector<64x8xf32>
    %c0_3 = arith.constant 0 : index
    %c0_4 = arith.constant 0 : index
    %3 = vector.load %arg3[%c0_3, %c0_4] : memref<1x8xf32, #tpu.memory_space<vmem>>, vector<1x8xf32>
    %4 = vector.broadcast %3 : vector<1x8xf32> to vector<64x8xf32>
    %5 = arith.mulf %2, %4 : vector<64x8xf32>
    %c0_5 = arith.constant 0 : index
    %c0_6 = arith.constant 0 : index
    %6 = vector.load %arg4[%c0_5, %c0_6] : memref<1x8xf32, #tpu.memory_space<vmem>>, vector<1x8xf32>
    %7 = vector.broadcast %6 : vector<1x8xf32> to vector<64x8xf32>
    %8 = arith.addf %5, %7 : vector<64x8xf32>
    %cst_7 = arith.constant 0.000000e+00 : f32
    %9 = vector.broadcast %cst_7 : f32 to vector<64x8xf32>
    %10 = arith.cmpf ogt, %8, %9 : vector<64x8xf32>
    %cst_8 = arith.constant 1.000000e-01 : f32
    %11 = vector.broadcast %cst_8 : f32 to vector<64x8xf32>
    %12 = arith.mulf %11, %8 : vector<64x8xf32>
    %13 = arith.select %10, %8, %12 : vector<64x8xi1>, vector<64x8xf32>
    %c0_9 = arith.constant 0 : index
    %c0_10 = arith.constant 0 : index
    %14 = vector.load %arg5[%c0_9, %c0_10] : memref<64x8xf32, #tpu.memory_space<vmem>>, vector<64x8xf32>
    tpu.vector_store %arg5[%c0_9, %c0_10], %13 {strides = array<i32>} : memref<64x8xf32, #tpu.memory_space<vmem>>, vector<64x8xf32>,
    return
  }
  func.func @transform_0(%arg0: i32) -> (i32, i32) {
    %c0_i32 = arith.constant 0 : i32
    %c0_i32_0 = arith.constant 0 : i32
    return %arg0, %c0_i32 : i32, i32
  }
  func.func @transform_1(%arg0: i32) -> (i32, i32) {
    %c0_i32 = arith.constant 0 : i32
    %c0_i32_0 = arith.constant 0 : i32
    %c0_i32_1 = arith.constant 0 : i32
    return %c0_i32, %c0_i32_0 : i32, i32
  }
  func.func @transform_2(%arg0: i32) -> (i32, i32) {
    %c0_i32 = arith.constant 0 : i32
    %c0_i32_0 = arith.constant 0 : i32
    %c0_i32_1 = arith.constant 0 : i32
    return %c0_i32, %c0_i32_0 : i32, i32
  }
  func.func @transform_3(%arg0: i32) -> (i32, i32) {
    %c0_i32 = arith.constant 0 : i32
    %c0_i32_0 = arith.constant 0 : i32
    %c0_i32_1 = arith.constant 0 : i32
    return %c0_i32, %c0_i32_0 : i32, i32
  }
  func.func @transform_4(%arg0: i32) -> (i32, i32) {
    %c0_i32 = arith.constant 0 : i32
    %c0_i32_0 = arith.constant 0 : i32
    return %arg0, %c0_i32 : i32, i32
  }
}

module attributes {stable_mosaic.version = 11 : i64} {
  func.func @_conv_mm_kernel(%arg0: i32, %arg1: memref<64x72xbf16, #tpu.memory_space<vmem>>, %arg2: memref<72x16xbf16, #tpu.memory_space<vmem>>, %arg3: memref<1x16xf32, #tpu.memory_space<vmem>>, %arg4: memref<1x16xf32, #tpu.memory_space<vmem>>, %arg5: memref<64x16xf32, #tpu.memory_space<vmem>>) attributes {dimension_semantics = [#tpu.dimension_semantics<parallel>], iteration_bounds = array<i64: 2>, scalar_prefetch = 0 : i64, scratch_operands = 0 : i64, tpu.core_type = #tpu.core_type<tc>, window_params = [{transform_indices = @transform_0, window_bounds = array<i64: 64, 72>}, {pipeline_mode = #tpu.pipeline_mode<synchronous>, transform_indices = @transform_1, window_bounds = array<i64: 72, 16>}, {pipeline_mode = #tpu.pipeline_mode<synchronous>, transform_indices = @transform_2, window_bounds = array<i64: 1, 16>}, {pipeline_mode = #tpu.pipeline_mode<synchronous>, transform_indices = @transform_3, window_bounds = array<i64: 1, 16>}, {transform_indices = @transform_4, window_bounds = array<i64: 64, 16>}]} {
    %c0 = arith.constant 0 : index
    %c0_0 = arith.constant 0 : index
    %0 = vector.load %arg1[%c0, %c0_0] : memref<64x72xbf16, #tpu.memory_space<vmem>>, vector<64x72xbf16>
    %c0_1 = arith.constant 0 : index
    %c0_2 = arith.constant 0 : index
    %1 = vector.load %arg2[%c0_1, %c0_2] : memref<72x16xbf16, #tpu.memory_space<vmem>>, vector<72x16xbf16>
    %cst = arith.constant dense<0.000000e+00> : vector<64x16xf32>
    %2 = tpu.matmul %0, %1, %cst {dimension_numbers = #tpu.dot_dimension_numbers<[1], [0], [0], [1], [0, 0, 1, 1], [], []>} : vector<64x72xbf16>, vector<72x16xbf16>, vector<64x16xf32> -> vector<64x16xf32>
    %c0_3 = arith.constant 0 : index
    %c0_4 = arith.constant 0 : index
    %3 = vector.load %arg3[%c0_3, %c0_4] : memref<1x16xf32, #tpu.memory_space<vmem>>, vector<1x16xf32>
    %4 = vector.broadcast %3 : vector<1x16xf32> to vector<64x16xf32>
    %5 = arith.mulf %2, %4 : vector<64x16xf32>
    %c0_5 = arith.constant 0 : index
    %c0_6 = arith.constant 0 : index
    %6 = vector.load %arg4[%c0_5, %c0_6] : memref<1x16xf32, #tpu.memory_space<vmem>>, vector<1x16xf32>
    %7 = vector.broadcast %6 : vector<1x16xf32> to vector<64x16xf32>
    %8 = arith.addf %5, %7 : vector<64x16xf32>
    %cst_7 = arith.constant 0.000000e+00 : f32
    %9 = vector.broadcast %cst_7 : f32 to vector<64x16xf32>
    %10 = arith.cmpf ogt, %8, %9 : vector<64x16xf32>
    %cst_8 = arith.constant 1.000000e-01 : f32
    %11 = vector.broadcast %cst_8 : f32 to vector<64x16xf32>
    %12 = arith.mulf %11, %8 : vector<64x16xf32>
    %13 = arith.select %10, %8, %12 : vector<64x16xi1>, vector<64x16xf32>
    %c0_9 = arith.constant 0 : index
    %c0_10 = arith.constant 0 : index
    %14 = vector.load %arg5[%c0_9, %c0_10] : memref<64x16xf32, #tpu.memory_space<vmem>>, vector<64x16xf32>
    tpu.vector_store %arg5[%c0_9, %c0_10], %13 {strides = array<i32>} : memref<64x16xf32, #tpu.memory_space<vmem>>, vector<64x16xf32>,
    return
  }
  func.func @transform_0(%arg0: i32) -> (i32, i32) {
    %c0_i32 = arith.constant 0 : i32
    %c0_i32_0 = arith.constant 0 : i32
    return %arg0, %c0_i32 : i32, i32
  }
  func.func @transform_1(%arg0: i32) -> (i32, i32) {
    %c0_i32 = arith.constant 0 : i32
    %c0_i32_0 = arith.constant 0 : i32
    %c0_i32_1 = arith.constant 0 : i32
    return %c0_i32, %c0_i32_0 : i32, i32
  }
  func.func @transform_2(%arg0: i32) -> (i32, i32) {
    %c0_i32 = arith.constant 0 : i32
    %c0_i32_0 = arith.constant 0 : i32
    %c0_i32_1 = arith.constant 0 : i32
    return %c0_i32, %c0_i32_0 : i32, i32
  }
  func.func @transform_3(%arg0: i32) -> (i32, i32) {
    %c0_i32 = arith.constant 0 : i32
    %c0_i32_0 = arith.constant 0 : i32
    %c0_i32_1 = arith.constant 0 : i32
    return %c0_i32, %c0_i32_0 : i32, i32
  }
  func.func @transform_4(%arg0: i32) -> (i32, i32) {
    %c0_i32 = arith.constant 0 : i32
    %c0_i32_0 = arith.constant 0 : i32
    return %arg0, %c0_i32 : i32, i32
  }
}

module attributes {stable_mosaic.version = 11 : i64} {
  func.func @_conv_mm_kernel(%arg0: i32, %arg1: memref<64x72xbf16, #tpu.memory_space<vmem>>, %arg2: memref<72x16xbf16, #tpu.memory_space<vmem>>, %arg3: memref<1x16xf32, #tpu.memory_space<vmem>>, %arg4: memref<1x16xf32, #tpu.memory_space<vmem>>, %arg5: memref<64x16xf32, #tpu.memory_space<vmem>>, %arg6: memref<64x16xf32, #tpu.memory_space<vmem>>) attributes {dimension_semantics = [#tpu.dimension_semantics<parallel>], iteration_bounds = array<i64: 2>, scalar_prefetch = 0 : i64, scratch_operands = 0 : i64, tpu.core_type = #tpu.core_type<tc>, window_params = [{transform_indices = @transform_0, window_bounds = array<i64: 64, 72>}, {pipeline_mode = #tpu.pipeline_mode<synchronous>, transform_indices = @transform_1, window_bounds = array<i64: 72, 16>}, {pipeline_mode = #tpu.pipeline_mode<synchronous>, transform_indices = @transform_2, window_bounds = array<i64: 1, 16>}, {pipeline_mode = #tpu.pipeline_mode<synchronous>, transform_indices = @transform_3, window_bounds = array<i64: 1, 16>}, {transform_indices = @transform_4, window_bounds = array<i64: 64, 16>}, {transform_indices = @transform_5, window_bounds = array<i64: 64, 16>}]} {
    %c0 = arith.constant 0 : index
    %c0_0 = arith.constant 0 : index
    %0 = vector.load %arg1[%c0, %c0_0] : memref<64x72xbf16, #tpu.memory_space<vmem>>, vector<64x72xbf16>
    %c0_1 = arith.constant 0 : index
    %c0_2 = arith.constant 0 : index
    %1 = vector.load %arg2[%c0_1, %c0_2] : memref<72x16xbf16, #tpu.memory_space<vmem>>, vector<72x16xbf16>
    %cst = arith.constant dense<0.000000e+00> : vector<64x16xf32>
    %2 = tpu.matmul %0, %1, %cst {dimension_numbers = #tpu.dot_dimension_numbers<[1], [0], [0], [1], [0, 0, 1, 1], [], []>} : vector<64x72xbf16>, vector<72x16xbf16>, vector<64x16xf32> -> vector<64x16xf32>
    %c0_3 = arith.constant 0 : index
    %c0_4 = arith.constant 0 : index
    %3 = vector.load %arg3[%c0_3, %c0_4] : memref<1x16xf32, #tpu.memory_space<vmem>>, vector<1x16xf32>
    %4 = vector.broadcast %3 : vector<1x16xf32> to vector<64x16xf32>
    %5 = arith.mulf %2, %4 : vector<64x16xf32>
    %c0_5 = arith.constant 0 : index
    %c0_6 = arith.constant 0 : index
    %6 = vector.load %arg4[%c0_5, %c0_6] : memref<1x16xf32, #tpu.memory_space<vmem>>, vector<1x16xf32>
    %7 = vector.broadcast %6 : vector<1x16xf32> to vector<64x16xf32>
    %8 = arith.addf %5, %7 : vector<64x16xf32>
    %cst_7 = arith.constant 0.000000e+00 : f32
    %9 = vector.broadcast %cst_7 : f32 to vector<64x16xf32>
    %10 = arith.cmpf ogt, %8, %9 : vector<64x16xf32>
    %cst_8 = arith.constant 1.000000e-01 : f32
    %11 = vector.broadcast %cst_8 : f32 to vector<64x16xf32>
    %12 = arith.mulf %11, %8 : vector<64x16xf32>
    %13 = arith.select %10, %8, %12 : vector<64x16xi1>, vector<64x16xf32>
    %c0_9 = arith.constant 0 : index
    %c0_10 = arith.constant 0 : index
    %14 = vector.load %arg5[%c0_9, %c0_10] : memref<64x16xf32, #tpu.memory_space<vmem>>, vector<64x16xf32>
    %15 = arith.addf %13, %14 : vector<64x16xf32>
    %c0_11 = arith.constant 0 : index
    %c0_12 = arith.constant 0 : index
    %16 = vector.load %arg6[%c0_11, %c0_12] : memref<64x16xf32, #tpu.memory_space<vmem>>, vector<64x16xf32>
    tpu.vector_store %arg6[%c0_11, %c0_12], %15 {strides = array<i32>} : memref<64x16xf32, #tpu.memory_space<vmem>>, vector<64x16xf32>,
    return
  }
  func.func @transform_0(%arg0: i32) -> (i32, i32) {
    %c0_i32 = arith.constant 0 : i32
    %c0_i32_0 = arith.constant 0 : i32
    return %arg0, %c0_i32 : i32, i32
  }
  func.func @transform_1(%arg0: i32) -> (i32, i32) {
    %c0_i32 = arith.constant 0 : i32
    %c0_i32_0 = arith.constant 0 : i32
    %c0_i32_1 = arith.constant 0 : i32
    return %c0_i32, %c0_i32_0 : i32, i32
  }
  func.func @transform_2(%arg0: i32) -> (i32, i32) {
    %c0_i32 = arith.constant 0 : i32
    %c0_i32_0 = arith.constant 0 : i32
    %c0_i32_1 = arith.constant 0 : i32
    return %c0_i32, %c0_i32_0 : i32, i32
  }
  func.func @transform_3(%arg0: i32) -> (i32, i32) {
    %c0_i32 = arith.constant 0 : i32
    %c0_i32_0 = arith.constant 0 : i32
    %c0_i32_1 = arith.constant 0 : i32
    return %c0_i32, %c0_i32_0 : i32, i32
  }
  func.func @transform_4(%arg0: i32) -> (i32, i32) {
    %c0_i32 = arith.constant 0 : i32
    %c0_i32_0 = arith.constant 0 : i32
    return %arg0, %c0_i32 : i32, i32
  }
  func.func @transform_5(%arg0: i32) -> (i32, i32) {
    %c0_i32 = arith.constant 0 : i32
    %c0_i32_0 = arith.constant 0 : i32
    return %arg0, %c0_i32 : i32, i32
  }
}

module attributes {stable_mosaic.version = 11 : i64} {
  func.func @_conv_mm_kernel(%arg0: i32, %arg1: memref<64x16xbf16, #tpu.memory_space<vmem>>, %arg2: memref<16x21xbf16, #tpu.memory_space<vmem>>, %arg3: memref<1x21xf32, #tpu.memory_space<vmem>>, %arg4: memref<1x21xf32, #tpu.memory_space<vmem>>, %arg5: memref<64x21xf32, #tpu.memory_space<vmem>>) attributes {dimension_semantics = [#tpu.dimension_semantics<parallel>], iteration_bounds = array<i64: 2>, scalar_prefetch = 0 : i64, scratch_operands = 0 : i64, tpu.core_type = #tpu.core_type<tc>, window_params = [{transform_indices = @transform_0, window_bounds = array<i64: 64, 16>}, {pipeline_mode = #tpu.pipeline_mode<synchronous>, transform_indices = @transform_1, window_bounds = array<i64: 16, 21>}, {pipeline_mode = #tpu.pipeline_mode<synchronous>, transform_indices = @transform_2, window_bounds = array<i64: 1, 21>}, {pipeline_mode = #tpu.pipeline_mode<synchronous>, transform_indices = @transform_3, window_bounds = array<i64: 1, 21>}, {transform_indices = @transform_4, window_bounds = array<i64: 64, 21>}]} {
    %c0 = arith.constant 0 : index
    %c0_0 = arith.constant 0 : index
    %0 = vector.load %arg1[%c0, %c0_0] : memref<64x16xbf16, #tpu.memory_space<vmem>>, vector<64x16xbf16>
    %c0_1 = arith.constant 0 : index
    %c0_2 = arith.constant 0 : index
    %1 = vector.load %arg2[%c0_1, %c0_2] : memref<16x21xbf16, #tpu.memory_space<vmem>>, vector<16x21xbf16>
    %cst = arith.constant dense<0.000000e+00> : vector<64x21xf32>
    %2 = tpu.matmul %0, %1, %cst {dimension_numbers = #tpu.dot_dimension_numbers<[1], [0], [0], [1], [0, 0, 1, 1], [], []>} : vector<64x16xbf16>, vector<16x21xbf16>, vector<64x21xf32> -> vector<64x21xf32>
    %c0_3 = arith.constant 0 : index
    %c0_4 = arith.constant 0 : index
    %3 = vector.load %arg3[%c0_3, %c0_4] : memref<1x21xf32, #tpu.memory_space<vmem>>, vector<1x21xf32>
    %4 = vector.broadcast %3 : vector<1x21xf32> to vector<64x21xf32>
    %5 = arith.mulf %2, %4 : vector<64x21xf32>
    %c0_5 = arith.constant 0 : index
    %c0_6 = arith.constant 0 : index
    %6 = vector.load %arg4[%c0_5, %c0_6] : memref<1x21xf32, #tpu.memory_space<vmem>>, vector<1x21xf32>
    %7 = vector.broadcast %6 : vector<1x21xf32> to vector<64x21xf32>
    %8 = arith.addf %5, %7 : vector<64x21xf32>
    %c0_7 = arith.constant 0 : index
    %c0_8 = arith.constant 0 : index
    %9 = vector.load %arg5[%c0_7, %c0_8] : memref<64x21xf32, #tpu.memory_space<vmem>>, vector<64x21xf32>
    tpu.vector_store %arg5[%c0_7, %c0_8], %8 {strides = array<i32>} : memref<64x21xf32, #tpu.memory_space<vmem>>, vector<64x21xf32>,
    return
  }
  func.func @transform_0(%arg0: i32) -> (i32, i32) {
    %c0_i32 = arith.constant 0 : i32
    %c0_i32_0 = arith.constant 0 : i32
    return %arg0, %c0_i32 : i32, i32
  }
  func.func @transform_1(%arg0: i32) -> (i32, i32) {
    %c0_i32 = arith.constant 0 : i32
    %c0_i32_0 = arith.constant 0 : i32
    %c0_i32_1 = arith.constant 0 : i32
    return %c0_i32, %c0_i32_0 : i32, i32
  }
  func.func @transform_2(%arg0: i32) -> (i32, i32) {
    %c0_i32 = arith.constant 0 : i32
    %c0_i32_0 = arith.constant 0 : i32
    %c0_i32_1 = arith.constant 0 : i32
    return %c0_i32, %c0_i32_0 : i32, i32
  }
  func.func @transform_3(%arg0: i32) -> (i32, i32) {
    %c0_i32 = arith.constant 0 : i32
    %c0_i32_0 = arith.constant 0 : i32
    %c0_i32_1 = arith.constant 0 : i32
    return %c0_i32, %c0_i32_0 : i32, i32
  }
  func.func @transform_4(%arg0: i32) -> (i32, i32) {
    %c0_i32 = arith.constant 0 : i32
    %c0_i32_0 = arith.constant 0 : i32
    return %arg0, %c0_i32 : i32, i32
  }
}

module attributes {stable_mosaic.version = 11 : i64} {
  func.func @_yolo_kernel(%arg0: i32, %arg1: memref<2x7x192xf32, #tpu.memory_space<vmem>>, %arg2: memref<4x192xf32, #tpu.memory_space<vmem>>, %arg3: memref<2x7x192xf32, #tpu.memory_space<vmem>>) attributes {dimension_semantics = [#tpu.dimension_semantics<arbitrary>], iteration_bounds = array<i64: 1>, scalar_prefetch = 0 : i64, scratch_operands = 0 : i64, tpu.core_type = #tpu.core_type<tc>, window_params = [{pipeline_mode = #tpu.pipeline_mode<synchronous>, transform_indices = @transform_0, window_bounds = array<i64: 2, 7, 192>}, {pipeline_mode = #tpu.pipeline_mode<synchronous>, transform_indices = @transform_1, window_bounds = array<i64: 4, 192>}, {pipeline_mode = #tpu.pipeline_mode<synchronous>, transform_indices = @transform_2, window_bounds = array<i64: 2, 7, 192>}]} {
    %c0 = arith.constant 0 : index
    %c0_0 = arith.constant 0 : index
    %c0_1 = arith.constant 0 : index
    %0 = vector.load %arg1[%c0, %c0_0, %c0_1] : memref<2x7x192xf32, #tpu.memory_space<vmem>>, vector<2x7x192xf32>
    %c0_2 = arith.constant 0 : index
    %c0_3 = arith.constant 0 : index
    %1 = vector.load %arg2[%c0_2, %c0_3] : memref<4x192xf32, #tpu.memory_space<vmem>>, vector<4x192xf32>
    %2 = arith.negf %0 : vector<2x7x192xf32>
    %3 = math.exp %2 : vector<2x7x192xf32>
    %cst = arith.constant 1.000000e+00 : f32
    %4 = vector.broadcast %cst : f32 to vector<2x7x192xf32>
    %5 = arith.addf %4, %3 : vector<2x7x192xf32>
    %6 = arith.divf %4, %5 : vector<2x7x192xf32>
    %7 = math.exp %0 : vector<2x7x192xf32>
    %8 = vector.extract_strided_slice %1 {offsets = [0, 0], sizes = [1, 192], strides = [1, 1]} : vector<4x192xf32> to vector<1x192xf32>
    %9 = vector.shape_cast %8 : vector<1x192xf32> to vector<192xf32>
    %10 = vector.shape_cast %9 : vector<192xf32> to vector<1x1x192xf32>
    %11 = vector.extract_strided_slice %1 {offsets = [1, 0], sizes = [1, 192], strides = [1, 1]} : vector<4x192xf32> to vector<1x192xf32>
    %12 = vector.shape_cast %11 : vector<1x192xf32> to vector<192xf32>
    %13 = vector.shape_cast %12 : vector<192xf32> to vector<1x1x192xf32>
    %14 = vector.extract_strided_slice %1 {offsets = [2, 0], sizes = [1, 192], strides = [1, 1]} : vector<4x192xf32> to vector<1x192xf32>
    %15 = vector.shape_cast %14 : vector<1x192xf32> to vector<192xf32>
    %16 = vector.shape_cast %15 : vector<192xf32> to vector<1x1x192xf32>
    %17 = vector.extract_strided_slice %1 {offsets = [3, 0], sizes = [1, 192], strides = [1, 1]} : vector<4x192xf32> to vector<1x192xf32>
    %18 = vector.shape_cast %17 : vector<1x192xf32> to vector<192xf32>
    %19 = vector.shape_cast %18 : vector<192xf32> to vector<1x1x192xf32>
    %20 = vector.broadcast %10 : vector<1x1x192xf32> to vector<2x7x192xf32>
    %21 = arith.addf %6, %20 : vector<2x7x192xf32>
    %cst_4 = arith.constant 2.000000e+00 : f32
    %22 = vector.broadcast %cst_4 : f32 to vector<2x7x192xf32>
    %23 = arith.mulf %21, %22 : vector<2x7x192xf32>
    %24 = vector.broadcast %13 : vector<1x1x192xf32> to vector<2x7x192xf32>
    %25 = arith.addf %6, %24 : vector<2x7x192xf32>
    %cst_5 = arith.constant 2.000000e+00 : f32
    %26 = vector.broadcast %cst_5 : f32 to vector<2x7x192xf32>
    %27 = arith.mulf %25, %26 : vector<2x7x192xf32>
    %28 = vector.broadcast %16 : vector<1x1x192xf32> to vector<2x7x192xf32>
    %29 = arith.mulf %7, %28 : vector<2x7x192xf32>
    %cst_6 = arith.constant 2.000000e+00 : f32
    %30 = vector.broadcast %cst_6 : f32 to vector<2x7x192xf32>
    %31 = arith.mulf %29, %30 : vector<2x7x192xf32>
    %32 = vector.broadcast %19 : vector<1x1x192xf32> to vector<2x7x192xf32>
    %33 = arith.mulf %7, %32 : vector<2x7x192xf32>
    %cst_7 = arith.constant 2.000000e+00 : f32
    %34 = vector.broadcast %cst_7 : f32 to vector<2x7x192xf32>
    %35 = arith.mulf %33, %34 : vector<2x7x192xf32>
    %36 = tpu.iota {dimensions = array<i32: 1>} : vector<2x7x192xi32>
    %c0_i32 = arith.constant 0 : i32
    %37 = vector.broadcast %c0_i32 : i32 to vector<2x7x192xi32>
    %38 = arith.cmpi eq, %36, %37 : vector<2x7x192xi32>
    %c1_i32 = arith.constant 1 : i32
    %39 = vector.broadcast %c1_i32 : i32 to vector<2x7x192xi32>
    %40 = arith.cmpi eq, %36, %39 : vector<2x7x192xi32>
    %c2_i32 = arith.constant 2 : i32
    %41 = vector.broadcast %c2_i32 : i32 to vector<2x7x192xi32>
    %42 = arith.cmpi eq, %36, %41 : vector<2x7x192xi32>
    %c3_i32 = arith.constant 3 : i32
    %43 = vector.broadcast %c3_i32 : i32 to vector<2x7x192xi32>
    %44 = arith.cmpi eq, %36, %43 : vector<2x7x192xi32>
    %45 = arith.select %44, %35, %6 : vector<2x7x192xi1>, vector<2x7x192xf32>
    %46 = arith.select %42, %31, %45 : vector<2x7x192xi1>, vector<2x7x192xf32>
    %47 = arith.select %40, %27, %46 : vector<2x7x192xi1>, vector<2x7x192xf32>
    %48 = arith.select %38, %23, %47 : vector<2x7x192xi1>, vector<2x7x192xf32>
    %c0_8 = arith.constant 0 : index
    %c0_9 = arith.constant 0 : index
    %c0_10 = arith.constant 0 : index
    %49 = vector.load %arg3[%c0_8, %c0_9, %c0_10] : memref<2x7x192xf32, #tpu.memory_space<vmem>>, vector<2x7x192xf32>
    tpu.vector_store %arg3[%c0_8, %c0_9, %c0_10], %48 {strides = array<i32>} : memref<2x7x192xf32, #tpu.memory_space<vmem>>, vector<2x7x192xf32>,
    return
  }
  func.func @transform_0(%arg0: i32) -> (i32, i32, i32) {
    %c0_i32 = arith.constant 0 : i32
    %c0_i32_0 = arith.constant 0 : i32
    %c0_i32_1 = arith.constant 0 : i32
    %c0_i32_2 = arith.constant 0 : i32
    return %c0_i32, %c0_i32_0, %c0_i32_1 : i32, i32, i32
  }
  func.func @transform_1(%arg0: i32) -> (i32, i32) {
    %c0_i32 = arith.constant 0 : i32
    %c0_i32_0 = arith.constant 0 : i32
    %c0_i32_1 = arith.constant 0 : i32
    return %c0_i32, %c0_i32_0 : i32, i32
  }
  func.func @transform_2(%arg0: i32) -> (i32, i32, i32) {
    %c0_i32 = arith.constant 0 : i32
    %c0_i32_0 = arith.constant 0 : i32
    %c0_i32_1 = arith.constant 0 : i32
    %c0_i32_2 = arith.constant 0 : i32
    return %c0_i32, %c0_i32_0, %c0_i32_1 : i32, i32, i32
  }
}

module attributes {stable_mosaic.version = 11 : i64} {
  func.func @_conv_mm_kernel(%arg0: i32, %arg1: memref<256x144xbf16, #tpu.memory_space<vmem>>, %arg2: memref<144x16xbf16, #tpu.memory_space<vmem>>, %arg3: memref<1x16xf32, #tpu.memory_space<vmem>>, %arg4: memref<1x16xf32, #tpu.memory_space<vmem>>, %arg5: memref<256x16xf32, #tpu.memory_space<vmem>>) attributes {dimension_semantics = [#tpu.dimension_semantics<parallel>], iteration_bounds = array<i64: 2>, scalar_prefetch = 0 : i64, scratch_operands = 0 : i64, tpu.core_type = #tpu.core_type<tc>, window_params = [{transform_indices = @transform_0, window_bounds = array<i64: 256, 144>}, {pipeline_mode = #tpu.pipeline_mode<synchronous>, transform_indices = @transform_1, window_bounds = array<i64: 144, 16>}, {pipeline_mode = #tpu.pipeline_mode<synchronous>, transform_indices = @transform_2, window_bounds = array<i64: 1, 16>}, {pipeline_mode = #tpu.pipeline_mode<synchronous>, transform_indices = @transform_3, window_bounds = array<i64: 1, 16>}, {transform_indices = @transform_4, window_bounds = array<i64: 256, 16>}]} {
    %c0 = arith.constant 0 : index
    %c0_0 = arith.constant 0 : index
    %0 = vector.load %arg1[%c0, %c0_0] : memref<256x144xbf16, #tpu.memory_space<vmem>>, vector<256x144xbf16>
    %c0_1 = arith.constant 0 : index
    %c0_2 = arith.constant 0 : index
    %1 = vector.load %arg2[%c0_1, %c0_2] : memref<144x16xbf16, #tpu.memory_space<vmem>>, vector<144x16xbf16>
    %cst = arith.constant dense<0.000000e+00> : vector<256x16xf32>
    %2 = tpu.matmul %0, %1, %cst {dimension_numbers = #tpu.dot_dimension_numbers<[1], [0], [0], [1], [0, 0, 1, 1], [], []>} : vector<256x144xbf16>, vector<144x16xbf16>, vector<256x16xf32> -> vector<256x16xf32>
    %c0_3 = arith.constant 0 : index
    %c0_4 = arith.constant 0 : index
    %3 = vector.load %arg3[%c0_3, %c0_4] : memref<1x16xf32, #tpu.memory_space<vmem>>, vector<1x16xf32>
    %4 = vector.broadcast %3 : vector<1x16xf32> to vector<256x16xf32>
    %5 = arith.mulf %2, %4 : vector<256x16xf32>
    %c0_5 = arith.constant 0 : index
    %c0_6 = arith.constant 0 : index
    %6 = vector.load %arg4[%c0_5, %c0_6] : memref<1x16xf32, #tpu.memory_space<vmem>>, vector<1x16xf32>
    %7 = vector.broadcast %6 : vector<1x16xf32> to vector<256x16xf32>
    %8 = arith.addf %5, %7 : vector<256x16xf32>
    %cst_7 = arith.constant 0.000000e+00 : f32
    %9 = vector.broadcast %cst_7 : f32 to vector<256x16xf32>
    %10 = arith.cmpf ogt, %8, %9 : vector<256x16xf32>
    %cst_8 = arith.constant 1.000000e-01 : f32
    %11 = vector.broadcast %cst_8 : f32 to vector<256x16xf32>
    %12 = arith.mulf %11, %8 : vector<256x16xf32>
    %13 = arith.select %10, %8, %12 : vector<256x16xi1>, vector<256x16xf32>
    %c0_9 = arith.constant 0 : index
    %c0_10 = arith.constant 0 : index
    %14 = vector.load %arg5[%c0_9, %c0_10] : memref<256x16xf32, #tpu.memory_space<vmem>>, vector<256x16xf32>
    tpu.vector_store %arg5[%c0_9, %c0_10], %13 {strides = array<i32>} : memref<256x16xf32, #tpu.memory_space<vmem>>, vector<256x16xf32>,
    return
  }
  func.func @transform_0(%arg0: i32) -> (i32, i32) {
    %c0_i32 = arith.constant 0 : i32
    %c0_i32_0 = arith.constant 0 : i32
    return %arg0, %c0_i32 : i32, i32
  }
  func.func @transform_1(%arg0: i32) -> (i32, i32) {
    %c0_i32 = arith.constant 0 : i32
    %c0_i32_0 = arith.constant 0 : i32
    %c0_i32_1 = arith.constant 0 : i32
    return %c0_i32, %c0_i32_0 : i32, i32
  }
  func.func @transform_2(%arg0: i32) -> (i32, i32) {
    %c0_i32 = arith.constant 0 : i32
    %c0_i32_0 = arith.constant 0 : i32
    %c0_i32_1 = arith.constant 0 : i32
    return %c0_i32, %c0_i32_0 : i32, i32
  }
  func.func @transform_3(%arg0: i32) -> (i32, i32) {
    %c0_i32 = arith.constant 0 : i32
    %c0_i32_0 = arith.constant 0 : i32
    %c0_i32_1 = arith.constant 0 : i32
    return %c0_i32, %c0_i32_0 : i32, i32
  }
  func.func @transform_4(%arg0: i32) -> (i32, i32) {
    %c0_i32 = arith.constant 0 : i32
    %c0_i32_0 = arith.constant 0 : i32
    return %arg0, %c0_i32 : i32, i32
  }
}

module attributes {stable_mosaic.version = 11 : i64} {
  func.func @_conv_mm_kernel(%arg0: i32, %arg1: memref<256x16xbf16, #tpu.memory_space<vmem>>, %arg2: memref<16x21xbf16, #tpu.memory_space<vmem>>, %arg3: memref<1x21xf32, #tpu.memory_space<vmem>>, %arg4: memref<1x21xf32, #tpu.memory_space<vmem>>, %arg5: memref<256x21xf32, #tpu.memory_space<vmem>>) attributes {dimension_semantics = [#tpu.dimension_semantics<parallel>], iteration_bounds = array<i64: 2>, scalar_prefetch = 0 : i64, scratch_operands = 0 : i64, tpu.core_type = #tpu.core_type<tc>, window_params = [{transform_indices = @transform_0, window_bounds = array<i64: 256, 16>}, {pipeline_mode = #tpu.pipeline_mode<synchronous>, transform_indices = @transform_1, window_bounds = array<i64: 16, 21>}, {pipeline_mode = #tpu.pipeline_mode<synchronous>, transform_indices = @transform_2, window_bounds = array<i64: 1, 21>}, {pipeline_mode = #tpu.pipeline_mode<synchronous>, transform_indices = @transform_3, window_bounds = array<i64: 1, 21>}, {transform_indices = @transform_4, window_bounds = array<i64: 256, 21>}]} {
    %c0 = arith.constant 0 : index
    %c0_0 = arith.constant 0 : index
    %0 = vector.load %arg1[%c0, %c0_0] : memref<256x16xbf16, #tpu.memory_space<vmem>>, vector<256x16xbf16>
    %c0_1 = arith.constant 0 : index
    %c0_2 = arith.constant 0 : index
    %1 = vector.load %arg2[%c0_1, %c0_2] : memref<16x21xbf16, #tpu.memory_space<vmem>>, vector<16x21xbf16>
    %cst = arith.constant dense<0.000000e+00> : vector<256x21xf32>
    %2 = tpu.matmul %0, %1, %cst {dimension_numbers = #tpu.dot_dimension_numbers<[1], [0], [0], [1], [0, 0, 1, 1], [], []>} : vector<256x16xbf16>, vector<16x21xbf16>, vector<256x21xf32> -> vector<256x21xf32>
    %c0_3 = arith.constant 0 : index
    %c0_4 = arith.constant 0 : index
    %3 = vector.load %arg3[%c0_3, %c0_4] : memref<1x21xf32, #tpu.memory_space<vmem>>, vector<1x21xf32>
    %4 = vector.broadcast %3 : vector<1x21xf32> to vector<256x21xf32>
    %5 = arith.mulf %2, %4 : vector<256x21xf32>
    %c0_5 = arith.constant 0 : index
    %c0_6 = arith.constant 0 : index
    %6 = vector.load %arg4[%c0_5, %c0_6] : memref<1x21xf32, #tpu.memory_space<vmem>>, vector<1x21xf32>
    %7 = vector.broadcast %6 : vector<1x21xf32> to vector<256x21xf32>
    %8 = arith.addf %5, %7 : vector<256x21xf32>
    %c0_7 = arith.constant 0 : index
    %c0_8 = arith.constant 0 : index
    %9 = vector.load %arg5[%c0_7, %c0_8] : memref<256x21xf32, #tpu.memory_space<vmem>>, vector<256x21xf32>
    tpu.vector_store %arg5[%c0_7, %c0_8], %8 {strides = array<i32>} : memref<256x21xf32, #tpu.memory_space<vmem>>, vector<256x21xf32>,
    return
  }
  func.func @transform_0(%arg0: i32) -> (i32, i32) {
    %c0_i32 = arith.constant 0 : i32
    %c0_i32_0 = arith.constant 0 : i32
    return %arg0, %c0_i32 : i32, i32
  }
  func.func @transform_1(%arg0: i32) -> (i32, i32) {
    %c0_i32 = arith.constant 0 : i32
    %c0_i32_0 = arith.constant 0 : i32
    %c0_i32_1 = arith.constant 0 : i32
    return %c0_i32, %c0_i32_0 : i32, i32
  }
  func.func @transform_2(%arg0: i32) -> (i32, i32) {
    %c0_i32 = arith.constant 0 : i32
    %c0_i32_0 = arith.constant 0 : i32
    %c0_i32_1 = arith.constant 0 : i32
    return %c0_i32, %c0_i32_0 : i32, i32
  }
  func.func @transform_3(%arg0: i32) -> (i32, i32) {
    %c0_i32 = arith.constant 0 : i32
    %c0_i32_0 = arith.constant 0 : i32
    %c0_i32_1 = arith.constant 0 : i32
    return %c0_i32, %c0_i32_0 : i32, i32
  }
  func.func @transform_4(%arg0: i32) -> (i32, i32) {
    %c0_i32 = arith.constant 0 : i32
    %c0_i32_0 = arith.constant 0 : i32
    return %arg0, %c0_i32 : i32, i32
  }
}

module attributes {stable_mosaic.version = 11 : i64} {
  func.func @_yolo_kernel(%arg0: i32, %arg1: memref<2x7x768xf32, #tpu.memory_space<vmem>>, %arg2: memref<4x768xf32, #tpu.memory_space<vmem>>, %arg3: memref<2x7x768xf32, #tpu.memory_space<vmem>>) attributes {dimension_semantics = [#tpu.dimension_semantics<arbitrary>], iteration_bounds = array<i64: 1>, scalar_prefetch = 0 : i64, scratch_operands = 0 : i64, tpu.core_type = #tpu.core_type<tc>, window_params = [{pipeline_mode = #tpu.pipeline_mode<synchronous>, transform_indices = @transform_0, window_bounds = array<i64: 2, 7, 768>}, {pipeline_mode = #tpu.pipeline_mode<synchronous>, transform_indices = @transform_1, window_bounds = array<i64: 4, 768>}, {pipeline_mode = #tpu.pipeline_mode<synchronous>, transform_indices = @transform_2, window_bounds = array<i64: 2, 7, 768>}]} {
    %c0 = arith.constant 0 : index
    %c0_0 = arith.constant 0 : index
    %c0_1 = arith.constant 0 : index
    %0 = vector.load %arg1[%c0, %c0_0, %c0_1] : memref<2x7x768xf32, #tpu.memory_space<vmem>>, vector<2x7x768xf32>
    %c0_2 = arith.constant 0 : index
    %c0_3 = arith.constant 0 : index
    %1 = vector.load %arg2[%c0_2, %c0_3] : memref<4x768xf32, #tpu.memory_space<vmem>>, vector<4x768xf32>
    %2 = arith.negf %0 : vector<2x7x768xf32>
    %3 = math.exp %2 : vector<2x7x768xf32>
    %cst = arith.constant 1.000000e+00 : f32
    %4 = vector.broadcast %cst : f32 to vector<2x7x768xf32>
    %5 = arith.addf %4, %3 : vector<2x7x768xf32>
    %6 = arith.divf %4, %5 : vector<2x7x768xf32>
    %7 = math.exp %0 : vector<2x7x768xf32>
    %8 = vector.extract_strided_slice %1 {offsets = [0, 0], sizes = [1, 768], strides = [1, 1]} : vector<4x768xf32> to vector<1x768xf32>
    %9 = vector.shape_cast %8 : vector<1x768xf32> to vector<768xf32>
    %10 = vector.shape_cast %9 : vector<768xf32> to vector<1x1x768xf32>
    %11 = vector.extract_strided_slice %1 {offsets = [1, 0], sizes = [1, 768], strides = [1, 1]} : vector<4x768xf32> to vector<1x768xf32>
    %12 = vector.shape_cast %11 : vector<1x768xf32> to vector<768xf32>
    %13 = vector.shape_cast %12 : vector<768xf32> to vector<1x1x768xf32>
    %14 = vector.extract_strided_slice %1 {offsets = [2, 0], sizes = [1, 768], strides = [1, 1]} : vector<4x768xf32> to vector<1x768xf32>
    %15 = vector.shape_cast %14 : vector<1x768xf32> to vector<768xf32>
    %16 = vector.shape_cast %15 : vector<768xf32> to vector<1x1x768xf32>
    %17 = vector.extract_strided_slice %1 {offsets = [3, 0], sizes = [1, 768], strides = [1, 1]} : vector<4x768xf32> to vector<1x768xf32>
    %18 = vector.shape_cast %17 : vector<1x768xf32> to vector<768xf32>
    %19 = vector.shape_cast %18 : vector<768xf32> to vector<1x1x768xf32>
    %20 = vector.broadcast %10 : vector<1x1x768xf32> to vector<2x7x768xf32>
    %21 = arith.addf %6, %20 : vector<2x7x768xf32>
    %cst_4 = arith.constant 1.000000e+00 : f32
    %22 = vector.broadcast %cst_4 : f32 to vector<2x7x768xf32>
    %23 = arith.mulf %21, %22 : vector<2x7x768xf32>
    %24 = vector.broadcast %13 : vector<1x1x768xf32> to vector<2x7x768xf32>
    %25 = arith.addf %6, %24 : vector<2x7x768xf32>
    %cst_5 = arith.constant 1.000000e+00 : f32
    %26 = vector.broadcast %cst_5 : f32 to vector<2x7x768xf32>
    %27 = arith.mulf %25, %26 : vector<2x7x768xf32>
    %28 = vector.broadcast %16 : vector<1x1x768xf32> to vector<2x7x768xf32>
    %29 = arith.mulf %7, %28 : vector<2x7x768xf32>
    %cst_6 = arith.constant 1.000000e+00 : f32
    %30 = vector.broadcast %cst_6 : f32 to vector<2x7x768xf32>
    %31 = arith.mulf %29, %30 : vector<2x7x768xf32>
    %32 = vector.broadcast %19 : vector<1x1x768xf32> to vector<2x7x768xf32>
    %33 = arith.mulf %7, %32 : vector<2x7x768xf32>
    %cst_7 = arith.constant 1.000000e+00 : f32
    %34 = vector.broadcast %cst_7 : f32 to vector<2x7x768xf32>
    %35 = arith.mulf %33, %34 : vector<2x7x768xf32>
    %36 = tpu.iota {dimensions = array<i32: 1>} : vector<2x7x768xi32>
    %c0_i32 = arith.constant 0 : i32
    %37 = vector.broadcast %c0_i32 : i32 to vector<2x7x768xi32>
    %38 = arith.cmpi eq, %36, %37 : vector<2x7x768xi32>
    %c1_i32 = arith.constant 1 : i32
    %39 = vector.broadcast %c1_i32 : i32 to vector<2x7x768xi32>
    %40 = arith.cmpi eq, %36, %39 : vector<2x7x768xi32>
    %c2_i32 = arith.constant 2 : i32
    %41 = vector.broadcast %c2_i32 : i32 to vector<2x7x768xi32>
    %42 = arith.cmpi eq, %36, %41 : vector<2x7x768xi32>
    %c3_i32 = arith.constant 3 : i32
    %43 = vector.broadcast %c3_i32 : i32 to vector<2x7x768xi32>
    %44 = arith.cmpi eq, %36, %43 : vector<2x7x768xi32>
    %45 = arith.select %44, %35, %6 : vector<2x7x768xi1>, vector<2x7x768xf32>
    %46 = arith.select %42, %31, %45 : vector<2x7x768xi1>, vector<2x7x768xf32>
    %47 = arith.select %40, %27, %46 : vector<2x7x768xi1>, vector<2x7x768xf32>
    %48 = arith.select %38, %23, %47 : vector<2x7x768xi1>, vector<2x7x768xf32>
    %c0_8 = arith.constant 0 : index
    %c0_9 = arith.constant 0 : index
    %c0_10 = arith.constant 0 : index
    %49 = vector.load %arg3[%c0_8, %c0_9, %c0_10] : memref<2x7x768xf32, #tpu.memory_space<vmem>>, vector<2x7x768xf32>
    tpu.vector_store %arg3[%c0_8, %c0_9, %c0_10], %48 {strides = array<i32>} : memref<2x7x768xf32, #tpu.memory_space<vmem>>, vector<2x7x768xf32>,
    return
  }
  func.func @transform_0(%arg0: i32) -> (i32, i32, i32) {
    %c0_i32 = arith.constant 0 : i32
    %c0_i32_0 = arith.constant 0 : i32
    %c0_i32_1 = arith.constant 0 : i32
    %c0_i32_2 = arith.constant 0 : i32
    return %c0_i32, %c0_i32_0, %c0_i32_1 : i32, i32, i32
  }
  func.func @transform_1(%arg0: i32) -> (i32, i32) {
    %c0_i32 = arith.constant 0 : i32
    %c0_i32_0 = arith.constant 0 : i32
    %c0_i32_1 = arith.constant 0 : i32
    return %c0_i32, %c0_i32_0 : i32, i32
  }
  func.func @transform_2(%arg0: i32) -> (i32, i32, i32) {
    %c0_i32 = arith.constant 0 : i32
    %c0_i32_0 = arith.constant 0 : i32
    %c0_i32_1 = arith.constant 0 : i32
    %c0_i32_2 = arith.constant 0 : i32
    return %c0_i32, %c0_i32_0, %c0_i32_1 : i32, i32, i32
  }
}

</mosaic_0001>

<llo_original>
// kernel: tile.21
$region0: #{tile.21}
  #allocation0 [shape = 's32[1]{0}', space=sflag, size = 0x4, scoped, tag = 'scoped memory for tile.21']
  %s0 = inlined_call_operand.vmem [shape: f32[64], index: 0, kind: input, shape index: {}]
  %s1 = inlined_call_operand.vmem [shape: f32[3,64], index: 1, kind: output, shape index: {}]
  // Predicated region
  $region2: #{tile.21} parent=0 // pred_check
    _
  $region3: #{tile.21} parent=0 // pred_check_branch
    %3 = sbr.rel (0) target = $region5
  $region4: #{tile.21} parent=0 // pred_region
    _
  $region5: #{tile.21} parent=0 // pred_fallthru
    _
  %v4 = vld [vmem:[%s0] ss:$0 sm:$0xff]
  %5 = vst [vmem:[%s1] sm:$0xf] %v4

// kernel: tile.20
$region0: #{tile.20}
  %s0 = inlined_call_operand.vmem [shape: f32[8,8], index: 0, kind: input, shape index: {}]
  %s1 = inlined_call_operand.vmem [shape: f32[64], index: 1, kind: output, shape index: {}]
  $region1: #{tile.20} parent=0
    #allocation0 [shape = 'u8[4096]{0}', space=vmem, size = 0x1000, scoped, tag = 'scoped mem for output reshape']
    %v2 = vld [vmem:[%s0] sm:$0x1]
    %vm3 = vcmask 64512
    %4 = vst.msk [vmem:[#allocation0] sm:$0x1] %vm3, %v2
    %s5 = scalar_lea.vmem %s0, 7
    %v6 = vld [vmem:[%s5] sm:$0x1]
    %7 = vrot.lane.b32.xlu0 %v6, 56
    %v8 = vpop.permute.xlu0 %7
    %vm9 = vcmask 523712
    %10 = vst.msk [vmem:[#allocation0] sm:$0x1] %vm9, %v8
    %s11 = scalar_lea.vmem %s0, 6
    %v12 = vld [vmem:[%s11] sm:$0x1]
    %13 = vrot.lane.b32.xlu0 %v12, 48
    %v14 = vpop.permute.xlu0 %13
    %vm15 = vcmask 458112
    %16 = vst.msk [vmem:[#allocation0] sm:$0x1] %vm15, %v14
    %s17 = scalar_lea.vmem %s0, 5
    %v18 = vld [vmem:[%s17] sm:$0x1]
    %19 = vrot.lane.b32.xlu0 %v18, 40
    %v20 = vpop.permute.xlu0 %19
    %vm21 = vcmask 392512
    %22 = vst.msk [vmem:[#allocation0] sm:$0x1] %vm21, %v20
    %s23 = scalar_lea.vmem %s0, 4
    %v24 = vld [vmem:[%s23] sm:$0x1]
    %25 = vrot.lane.b32.xlu0 %v24, 32
    %v26 = vpop.permute.xlu0 %25
    %vm27 = vcmask 326912
    %28 = vst.msk [vmem:[#allocation0] sm:$0x1] %vm27, %v26
    %s29 = scalar_lea.vmem %s0, 3
    %v30 = vld [vmem:[%s29] sm:$0x1]
    %31 = vrot.lane.b32.xlu0 %v30, 24
    %v32 = vpop.permute.xlu0 %31
    %vm33 = vcmask 261312
    %34 = vst.msk [vmem:[#allocation0] sm:$0x1] %vm33, %v32
    %s35 = scalar_lea.vmem %s0, 2
    %v36 = vld [vmem:[%s35] sm:$0x1]
    %37 = vrot.lane.b32.xlu0 %v36, 16
    %v38 = vpop.permute.xlu0 %37
    %vm39 = vcmask 195712
    %40 = vst.msk [vmem:[#allocation0] sm:$0x1] %vm39, %v38
    %s41 = scalar_lea.vmem %s0, 1
    %v42 = vld [vmem:[%s41] sm:$0x1]
    %43 = vrot.lane.b32.xlu0 %v42, 8
    %v44 = vpop.permute.xlu0 %43
    %vm45 = vcmask 130112
    %46 = vst.msk [vmem:[#allocation0] sm:$0x1] %vm45, %v44
    %s48 = sshll.u32 1, 1
    %s49 = ssub.s32 %s48, 1
    %v51 = vld [vmem:[#allocation0] sm:%s49]
    %s52 = sshll.u32 1, 1
    %s53 = ssub.s32 %s52, 1
    %54 = vst [vmem:[%s1] sm:%s53] %v51

// kernel: tile.28
$region0: #{tile.28}
  %s0 = inlined_call_operand.vmem [shape: f32[16,16], index: 0, kind: input, shape index: {}]
  %s1 = inlined_call_operand.vmem [shape: f32[256], index: 1, kind: output, shape index: {}]
  $region1: #{tile.28} parent=0
    #allocation0 [shape = 'u8[4096]{0}', space=vmem, size = 0x1000, scoped, tag = 'scoped mem for output reshape']
    %s2 = smov 3
    %v3 = vld [vmem:[%s0] ss:$8 sm:%s2]
    %vm4 = vcmask 130048
    %5 = vst.msk [vmem:[#allocation0] sm:$0x3] %vm4, %v3
    %s6 = scalar_lea.vmem %s0, 7
    %s7 = smov 3
    %v8 = vld [vmem:[%s6] ss:$8 sm:%s7]
    %9 = vrot.lane.b32.xlu0 %v8, 112
    %v10 = vpop.permute.xlu0 %9
    %vm11 = vcmask 1048448
    %12 = vst.msk [vmem:[#allocation0] sm:$0x3] %vm11, %v10
    %s13 = scalar_lea.vmem %s0, 6
    %s14 = smov 3
    %v15 = vld [vmem:[%s13] ss:$8 sm:%s14]
    %16 = vrot.lane.b32.xlu0 %v15, 96
    %v17 = vpop.permute.xlu0 %16
    %vm18 = vcmask 917248
    %19 = vst.msk [vmem:[#allocation0] sm:$0x3] %vm18, %v17
    %s20 = scalar_lea.vmem %s0, 5
    %s21 = smov 3
    %v22 = vld [vmem:[%s20] ss:$8 sm:%s21]
    %23 = vrot.lane.b32.xlu0 %v22, 80
    %v24 = vpop.permute.xlu0 %23
    %vm25 = vcmask 786048
    %26 = vst.msk [vmem:[#allocation0] sm:$0x3] %vm25, %v24
    %s27 = scalar_lea.vmem %s0, 4
    %s28 = smov 3
    %v29 = vld [vmem:[%s27] ss:$8 sm:%s28]
    %30 = vrot.lane.b32.xlu0 %v29, 64
    %v31 = vpop.permute.xlu0 %30
    %vm32 = vcmask 654848
    %33 = vst.msk [vmem:[#allocation0] sm:$0x3] %vm32, %v31
    %s34 = scalar_lea.vmem %s0, 3
    %s35 = smov 3
    %v36 = vld [vmem:[%s34] ss:$8 sm:%s35]
    %37 = vrot.lane.b32.xlu0 %v36, 48
    %v38 = vpop.permute.xlu0 %37
    %vm39 = vcmask 523648
    %40 = vst.msk [vmem:[#allocation0] sm:$0x3] %vm39, %v38
    %s41 = scalar_lea.vmem %s0, 2
    %s42 = smov 3
    %v43 = vld [vmem:[%s41] ss:$8 sm:%s42]
    %44 = vrot.lane.b32.xlu0 %v43, 32
    %v45 = vpop.permute.xlu0 %44
    %vm46 = vcmask 392448
    %47 = vst.msk [vmem:[#allocation0] sm:$0x3] %vm46, %v45
    %s48 = scalar_lea.vmem %s0, 1
    %s49 = smov 3
    %v50 = vld [vmem:[%s48] ss:$8 sm:%s49]
    %51 = vrot.lane.b32.xlu0 %v50, 16
    %v52 = vpop.permute.xlu0 %51
    %vm53 = vcmask 261248
    %54 = vst.msk [vmem:[#allocation0] sm:$0x3] %vm53, %v52
    %s56 = sshll.u32 1, 2
    %s57 = ssub.s32 %s56, 1
    %v59 = vld [vmem:[#allocation0] sm:%s57]
    %s60 = sshll.u32 1, 2
    %s61 = ssub.s32 %s60, 1
    %62 = vst [vmem:[%s1] sm:%s61] %v59

// kernel: _lambda_.10
$region0: #{_lambda_.10}
  #allocation0 [shape = 'u32[]', space=smem, size = 0x4, offset = 0x4, fixed_abs, tag = 'smem constant byte address 0x4 - core index']
  #allocation1 [shape = 'u32[144,128]{1,0:T(1,128)}', space=vmem, size = 0x12000, scoped, tag = 'internal scratch']
  %s0 = inlined_call_operand.vmem [shape: bf16[512,36], index: 0, kind: input, shape index: {}]
  %s1 = inlined_call_operand.vmem [shape: bf16[36,8], index: 1, kind: input, shape index: {}]
  %s2 = inlined_call_operand.vmem [shape: f32[1,8], index: 2, kind: input, shape index: {}]
  %s3 = inlined_call_operand.vmem [shape: f32[1,8], index: 3, kind: input, shape index: {}]
  %s4 = inlined_call_operand.vmem [shape: f32[512,8], index: 4, kind: output, shape index: {}]
  %s5 = sld [smem:[#allocation0]]
  $region49: #{_lambda_.10} parent=0
    _
  %s7 = ssub.s32 1, %s5
  %s8 = scalar_select 0, %s7, %s5
  loop: start=0, step=1, limit=4
  $region2: #{_lambda_.10} parent=0 // loop_pre_header
    _
  $region3: #{_lambda_.10} parent=0 // loop_header
    %s10 = sphi 0, %s14
    %p11 = scmp.ge.s32.totalorder %s10, 4
    %s20 = sphi 0, %s22
    %s23 = sphi 0, %s20
    %s24 = sphi 0, %s23
    %s40 = sphi 0, %s24
    %s44 = sphi 0, %s44
    %s46 = sphi 0, %s44
    %s47 = sphi 0, %s46
    %s61 = sphi 0, %s47
    %s65 = sphi 0, %s65
    %s67 = sphi 0, %s65
    %s68 = sphi 0, %s67
    %s82 = sphi 0, %s68
    %s86 = sphi 0, %s86
    %s88 = sphi 0, %s86
    %s89 = sphi 0, %s88
    %s103 = sphi 0, %s89
    %s109 = sphi 0, %s111
    %s112 = sphi 0, %s109
    %s113 = sphi 0, %s112
    %s129 = sphi 0, %s113
  $region4: #{_lambda_.10} parent=0 // loop_header_branch
    %13 = sbr.rel (%p11) target = $region8
  $region5: #{_lambda_.10} parent=0 // loop_body
    %s15 = ssub.s32 %s10, 1
    %s16 = ssub.s32 %s10, 2
    %s17 = sadd.s32 %s10, 1
    %s18 = ssub.s32 %s10, %s17
    %p19 = scmp.eq.s32.totalorder %s18, 0
    %s21 = sadd.s32 %s20, 1
    %s22 = scalar_select %p19, %s20, %s21
    %p25 = pneg %p19
    %p26 = scmp.eq.s32.totalorder %s10, 1
    %p27 = por %p25, %p26
    %p28 = scmp.ne.s32.totalorder %s20, %s23
    %p29 = scmp.eq.s32.totalorder %s10, 0
    %p30 = por %p28, %p29
    %p31 = scmp.ne.s32.totalorder %s20, %s23
    %p32 = scmp.eq.s32.totalorder %s15, 1
    %p33 = por %p31, %p32
    %p34 = scmp.ne.s32.totalorder %s23, %s24
    %p35 = scmp.eq.s32.totalorder %s15, 0
    %p36 = por %p34, %p35
    %p37 = scmp.ne.s32.totalorder %s23, %s24
    %p38 = scmp.eq.s32.totalorder %s16, 1
    %p39 = por %p37, %p38
    %p41 = scmp.ne.s32.totalorder %s24, %s40
    %p42 = scmp.eq.s32.totalorder %s16, 0
    %p43 = por %p41, %p42
    %s45 = sadd.s32 %s44, 1
    %p48 = scmp.eq.s32.totalorder %s10, 1
    %p49 = scmp.ne.s32.totalorder %s44, %s46
    %p50 = scmp.eq.s32.totalorder %s10, 0
    %p51 = por %p49, %p50
    %p52 = scmp.ne.s32.totalorder %s44, %s46
    %p53 = scmp.eq.s32.totalorder %s15, 1
    %p54 = por %p52, %p53
    %p55 = scmp.ne.s32.totalorder %s46, %s47
    %p56 = scmp.eq.s32.totalorder %s15, 0
    %p57 = por %p55, %p56
    %p58 = scmp.ne.s32.totalorder %s46, %s47
    %p59 = scmp.eq.s32.totalorder %s16, 1
    %p60 = por %p58, %p59
    %p62 = scmp.ne.s32.totalorder %s47, %s61
    %p63 = scmp.eq.s32.totalorder %s16, 0
    %p64 = por %p62, %p63
    %s66 = sadd.s32 %s65, 1
    %p69 = scmp.eq.s32.totalorder %s10, 1
    %p70 = scmp.ne.s32.totalorder %s65, %s67
    %p71 = scmp.eq.s32.totalorder %s10, 0
    %p72 = por %p70, %p71
    %p73 = scmp.ne.s32.totalorder %s65, %s67
    %p74 = scmp.eq.s32.totalorder %s15, 1
    %p75 = por %p73, %p74
    %p76 = scmp.ne.s32.totalorder %s67, %s68
    %p77 = scmp.eq.s32.totalorder %s15, 0
    %p78 = por %p76, %p77
    %p79 = scmp.ne.s32.totalorder %s67, %s68
    %p80 = scmp.eq.s32.totalorder %s16, 1
    %p81 = por %p79, %p80
    %p83 = scmp.ne.s32.totalorder %s68, %s82
    %p84 = scmp.eq.s32.totalorder %s16, 0
    %p85 = por %p83, %p84
    %s87 = sadd.s32 %s86, 1
    %p90 = scmp.eq.s32.totalorder %s10, 1
    %p91 = scmp.ne.s32.totalorder %s86, %s88
    %p92 = scmp.eq.s32.totalorder %s10, 0
    %p93 = por %p91, %p92
    %p94 = scmp.ne.s32.totalorder %s86, %s88
    %p95 = scmp.eq.s32.totalorder %s15, 1
    %p96 = por %p94, %p95
    %p97 = scmp.ne.s32.totalorder %s88, %s89
    %p98 = scmp.eq.s32.totalorder %s15, 0
    %p99 = por %p97, %p98
    %p100 = scmp.ne.s32.totalorder %s88, %s89
    %p101 = scmp.eq.s32.totalorder %s16, 1
    %p102 = por %p100, %p101
    %p104 = scmp.ne.s32.totalorder %s89, %s103
    %p105 = scmp.eq.s32.totalorder %s16, 0
    %p106 = por %p104, %p105
    %s107 = ssub.s32 %s10, %s17
    %p108 = scmp.eq.s32.totalorder %s107, 0
    %s110 = sadd.s32 %s109, 1
    %s111 = scalar_select %p108, %s109, %s110
    %p114 = pneg %p108
    %p115 = scmp.eq.s32.totalorder %s10, 1
    %p116 = por %p114, %p115
    %p117 = scmp.ne.s32.totalorder %s109, %s112
    %p118 = scmp.eq.s32.totalorder %s10, 0
    %p119 = por %p117, %p118
    %p120 = scmp.ne.s32.totalorder %s109, %s112
    %p121 = scmp.eq.s32.totalorder %s15, 1
    %p122 = por %p120, %p121
    %p123 = scmp.ne.s32.totalorder %s112, %s113
    %p124 = scmp.eq.s32.totalorder %s15, 0
    %p125 = por %p123, %p124
    %p126 = scmp.ne.s32.totalorder %s112, %s113
    %p127 = scmp.eq.s32.totalorder %s16, 1
    %p128 = por %p126, %p127
    %p130 = scmp.ne.s32.totalorder %s113, %s129
    %p131 = scmp.eq.s32.totalorder %s16, 0
    %p132 = por %p130, %p131
    %p133 = scmp.le.s32.totalorder 1, %s10
    %p134 = scmp.lt.s32.totalorder %s10, 3
    %p135 = pnand %p133, %p134
    %p136 = pneg %p135
    // Predicated region
    $region9: #{_lambda_.10} parent=5 // pred_check
      _
    $region10: #{_lambda_.10} parent=5 // pred_check_branch
      %138 = sbr.rel (%p135) target = $region12
    $region11: #{_lambda_.10} parent=5 // pred_region
      %s139 = ssub.s32 %s10, 1
      // Predicated region
      $region13: #{_lambda_.10} parent=11 // pred_check
        %p140 = pneg %p57
      $region14: #{_lambda_.10} parent=11 // pred_check_branch
        %142 = sbr.rel (%p140) target = $region16
      $region15: #{_lambda_.10} parent=11 // pred_region
        _
      $region16: #{_lambda_.10} parent=11 // pred_fallthru
        _
      // Predicated region
      $region17: #{_lambda_.10} parent=11 // pred_check
        %p143 = pneg %p78
      $region18: #{_lambda_.10} parent=11 // pred_check_branch
        %145 = sbr.rel (%p143) target = $region20
      $region19: #{_lambda_.10} parent=11 // pred_region
        _
      $region20: #{_lambda_.10} parent=11 // pred_fallthru
        _
      // Predicated region
      $region21: #{_lambda_.10} parent=11 // pred_check
        %p146 = pneg %p99
      $region22: #{_lambda_.10} parent=11 // pred_check_branch
        %148 = sbr.rel (%p146) target = $region24
      $region23: #{_lambda_.10} parent=11 // pred_region
        _
      $region24: #{_lambda_.10} parent=11 // pred_fallthru
        _
    $region12: #{_lambda_.10} parent=5 // pred_fallthru
      _
    %p149 = scmp.lt.s32.totalorder %s10, 2
    // Predicated region
    $region25: #{_lambda_.10} parent=5 // pred_check
      %p150 = pneg %p149
    $region26: #{_lambda_.10} parent=5 // pred_check_branch
      %152 = sbr.rel (%p150) target = $region28
    $region27: #{_lambda_.10} parent=5 // pred_region
      // Predicated region
      $region29: #{_lambda_.10} parent=27 // pred_check
        %p153 = pneg %p30
      $region30: #{_lambda_.10} parent=27 // pred_check_branch
        %155 = sbr.rel (%p153) target = $region32
      $region31: #{_lambda_.10} parent=27 // pred_region
        %s156 = smul.u32 32, %s10
        %p157 = scmp.lt.s32.totalorder %s156, 63
        %s158 = scalar_select %p157, %s156, 63
        %s159 = smul.addr %s158, 4
        %s160 = scalar_lea.vmem %s0, %s159
        %s161 = smul.u32 32, %s10
      $region32: #{_lambda_.10} parent=27 // pred_fallthru
        _
    $region28: #{_lambda_.10} parent=5 // pred_fallthru
      _
    %p162 = scmp.le.s32.totalorder 1, %s10
    %p163 = scmp.lt.s32.totalorder %s10, 3
    %p164 = pnand %p162, %p163
    %p165 = pneg %p164
    // Predicated region
    $region33: #{_lambda_.10} parent=5 // pred_check
      _
    $region34: #{_lambda_.10} parent=5 // pred_check_branch
      %167 = sbr.rel (%p164) target = $region36
    $region35: #{_lambda_.10} parent=5 // pred_region
      %s168 = ssub.s32 %s10, 1
      %s169 = smul.u32 32, %s15
      %p170 = scmp.lt.s32.totalorder %s169, 63
      %s171 = scalar_select %p170, %s169, 63
      %s172 = smul.addr %s171, 4
      %s173 = scalar_lea.vmem %s0, %s172
      %p174 = pneg %p36
      %p175 = pneg %p33
      %p176 = pneg %p57
      %p177 = pneg %p54
      %p178 = pneg %p78
      %p179 = pneg %p75
      %p180 = pneg %p99
      %p181 = pneg %p96
      %p182 = pneg %p125
      %p183 = pneg %p122
      %s184 = smul.u32 32, %s15
      %p185 = scmp.lt.s32.totalorder %s184, 63
      %s186 = scalar_select %p185, %s184, 63
      %s187 = smul.addr %s186, 8
      %s188 = scalar_lea.vmem %s4, %s187
      %s189 = smul.u32 32, %s15
      %p190 = scmp.lt.s32.totalorder %s189, 63
      %s191 = scalar_select %p190, %s189, 63
      %s192 = smul.addr %s191, 4
      %s193 = scalar_lea.vmem %s0, %s192
      %s194 = smul.u32 32, %s15
      %s195 = smul.u32 32, %s15
      %p196 = scmp.lt.s32.totalorder %s195, 63
      %s197 = scalar_select %p196, %s195, 63
      %s198 = smul.addr %s197, 8
      %s199 = scalar_lea.vmem %s4, %s198
      %s200 = smul.u32 32, %s15
      %v202 = vld [vmem:[%s193] sm:$0xf]
      %v203 = vld [vmem:[%s193 + $0x4] sm:$0xf]
      %v204 = vld [vmem:[%s193 + $0x8] sm:$0xf]
      %v205 = vld [vmem:[%s193 + $0xc] sm:$0xf]
      %v206 = vld [vmem:[%s193 + $0x10] sm:$0xf]
      %v207 = vld [vmem:[%s193 + $0x14] sm:$0xf]
      %v208 = vld [vmem:[%s193 + $0x18] sm:$0xf]
      %v209 = vld [vmem:[%s193 + $0x1c] sm:$0xf]
      %v210 = vld [vmem:[%s193 + $0x20] sm:$0xf]
      %v211 = vld [vmem:[%s193 + $0x24] sm:$0xf]
      %v212 = vld [vmem:[%s193 + $0x28] sm:$0xf]
      %v213 = vld [vmem:[%s193 + $0x2c] sm:$0xf]
      %v214 = vld [vmem:[%s193 + $0x30] sm:$0xf]
      %v215 = vld [vmem:[%s193 + $0x34] sm:$0xf]
      %v216 = vld [vmem:[%s193 + $0x38] sm:$0xf]
      %v217 = vld [vmem:[%s193 + $0x3c] sm:$0xf]
      %v218 = vld [vmem:[%s193 + $0x40] sm:$0xf]
      %v219 = vld [vmem:[%s193 + $0x44] sm:$0xf]
      %v220 = vld [vmem:[%s193 + $0x48] sm:$0xf]
      %v221 = vld [vmem:[%s193 + $0x4c] sm:$0xf]
      %v222 = vld [vmem:[%s193 + $0x50] sm:$0xf]
      %v223 = vld [vmem:[%s193 + $0x54] sm:$0xf]
      %v224 = vld [vmem:[%s193 + $0x58] sm:$0xf]
      %v225 = vld [vmem:[%s193 + $0x5c] sm:$0xf]
      %v226 = vld [vmem:[%s193 + $0x60] sm:$0xf]
      %v227 = vld [vmem:[%s193 + $0x64] sm:$0xf]
      %v228 = vld [vmem:[%s193 + $0x68] sm:$0xf]
      %v229 = vld [vmem:[%s193 + $0x6c] sm:$0xf]
      %v230 = vld [vmem:[%s193 + $0x70] sm:$0xf]
      %v231 = vld [vmem:[%s193 + $0x74] sm:$0xf]
      %v232 = vld [vmem:[%s193 + $0x78] sm:$0xf]
      %v233 = vld [vmem:[%s193 + $0x7c] sm:$0xf]
      %v234 = vld [vmem:[%s1] sm:$0xf]
      %v235 = vld [vmem:[%s1 + $0x4] sm:$0xf]
      %v236 = vld [vmem:[%s1 + $0x8] sm:$0xf]
      %v237 = vld [vmem:[%s1 + $0xc] sm:$0xf]
      %v238 = vld [vmem:[%s1 + $0x10] sm:$0x3]
      %v271 = vunpack.c.l.b16 %v202
      %v272 = vunpack.c.l.b16 %v203
      %v273 = vunpack.c.l.b16 %v204
      %v274 = vunpack.c.l.b16 %v205
      %v275 = vunpack.c.l.b16 %v206
      %v276 = vunpack.c.l.b16 %v207
      %v277 = vunpack.c.l.b16 %v208
      %v278 = vunpack.c.l.b16 %v209
      %v279 = vunpack.c.l.b16 %v210
      %v280 = vunpack.c.l.b16 %v211
      %v281 = vunpack.c.l.b16 %v212
      %v282 = vunpack.c.l.b16 %v213
      %v283 = vunpack.c.l.b16 %v214
      %v284 = vunpack.c.l.b16 %v215
      %v285 = vunpack.c.l.b16 %v216
      %v286 = vunpack.c.l.b16 %v217
      %v287 = vunpack.c.l.b16 %v218
      %v288 = vunpack.c.l.b16 %v219
      %v289 = vunpack.c.l.b16 %v220
      %v290 = vunpack.c.l.b16 %v221
      %v291 = vunpack.c.l.b16 %v222
      %v292 = vunpack.c.l.b16 %v223
      %v293 = vunpack.c.l.b16 %v224
      %v294 = vunpack.c.l.b16 %v225
      %v295 = vunpack.c.l.b16 %v226
      %v296 = vunpack.c.l.b16 %v227
      %v297 = vunpack.c.l.b16 %v228
      %v298 = vunpack.c.l.b16 %v229
      %v299 = vunpack.c.l.b16 %v230
      %v300 = vunpack.c.l.b16 %v231
      %v301 = vunpack.c.l.b16 %v232
      %v302 = vunpack.c.l.b16 %v233
      %v303 = vpack.c.b16 %v272, %v271
      %v304 = vpack.c.b16 %v274, %v273
      %v305 = vpack.c.b16 %v276, %v275
      %v306 = vpack.c.b16 %v278, %v277
      %v307 = vpack.c.b16 %v280, %v279
      %v308 = vpack.c.b16 %v282, %v281
      %v309 = vpack.c.b16 %v284, %v283
      %v310 = vpack.c.b16 %v286, %v285
      %v311 = vpack.c.b16 %v288, %v287
      %v312 = vpack.c.b16 %v290, %v289
      %v313 = vpack.c.b16 %v292, %v291
      %v314 = vpack.c.b16 %v294, %v293
      %v315 = vpack.c.b16 %v296, %v295
      %v316 = vpack.c.b16 %v298, %v297
      %v317 = vpack.c.b16 %v300, %v299
      %v318 = vpack.c.b16 %v302, %v301
      %v324 = vunpack.c.l.b16 %v234
      %v325 = vunpack.c.l.b16 %v235
      %v326 = vunpack.c.l.b16 %v236
      %v327 = vunpack.c.l.b16 %v237
      %v328 = vunpack.c.l.b16 %v238
      %v329 = vpack.c.b16 %v325, %v324
      %v330 = vpack.c.b16 %v327, %v326
      %v331 = vpack.c.b16 %v328, %v328
      %vm334 = vcmask 293888
      %v336 = vsel %vm334, %v303, 0
      %v339 = vsel %vm334, %v304, 0
      %v342 = vsel %vm334, %v305, 0
      %v345 = vsel %vm334, %v306, 0
      %v348 = vsel %vm334, %v307, 0
      %v351 = vsel %vm334, %v308, 0
      %v354 = vsel %vm334, %v309, 0
      %v357 = vsel %vm334, %v310, 0
      %v360 = vsel %vm334, %v311, 0
      %v363 = vsel %vm334, %v312, 0
      %v366 = vsel %vm334, %v313, 0
      %v369 = vsel %vm334, %v314, 0
      %v372 = vsel %vm334, %v315, 0
      %v375 = vsel %vm334, %v316, 0
      %v378 = vsel %vm334, %v317, 0
      %v381 = vsel %vm334, %v318, 0
      %vm383 = vcmask 1041408
      %v385 = vsel %vm383, %v331, 0
      %387 = vmatprep.subr.bf16.mxu0 0
      %388 = vmatpush1.bf16.msra.mxu0 0
      %389 = vmatprep.subr.bf16.mxu0 0
      %390 = vmatpush1.bf16.msra.mxu0 0
      %391 = vmatprep.subr.bf16.mxu0 0
      %392 = vmatpush1.bf16.msra.mxu0 0
      %393 = vmatprep.subr.bf16.mxu0 0
      %394 = vmatpush1.bf16.msra.mxu0 0
      %395 = vmatprep.subr.bf16.mxu0 0
      %396 = vmatpush1.bf16.msra.mxu0 0
      %397 = vmatprep.subr.bf16.mxu0 0
      %398 = vmatpush1.bf16.msra.mxu0 %v385
      %399 = vmatprep.subr.bf16.mxu0 0
      %400 = vmatpush1.bf16.msra.mxu0 %v330
      %401 = vmatprep.subr.bf16.mxu0 0
      %402 = vmatpush1.bf16.msra.mxu0 %v329
      %403 = vmatprep.subr.bf16.mxu0 0
      %404 = vmatpush2.bf16.msra.mxu0 0
      %405 = vmatprep.subr.bf16.mxu0 0
      %406 = vmatpush2.bf16.msra.mxu0 0
      %407 = vmatprep.subr.bf16.mxu0 0
      %408 = vmatpush2.bf16.msra.mxu0 0
      %409 = vmatprep.subr.bf16.mxu0 0
      %410 = vmatpush2.bf16.msra.mxu0 0
      %411 = vmatprep.subr.bf16.mxu0 0
      %412 = vmatpush2.bf16.msra.mxu0 0
      %413 = vmatprep.subr.bf16.mxu0 0
      %414 = vmatpush2.bf16.msra.mxu0 0
      %415 = vmatprep.subr.bf16.mxu0 0
      %416 = vmatpush2.bf16.msra.mxu0 0
      %417 = vmatprep.subr.bf16.mxu0 0
      %418 = vmatpush2.bf16.msra.mxu0 0
      %419 = vmatprep.mubr.bf16.mxu0 0
      %420 = vmatmul.mubr.bf16.gmra.mxu0 %v336
      %v421 = vpop.f32.mrf.mxu0
      %v422 = vadd.f32 0.0, %v421
      %v423 = vpop.f32.mrf.mxu0
      %v424 = vpop.f32.mrf.mxu0
      %v425 = vadd.f32 0.0, %v424
      %v426 = vpop.f32.mrf.mxu0
      %427 = vmatprep.mubr.bf16.mxu0 0
      %428 = vmatmul.mubr.bf16.gmra.mxu0 %v339
      %v429 = vpop.f32.mrf.mxu0
      %v430 = vadd.f32 0.0, %v429
      %v431 = vpop.f32.mrf.mxu0
      %v432 = vpop.f32.mrf.mxu0
      %v433 = vadd.f32 0.0, %v432
      %v434 = vpop.f32.mrf.mxu0
      %435 = vmatprep.mubr.bf16.mxu0 0
      %436 = vmatmul.mubr.bf16.gmra.mxu0 %v342
      %v437 = vpop.f32.mrf.mxu0
      %v438 = vadd.f32 0.0, %v437
      %v439 = vpop.f32.mrf.mxu0
      %v440 = vpop.f32.mrf.mxu0
      %v441 = vadd.f32 0.0, %v440
      %v442 = vpop.f32.mrf.mxu0
      %443 = vmatprep.mubr.bf16.mxu0 0
      %444 = vmatmul.mubr.bf16.gmra.mxu0 %v345
      %v445 = vpop.f32.mrf.mxu0
      %v446 = vadd.f32 0.0, %v445
      %v447 = vpop.f32.mrf.mxu0
      %v448 = vpop.f32.mrf.mxu0
      %v449 = vadd.f32 0.0, %v448
      %v450 = vpop.f32.mrf.mxu0
      %451 = vmatprep.mubr.bf16.mxu0 0
      %452 = vmatmul.mubr.bf16.gmra.mxu0 %v348
      %v453 = vpop.f32.mrf.mxu0
      %v454 = vadd.f32 0.0, %v453
      %v455 = vpop.f32.mrf.mxu0
      %v456 = vpop.f32.mrf.mxu0
      %v457 = vadd.f32 0.0, %v456
      %v458 = vpop.f32.mrf.mxu0
      %459 = vmatprep.mubr.bf16.mxu0 0
      %460 = vmatmul.mubr.bf16.gmra.mxu0 %v351
      %v461 = vpop.f32.mrf.mxu0
      %v462 = vadd.f32 0.0, %v461
      %v463 = vpop.f32.mrf.mxu0
      %v464 = vpop.f32.mrf.mxu0
      %v465 = vadd.f32 0.0, %v464
      %v466 = vpop.f32.mrf.mxu0
      %467 = vmatprep.mubr.bf16.mxu0 0
      %468 = vmatmul.mubr.bf16.gmra.mxu0 %v354
      %v469 = vpop.f32.mrf.mxu0
      %v470 = vadd.f32 0.0, %v469
      %v471 = vpop.f32.mrf.mxu0
      %v472 = vpop.f32.mrf.mxu0
      %v473 = vadd.f32 0.0, %v472
      %v474 = vpop.f32.mrf.mxu0
      %475 = vmatprep.mubr.bf16.mxu0 0
      %476 = vmatmul.mubr.bf16.gmra.mxu0 %v357
      %v477 = vpop.f32.mrf.mxu0
      %v478 = vadd.f32 0.0, %v477
      %v479 = vpop.f32.mrf.mxu0
      %v480 = vpop.f32.mrf.mxu0
      %v481 = vadd.f32 0.0, %v480
      %v482 = vpop.f32.mrf.mxu0
      %483 = vmatprep.mubr.bf16.mxu0 0
      %484 = vmatmul.mubr.bf16.gmra.mxu0 %v360
      %v485 = vpop.f32.mrf.mxu0
      %v486 = vadd.f32 0.0, %v485
      %v487 = vpop.f32.mrf.mxu0
      %v488 = vpop.f32.mrf.mxu0
      %v489 = vadd.f32 0.0, %v488
      %v490 = vpop.f32.mrf.mxu0
      %491 = vmatprep.mubr.bf16.mxu0 0
      %492 = vmatmul.mubr.bf16.gmra.mxu0 %v363
      %v493 = vpop.f32.mrf.mxu0
      %v494 = vadd.f32 0.0, %v493
      %v495 = vpop.f32.mrf.mxu0
      %v496 = vpop.f32.mrf.mxu0
      %v497 = vadd.f32 0.0, %v496
      %v498 = vpop.f32.mrf.mxu0
      %499 = vmatprep.mubr.bf16.mxu0 0
      %500 = vmatmul.mubr.bf16.gmra.mxu0 %v366
      %v501 = vpop.f32.mrf.mxu0
      %v502 = vadd.f32 0.0, %v501
      %v503 = vpop.f32.mrf.mxu0
      %v504 = vpop.f32.mrf.mxu0
      %v505 = vadd.f32 0.0, %v504
      %v506 = vpop.f32.mrf.mxu0
      %507 = vmatprep.mubr.bf16.mxu0 0
      %508 = vmatmul.mubr.bf16.gmra.mxu0 %v369
      %v509 = vpop.f32.mrf.mxu0
      %v510 = vadd.f32 0.0, %v509
      %v511 = vpop.f32.mrf.mxu0
      %v512 = vpop.f32.mrf.mxu0
      %v513 = vadd.f32 0.0, %v512
      %v514 = vpop.f32.mrf.mxu0
      %515 = vmatprep.mubr.bf16.mxu0 0
      %516 = vmatmul.mubr.bf16.gmra.mxu0 %v372
      %v517 = vpop.f32.mrf.mxu0
      %v518 = vadd.f32 0.0, %v517
      %v519 = vpop.f32.mrf.mxu0
      %v520 = vpop.f32.mrf.mxu0
      %v521 = vadd.f32 0.0, %v520
      %v522 = vpop.f32.mrf.mxu0
      %523 = vmatprep.mubr.bf16.mxu0 0
      %524 = vmatmul.mubr.bf16.gmra.mxu0 %v375
      %v525 = vpop.f32.mrf.mxu0
      %v526 = vadd.f32 0.0, %v525
      %v527 = vpop.f32.mrf.mxu0
      %v528 = vpop.f32.mrf.mxu0
      %v529 = vadd.f32 0.0, %v528
      %v530 = vpop.f32.mrf.mxu0
      %531 = vmatprep.mubr.bf16.mxu0 0
      %532 = vmatmul.mubr.bf16.gmra.mxu0 %v378
      %v533 = vpop.f32.mrf.mxu0
      %v534 = vadd.f32 0.0, %v533
      %v535 = vpop.f32.mrf.mxu0
      %v536 = vpop.f32.mrf.mxu0
      %v537 = vadd.f32 0.0, %v536
      %v538 = vpop.f32.mrf.mxu0
      %539 = vmatprep.mubr.bf16.mxu0 0
      %540 = vmatmul.mubr.bf16.gmra.mxu0 %v381
      %v541 = vpop.f32.mrf.mxu0
      %v542 = vadd.f32 0.0, %v541
      %v543 = vpop.f32.mrf.mxu0
      %v544 = vpop.f32.mrf.mxu0
      %v545 = vadd.f32 0.0, %v544
      %v546 = vpop.f32.mrf.mxu0
      %547 = vdwg.mxu0
      %v548 = vld [vmem:[%s2] sm:$0x1]
      %v550 = vlaneseq
      %v551 = vshrl.u32 %v550, 7
      %v552 = vsub.s32 0, %v551
      %v553 = vrot.slane %v548, %v552
      %v555 = vmul.f32 %v422, %v553
      %v556 = vmul.f32 %v425, %v553
      %v557 = vmul.f32 %v430, %v553
      %v558 = vmul.f32 %v433, %v553
      %v559 = vmul.f32 %v438, %v553
      %v560 = vmul.f32 %v441, %v553
      %v561 = vmul.f32 %v446, %v553
      %v562 = vmul.f32 %v449, %v553
      %v563 = vmul.f32 %v454, %v553
      %v564 = vmul.f32 %v457, %v553
      %v565 = vmul.f32 %v462, %v553
      %v566 = vmul.f32 %v465, %v553
      %v567 = vmul.f32 %v470, %v553
      %v568 = vmul.f32 %v473, %v553
      %v569 = vmul.f32 %v478, %v553
      %v570 = vmul.f32 %v481, %v553
      %v571 = vmul.f32 %v486, %v553
      %v572 = vmul.f32 %v489, %v553
      %v573 = vmul.f32 %v494, %v553
      %v574 = vmul.f32 %v497, %v553
      %v575 = vmul.f32 %v502, %v553
      %v576 = vmul.f32 %v505, %v553
      %v577 = vmul.f32 %v510, %v553
      %v578 = vmul.f32 %v513, %v553
      %v579 = vmul.f32 %v518, %v553
      %v580 = vmul.f32 %v521, %v553
      %v581 = vmul.f32 %v526, %v553
      %v582 = vmul.f32 %v529, %v553
      %v583 = vmul.f32 %v534, %v553
      %v584 = vmul.f32 %v537, %v553
      %v585 = vmul.f32 %v542, %v553
      %v586 = vmul.f32 %v545, %v553
      %v587 = vld [vmem:[%s3] sm:$0x1]
      %v589 = vlaneseq
      %v590 = vshrl.u32 %v589, 7
      %v591 = vsub.s32 0, %v590
      %v592 = vrot.slane %v587, %v591
      %v594 = vadd.f32 %v555, %v592
      %v595 = vadd.f32 %v556, %v592
      %v596 = vadd.f32 %v557, %v592
      %v597 = vadd.f32 %v558, %v592
      %v598 = vadd.f32 %v559, %v592
      %v599 = vadd.f32 %v560, %v592
      %v600 = vadd.f32 %v561, %v592
      %v601 = vadd.f32 %v562, %v592
      %v602 = vadd.f32 %v563, %v592
      %v603 = vadd.f32 %v564, %v592
      %v604 = vadd.f32 %v565, %v592
      %v605 = vadd.f32 %v566, %v592
      %v606 = vadd.f32 %v567, %v592
      %v607 = vadd.f32 %v568, %v592
      %v608 = vadd.f32 %v569, %v592
      %v609 = vadd.f32 %v570, %v592
      %v610 = vadd.f32 %v571, %v592
      %v611 = vadd.f32 %v572, %v592
      %v612 = vadd.f32 %v573, %v592
      %v613 = vadd.f32 %v574, %v592
      %v614 = vadd.f32 %v575, %v592
      %v615 = vadd.f32 %v576, %v592
      %v616 = vadd.f32 %v577, %v592
      %v617 = vadd.f32 %v578, %v592
      %v618 = vadd.f32 %v579, %v592
      %v619 = vadd.f32 %v580, %v592
      %v620 = vadd.f32 %v581, %v592
      %v621 = vadd.f32 %v582, %v592
      %v622 = vadd.f32 %v583, %v592
      %v623 = vadd.f32 %v584, %v592
      %v624 = vadd.f32 %v585, %v592
      %v625 = vadd.f32 %v586, %v592
      %vm626 = vcmp.gt.f32.partialorder %v594, 0.0
      %vm627 = vcmp.gt.f32.partialorder %v595, 0.0
      %vm628 = vcmp.gt.f32.partialorder %v596, 0.0
      %vm629 = vcmp.gt.f32.partialorder %v597, 0.0
      %vm630 = vcmp.gt.f32.partialorder %v598, 0.0
      %vm631 = vcmp.gt.f32.partialorder %v599, 0.0
      %vm632 = vcmp.gt.f32.partialorder %v600, 0.0
      %vm633 = vcmp.gt.f32.partialorder %v601, 0.0
      %vm634 = vcmp.gt.f32.partialorder %v602, 0.0
      %vm635 = vcmp.gt.f32.partialorder %v603, 0.0
      %vm636 = vcmp.gt.f32.partialorder %v604, 0.0
      %vm637 = vcmp.gt.f32.partialorder %v605, 0.0
      %vm638 = vcmp.gt.f32.partialorder %v606, 0.0
      %vm639 = vcmp.gt.f32.partialorder %v607, 0.0
      %vm640 = vcmp.gt.f32.partialorder %v608, 0.0
      %vm641 = vcmp.gt.f32.partialorder %v609, 0.0
      %vm642 = vcmp.gt.f32.partialorder %v610, 0.0
      %vm643 = vcmp.gt.f32.partialorder %v611, 0.0
      %vm644 = vcmp.gt.f32.partialorder %v612, 0.0
      %vm645 = vcmp.gt.f32.partialorder %v613, 0.0
      %vm646 = vcmp.gt.f32.partialorder %v614, 0.0
      %vm647 = vcmp.gt.f32.partialorder %v615, 0.0
      %vm648 = vcmp.gt.f32.partialorder %v616, 0.0
      %vm649 = vcmp.gt.f32.partialorder %v617, 0.0
      %vm650 = vcmp.gt.f32.partialorder %v618, 0.0
      %vm651 = vcmp.gt.f32.partialorder %v619, 0.0
      %vm652 = vcmp.gt.f32.partialorder %v620, 0.0
      %vm653 = vcmp.gt.f32.partialorder %v621, 0.0
      %vm654 = vcmp.gt.f32.partialorder %v622, 0.0
      %vm655 = vcmp.gt.f32.partialorder %v623, 0.0
      %vm656 = vcmp.gt.f32.partialorder %v624, 0.0
      %vm657 = vcmp.gt.f32.partialorder %v625, 0.0
      %v658 = vmul.f32 %v594, 0.1
      %v659 = vmul.f32 %v595, 0.1
      %v660 = vmul.f32 %v596, 0.1
      %v661 = vmul.f32 %v597, 0.1
      %v662 = vmul.f32 %v598, 0.1
      %v663 = vmul.f32 %v599, 0.1
      %v664 = vmul.f32 %v600, 0.1
      %v665 = vmul.f32 %v601, 0.1
      %v666 = vmul.f32 %v602, 0.1
      %v667 = vmul.f32 %v603, 0.1
      %v668 = vmul.f32 %v604, 0.1
      %v669 = vmul.f32 %v605, 0.1
      %v670 = vmul.f32 %v606, 0.1
      %v671 = vmul.f32 %v607, 0.1
      %v672 = vmul.f32 %v608, 0.1
      %v673 = vmul.f32 %v609, 0.1
      %v674 = vmul.f32 %v610, 0.1
      %v675 = vmul.f32 %v611, 0.1
      %v676 = vmul.f32 %v612, 0.1
      %v677 = vmul.f32 %v613, 0.1
      %v678 = vmul.f32 %v614, 0.1
      %v679 = vmul.f32 %v615, 0.1
      %v680 = vmul.f32 %v616, 0.1
      %v681 = vmul.f32 %v617, 0.1
      %v682 = vmul.f32 %v618, 0.1
      %v683 = vmul.f32 %v619, 0.1
      %v684 = vmul.f32 %v620, 0.1
      %v685 = vmul.f32 %v621, 0.1
      %v686 = vmul.f32 %v622, 0.1
      %v687 = vmul.f32 %v623, 0.1
      %v688 = vmul.f32 %v624, 0.1
      %v689 = vmul.f32 %v625, 0.1
      %v690 = vsel %vm626, %v594, %v658
      %v691 = vsel %vm627, %v595, %v659
      %v692 = vsel %vm628, %v596, %v660
      %v693 = vsel %vm629, %v597, %v661
      %v694 = vsel %vm630, %v598, %v662
      %v695 = vsel %vm631, %v599, %v663
      %v696 = vsel %vm632, %v600, %v664
      %v697 = vsel %vm633, %v601, %v665
      %v698 = vsel %vm634, %v602, %v666
      %v699 = vsel %vm635, %v603, %v667
      %v700 = vsel %vm636, %v604, %v668
      %v701 = vsel %vm637, %v605, %v669
      %v702 = vsel %vm638, %v606, %v670
      %v703 = vsel %vm639, %v607, %v671
      %v704 = vsel %vm640, %v608, %v672
      %v705 = vsel %vm641, %v609, %v673
      %v706 = vsel %vm642, %v610, %v674
      %v707 = vsel %vm643, %v611, %v675
      %v708 = vsel %vm644, %v612, %v676
      %v709 = vsel %vm645, %v613, %v677
      %v710 = vsel %vm646, %v614, %v678
      %v711 = vsel %vm647, %v615, %v679
      %v712 = vsel %vm648, %v616, %v680
      %v713 = vsel %vm649, %v617, %v681
      %v714 = vsel %vm650, %v618, %v682
      %v715 = vsel %vm651, %v619, %v683
      %v716 = vsel %vm652, %v620, %v684
      %v717 = vsel %vm653, %v621, %v685
      %v718 = vsel %vm654, %v622, %v686
      %v719 = vsel %vm655, %v623, %v687
      %v720 = vsel %vm656, %v624, %v688
      %v721 = vsel %vm657, %v625, %v689
      %vm722 = vcmask 64512
      %723 = vst.msk [vmem:[%s199] sm:$0xff] %vm722, %v690
      %724 = vst.msk [vmem:[%s199 + $0x8] sm:$0xff] %vm722, %v691
      %725 = vst.msk [vmem:[%s199 + $0x10] sm:$0xff] %vm722, %v692
      %726 = vst.msk [vmem:[%s199 + $0x18] sm:$0xff] %vm722, %v693
      %727 = vst.msk [vmem:[%s199 + $0x20] sm:$0xff] %vm722, %v694
      %728 = vst.msk [vmem:[%s199 + $0x28] sm:$0xff] %vm722, %v695
      %729 = vst.msk [vmem:[%s199 + $0x30] sm:$0xff] %vm722, %v696
      %730 = vst.msk [vmem:[%s199 + $0x38] sm:$0xff] %vm722, %v697
      %731 = vst.msk [vmem:[%s199 + $0x40] sm:$0xff] %vm722, %v698
      %732 = vst.msk [vmem:[%s199 + $0x48] sm:$0xff] %vm722, %v699
      %733 = vst.msk [vmem:[%s199 + $0x50] sm:$0xff] %vm722, %v700
      %734 = vst.msk [vmem:[%s199 + $0x58] sm:$0xff] %vm722, %v701
      %735 = vst.msk [vmem:[%s199 + $0x60] sm:$0xff] %vm722, %v702
      %736 = vst.msk [vmem:[%s199 + $0x68] sm:$0xff] %vm722, %v703
      %737 = vst.msk [vmem:[%s199 + $0x70] sm:$0xff] %vm722, %v704
      %738 = vst.msk [vmem:[%s199 + $0x78] sm:$0xff] %vm722, %v705
      %739 = vst.msk [vmem:[%s199 + $0x80] sm:$0xff] %vm722, %v706
      %740 = vst.msk [vmem:[%s199 + $0x88] sm:$0xff] %vm722, %v707
      %741 = vst.msk [vmem:[%s199 + $0x90] sm:$0xff] %vm722, %v708
      %742 = vst.msk [vmem:[%s199 + $0x98] sm:$0xff] %vm722, %v709
      %743 = vst.msk [vmem:[%s199 + $0xa0] sm:$0xff] %vm722, %v710
      %744 = vst.msk [vmem:[%s199 + $0xa8] sm:$0xff] %vm722, %v711
      %745 = vst.msk [vmem:[%s199 + $0xb0] sm:$0xff] %vm722, %v712
      %746 = vst.msk [vmem:[%s199 + $0xb8] sm:$0xff] %vm722, %v713
      %747 = vst.msk [vmem:[%s199 + $0xc0] sm:$0xff] %vm722, %v714
      %748 = vst.msk [vmem:[%s199 + $0xc8] sm:$0xff] %vm722, %v715
      %749 = vst.msk [vmem:[%s199 + $0xd0] sm:$0xff] %vm722, %v716
      %750 = vst.msk [vmem:[%s199 + $0xd8] sm:$0xff] %vm722, %v717
      %751 = vst.msk [vmem:[%s199 + $0xe0] sm:$0xff] %vm722, %v718
      %752 = vst.msk [vmem:[%s199 + $0xe8] sm:$0xff] %vm722, %v719
      %753 = vst.msk [vmem:[%s199 + $0xf0] sm:$0xff] %vm722, %v720
      %754 = vst.msk [vmem:[%s199 + $0xf8] sm:$0xff] %vm722, %v721
      %s755 = smul.u32 32, %s15
      %p756 = scmp.lt.s32.totalorder %s755, 63
      %s757 = scalar_select %p756, %s755, 63
      %s758 = smul.addr %s757, 8
      %s759 = scalar_lea.vmem %s4, %s758
      // Predicated region
      $region37: #{_lambda_.10} parent=35 // pred_check
        %p760 = pneg %p122
      $region38: #{_lambda_.10} parent=35 // pred_check_branch
        %762 = sbr.rel (%p760) target = $region40
      $region39: #{_lambda_.10} parent=35 // pred_region
        %s763 = smul.u32 32, %s15
      $region40: #{_lambda_.10} parent=35 // pred_fallthru
        _
    $region36: #{_lambda_.10} parent=5 // pred_fallthru
      _
    %p764 = scmp.le.s32.totalorder 2, %s10
    // Predicated region
    $region41: #{_lambda_.10} parent=5 // pred_check
      %p765 = pneg %p764
    $region42: #{_lambda_.10} parent=5 // pred_check_branch
      %767 = sbr.rel (%p765) target = $region44
    $region43: #{_lambda_.10} parent=5 // pred_region
      %s768 = ssub.s32 %s10, 2
      // Predicated region
      $region45: #{_lambda_.10} parent=43 // pred_check
        %p769 = pneg %p128
      $region46: #{_lambda_.10} parent=43 // pred_check_branch
        %771 = sbr.rel (%p769) target = $region48
      $region47: #{_lambda_.10} parent=43 // pred_region
        %s772 = smul.u32 32, %s16
        %p773 = scmp.lt.s32.totalorder %s772, 63
        %s774 = scalar_select %p773, %s772, 63
        %s775 = smul.addr %s774, 8
        %s776 = scalar_lea.vmem %s4, %s775
      $region48: #{_lambda_.10} parent=43 // pred_fallthru
        _
    $region44: #{_lambda_.10} parent=5 // pred_fallthru
      _
  $region6: #{_lambda_.10} parent=0 // loop_footer
    %s14 = sadd.s32 1, %s10
  $region7: #{_lambda_.10} parent=0 // loop_footer_branch
    %9 = sbr.rel target = $region3
  $region8: #{_lambda_.10} parent=0 // loop_exit
    _

// kernel: _lambda_.12
$region0: #{_lambda_.12}
  #allocation0 [shape = 'u32[]', space=smem, size = 0x4, offset = 0x4, fixed_abs, tag = 'smem constant byte address 0x4 - core index']
  #allocation1 [shape = 'u32[144,128]{1,0:T(1,128)}', space=vmem, size = 0x12000, scoped, tag = 'internal scratch']
  %s0 = inlined_call_operand.vmem [shape: bf16[128,16], index: 0, kind: input, shape index: {}]
  %s1 = inlined_call_operand.vmem [shape: bf16[16,8], index: 1, kind: input, shape index: {}]
  %s2 = inlined_call_operand.vmem [shape: f32[1,8], index: 2, kind: input, shape index: {}]
  %s3 = inlined_call_operand.vmem [shape: f32[1,8], index: 3, kind: input, shape index: {}]
  %s4 = inlined_call_operand.vmem [shape: f32[128,8], index: 4, kind: output, shape index: {}]
  %s5 = sld [smem:[#allocation0]]
  $region49: #{_lambda_.12} parent=0
    _
  %s7 = ssub.s32 1, %s5
  %s8 = scalar_select 0, %s7, %s5
  loop: start=0, step=1, limit=4
  $region2: #{_lambda_.12} parent=0 // loop_pre_header
    _
  $region3: #{_lambda_.12} parent=0 // loop_header
    %s10 = sphi 0, %s14
    %p11 = scmp.ge.s32.totalorder %s10, 4
    %s20 = sphi 0, %s22
    %s23 = sphi 0, %s20
    %s24 = sphi 0, %s23
    %s40 = sphi 0, %s24
    %s44 = sphi 0, %s44
    %s46 = sphi 0, %s44
    %s47 = sphi 0, %s46
    %s61 = sphi 0, %s47
    %s65 = sphi 0, %s65
    %s67 = sphi 0, %s65
    %s68 = sphi 0, %s67
    %s82 = sphi 0, %s68
    %s86 = sphi 0, %s86
    %s88 = sphi 0, %s86
    %s89 = sphi 0, %s88
    %s103 = sphi 0, %s89
    %s109 = sphi 0, %s111
    %s112 = sphi 0, %s109
    %s113 = sphi 0, %s112
    %s129 = sphi 0, %s113
  $region4: #{_lambda_.12} parent=0 // loop_header_branch
    %13 = sbr.rel (%p11) target = $region8
  $region5: #{_lambda_.12} parent=0 // loop_body
    %s15 = ssub.s32 %s10, 1
    %s16 = ssub.s32 %s10, 2
    %s17 = sadd.s32 %s10, 1
    %s18 = ssub.s32 %s10, %s17
    %p19 = scmp.eq.s32.totalorder %s18, 0
    %s21 = sadd.s32 %s20, 1
    %s22 = scalar_select %p19, %s20, %s21
    %p25 = pneg %p19
    %p26 = scmp.eq.s32.totalorder %s10, 1
    %p27 = por %p25, %p26
    %p28 = scmp.ne.s32.totalorder %s20, %s23
    %p29 = scmp.eq.s32.totalorder %s10, 0
    %p30 = por %p28, %p29
    %p31 = scmp.ne.s32.totalorder %s20, %s23
    %p32 = scmp.eq.s32.totalorder %s15, 1
    %p33 = por %p31, %p32
    %p34 = scmp.ne.s32.totalorder %s23, %s24
    %p35 = scmp.eq.s32.totalorder %s15, 0
    %p36 = por %p34, %p35
    %p37 = scmp.ne.s32.totalorder %s23, %s24
    %p38 = scmp.eq.s32.totalorder %s16, 1
    %p39 = por %p37, %p38
    %p41 = scmp.ne.s32.totalorder %s24, %s40
    %p42 = scmp.eq.s32.totalorder %s16, 0
    %p43 = por %p41, %p42
    %s45 = sadd.s32 %s44, 1
    %p48 = scmp.eq.s32.totalorder %s10, 1
    %p49 = scmp.ne.s32.totalorder %s44, %s46
    %p50 = scmp.eq.s32.totalorder %s10, 0
    %p51 = por %p49, %p50
    %p52 = scmp.ne.s32.totalorder %s44, %s46
    %p53 = scmp.eq.s32.totalorder %s15, 1
    %p54 = por %p52, %p53
    %p55 = scmp.ne.s32.totalorder %s46, %s47
    %p56 = scmp.eq.s32.totalorder %s15, 0
    %p57 = por %p55, %p56
    %p58 = scmp.ne.s32.totalorder %s46, %s47
    %p59 = scmp.eq.s32.totalorder %s16, 1
    %p60 = por %p58, %p59
    %p62 = scmp.ne.s32.totalorder %s47, %s61
    %p63 = scmp.eq.s32.totalorder %s16, 0
    %p64 = por %p62, %p63
    %s66 = sadd.s32 %s65, 1
    %p69 = scmp.eq.s32.totalorder %s10, 1
    %p70 = scmp.ne.s32.totalorder %s65, %s67
    %p71 = scmp.eq.s32.totalorder %s10, 0
    %p72 = por %p70, %p71
    %p73 = scmp.ne.s32.totalorder %s65, %s67
    %p74 = scmp.eq.s32.totalorder %s15, 1
    %p75 = por %p73, %p74
    %p76 = scmp.ne.s32.totalorder %s67, %s68
    %p77 = scmp.eq.s32.totalorder %s15, 0
    %p78 = por %p76, %p77
    %p79 = scmp.ne.s32.totalorder %s67, %s68
    %p80 = scmp.eq.s32.totalorder %s16, 1
    %p81 = por %p79, %p80
    %p83 = scmp.ne.s32.totalorder %s68, %s82
    %p84 = scmp.eq.s32.totalorder %s16, 0
    %p85 = por %p83, %p84
    %s87 = sadd.s32 %s86, 1
    %p90 = scmp.eq.s32.totalorder %s10, 1
    %p91 = scmp.ne.s32.totalorder %s86, %s88
    %p92 = scmp.eq.s32.totalorder %s10, 0
    %p93 = por %p91, %p92
    %p94 = scmp.ne.s32.totalorder %s86, %s88
    %p95 = scmp.eq.s32.totalorder %s15, 1
    %p96 = por %p94, %p95
    %p97 = scmp.ne.s32.totalorder %s88, %s89
    %p98 = scmp.eq.s32.totalorder %s15, 0
    %p99 = por %p97, %p98
    %p100 = scmp.ne.s32.totalorder %s88, %s89
    %p101 = scmp.eq.s32.totalorder %s16, 1
    %p102 = por %p100, %p101
    %p104 = scmp.ne.s32.totalorder %s89, %s103
    %p105 = scmp.eq.s32.totalorder %s16, 0
    %p106 = por %p104, %p105
    %s107 = ssub.s32 %s10, %s17
    %p108 = scmp.eq.s32.totalorder %s107, 0
    %s110 = sadd.s32 %s109, 1
    %s111 = scalar_select %p108, %s109, %s110
    %p114 = pneg %p108
    %p115 = scmp.eq.s32.totalorder %s10, 1
    %p116 = por %p114, %p115
    %p117 = scmp.ne.s32.totalorder %s109, %s112
    %p118 = scmp.eq.s32.totalorder %s10, 0
    %p119 = por %p117, %p118
    %p120 = scmp.ne.s32.totalorder %s109, %s112
    %p121 = scmp.eq.s32.totalorder %s15, 1
    %p122 = por %p120, %p121
    %p123 = scmp.ne.s32.totalorder %s112, %s113
    %p124 = scmp.eq.s32.totalorder %s15, 0
    %p125 = por %p123, %p124
    %p126 = scmp.ne.s32.totalorder %s112, %s113
    %p127 = scmp.eq.s32.totalorder %s16, 1
    %p128 = por %p126, %p127
    %p130 = scmp.ne.s32.totalorder %s113, %s129
    %p131 = scmp.eq.s32.totalorder %s16, 0
    %p132 = por %p130, %p131
    %p133 = scmp.le.s32.totalorder 1, %s10
    %p134 = scmp.lt.s32.totalorder %s10, 3
    %p135 = pnand %p133, %p134
    %p136 = pneg %p135
    // Predicated region
    $region9: #{_lambda_.12} parent=5 // pred_check
      _
    $region10: #{_lambda_.12} parent=5 // pred_check_branch
      %138 = sbr.rel (%p135) target = $region12
    $region11: #{_lambda_.12} parent=5 // pred_region
      %s139 = ssub.s32 %s10, 1
      // Predicated region
      $region13: #{_lambda_.12} parent=11 // pred_check
        %p140 = pneg %p57
      $region14: #{_lambda_.12} parent=11 // pred_check_branch
        %142 = sbr.rel (%p140) target = $region16
      $region15: #{_lambda_.12} parent=11 // pred_region
        _
      $region16: #{_lambda_.12} parent=11 // pred_fallthru
        _
      // Predicated region
      $region17: #{_lambda_.12} parent=11 // pred_check
        %p143 = pneg %p78
      $region18: #{_lambda_.12} parent=11 // pred_check_branch
        %145 = sbr.rel (%p143) target = $region20
      $region19: #{_lambda_.12} parent=11 // pred_region
        _
      $region20: #{_lambda_.12} parent=11 // pred_fallthru
        _
      // Predicated region
      $region21: #{_lambda_.12} parent=11 // pred_check
        %p146 = pneg %p99
      $region22: #{_lambda_.12} parent=11 // pred_check_branch
        %148 = sbr.rel (%p146) target = $region24
      $region23: #{_lambda_.12} parent=11 // pred_region
        _
      $region24: #{_lambda_.12} parent=11 // pred_fallthru
        _
    $region12: #{_lambda_.12} parent=5 // pred_fallthru
      _
    %p149 = scmp.lt.s32.totalorder %s10, 2
    // Predicated region
    $region25: #{_lambda_.12} parent=5 // pred_check
      %p150 = pneg %p149
    $region26: #{_lambda_.12} parent=5 // pred_check_branch
      %152 = sbr.rel (%p150) target = $region28
    $region27: #{_lambda_.12} parent=5 // pred_region
      // Predicated region
      $region29: #{_lambda_.12} parent=27 // pred_check
        %p153 = pneg %p30
      $region30: #{_lambda_.12} parent=27 // pred_check_branch
        %155 = sbr.rel (%p153) target = $region32
      $region31: #{_lambda_.12} parent=27 // pred_region
        %s156 = smul.u32 8, %s10
        %p157 = scmp.lt.s32.totalorder %s156, 15
        %s158 = scalar_select %p157, %s156, 15
        %s159 = smul.addr %s158, 4
        %s160 = scalar_lea.vmem %s0, %s159
        %s161 = smul.u32 8, %s10
      $region32: #{_lambda_.12} parent=27 // pred_fallthru
        _
    $region28: #{_lambda_.12} parent=5 // pred_fallthru
      _
    %p162 = scmp.le.s32.totalorder 1, %s10
    %p163 = scmp.lt.s32.totalorder %s10, 3
    %p164 = pnand %p162, %p163
    %p165 = pneg %p164
    // Predicated region
    $region33: #{_lambda_.12} parent=5 // pred_check
      _
    $region34: #{_lambda_.12} parent=5 // pred_check_branch
      %167 = sbr.rel (%p164) target = $region36
    $region35: #{_lambda_.12} parent=5 // pred_region
      %s168 = ssub.s32 %s10, 1
      %s169 = smul.u32 8, %s15
      %p170 = scmp.lt.s32.totalorder %s169, 15
      %s171 = scalar_select %p170, %s169, 15
      %s172 = smul.addr %s171, 4
      %s173 = scalar_lea.vmem %s0, %s172
      %p174 = pneg %p36
      %p175 = pneg %p33
      %p176 = pneg %p57
      %p177 = pneg %p54
      %p178 = pneg %p78
      %p179 = pneg %p75
      %p180 = pneg %p99
      %p181 = pneg %p96
      %p182 = pneg %p125
      %p183 = pneg %p122
      %s184 = smul.u32 8, %s15
      %p185 = scmp.lt.s32.totalorder %s184, 15
      %s186 = scalar_select %p185, %s184, 15
      %s187 = smul.addr %s186, 8
      %s188 = scalar_lea.vmem %s4, %s187
      %s189 = smul.u32 8, %s15
      %p190 = scmp.lt.s32.totalorder %s189, 15
      %s191 = scalar_select %p190, %s189, 15
      %s192 = smul.addr %s191, 4
      %s193 = scalar_lea.vmem %s0, %s192
      %s194 = smul.u32 8, %s15
      %s195 = smul.u32 8, %s15
      %p196 = scmp.lt.s32.totalorder %s195, 15
      %s197 = scalar_select %p196, %s195, 15
      %s198 = smul.addr %s197, 8
      %s199 = scalar_lea.vmem %s4, %s198
      %s200 = smul.u32 8, %s15
      %v202 = vld [vmem:[%s193] sm:$0xf]
      %v203 = vld [vmem:[%s193 + $0x4] sm:$0xf]
      %v204 = vld [vmem:[%s193 + $0x8] sm:$0xf]
      %v205 = vld [vmem:[%s193 + $0xc] sm:$0xf]
      %v206 = vld [vmem:[%s193 + $0x10] sm:$0xf]
      %v207 = vld [vmem:[%s193 + $0x14] sm:$0xf]
      %v208 = vld [vmem:[%s193 + $0x18] sm:$0xf]
      %v209 = vld [vmem:[%s193 + $0x1c] sm:$0xf]
      %v210 = vld [vmem:[%s1] sm:$0xf]
      %v211 = vld [vmem:[%s1 + $0x4] sm:$0xf]
      %v220 = vunpack.c.l.b16 %v202
      %v221 = vunpack.c.l.b16 %v203
      %v222 = vunpack.c.l.b16 %v204
      %v223 = vunpack.c.l.b16 %v205
      %v224 = vunpack.c.l.b16 %v206
      %v225 = vunpack.c.l.b16 %v207
      %v226 = vunpack.c.l.b16 %v208
      %v227 = vunpack.c.l.b16 %v209
      %v228 = vpack.c.b16 %v221, %v220
      %v229 = vpack.c.b16 %v223, %v222
      %v230 = vpack.c.b16 %v225, %v224
      %v231 = vpack.c.b16 %v227, %v226
      %v234 = vunpack.c.l.b16 %v210
      %v235 = vunpack.c.l.b16 %v211
      %v236 = vpack.c.b16 %v235, %v234
      %vm238 = vcmask 130048
      %v240 = vsel %vm238, %v228, 0
      %v243 = vsel %vm238, %v229, 0
      %v246 = vsel %vm238, %v230, 0
      %v249 = vsel %vm238, %v231, 0
      %251 = vmatprep.subr.bf16.mxu0 0
      %252 = vmatpush1.bf16.msra.mxu0 0
      %253 = vmatprep.subr.bf16.mxu0 0
      %254 = vmatpush1.bf16.msra.mxu0 0
      %255 = vmatprep.subr.bf16.mxu0 0
      %256 = vmatpush1.bf16.msra.mxu0 0
      %257 = vmatprep.subr.bf16.mxu0 0
      %258 = vmatpush1.bf16.msra.mxu0 0
      %259 = vmatprep.subr.bf16.mxu0 0
      %260 = vmatpush1.bf16.msra.mxu0 0
      %261 = vmatprep.subr.bf16.mxu0 0
      %262 = vmatpush1.bf16.msra.mxu0 0
      %263 = vmatprep.subr.bf16.mxu0 0
      %264 = vmatpush1.bf16.msra.mxu0 0
      %265 = vmatprep.subr.bf16.mxu0 0
      %266 = vmatpush1.bf16.msra.mxu0 %v236
      %267 = vmatprep.subr.bf16.mxu0 0
      %268 = vmatpush2.bf16.msra.mxu0 0
      %269 = vmatprep.subr.bf16.mxu0 0
      %270 = vmatpush2.bf16.msra.mxu0 0
      %271 = vmatprep.subr.bf16.mxu0 0
      %272 = vmatpush2.bf16.msra.mxu0 0
      %273 = vmatprep.subr.bf16.mxu0 0
      %274 = vmatpush2.bf16.msra.mxu0 0
      %275 = vmatprep.subr.bf16.mxu0 0
      %276 = vmatpush2.bf16.msra.mxu0 0
      %277 = vmatprep.subr.bf16.mxu0 0
      %278 = vmatpush2.bf16.msra.mxu0 0
      %279 = vmatprep.subr.bf16.mxu0 0
      %280 = vmatpush2.bf16.msra.mxu0 0
      %281 = vmatprep.subr.bf16.mxu0 0
      %282 = vmatpush2.bf16.msra.mxu0 0
      %283 = vmatprep.mubr.bf16.mxu0 0
      %284 = vmatmul.mubr.bf16.gmra.mxu0 %v240
      %v285 = vpop.f32.mrf.mxu0
      %v286 = vadd.f32 0.0, %v285
      %v287 = vpop.f32.mrf.mxu0
      %v288 = vpop.f32.mrf.mxu0
      %v289 = vadd.f32 0.0, %v288
      %v290 = vpop.f32.mrf.mxu0
      %291 = vmatprep.mubr.bf16.mxu0 0
      %292 = vmatmul.mubr.bf16.gmra.mxu0 %v243
      %v293 = vpop.f32.mrf.mxu0
      %v294 = vadd.f32 0.0, %v293
      %v295 = vpop.f32.mrf.mxu0
      %v296 = vpop.f32.mrf.mxu0
      %v297 = vadd.f32 0.0, %v296
      %v298 = vpop.f32.mrf.mxu0
      %299 = vmatprep.mubr.bf16.mxu0 0
      %300 = vmatmul.mubr.bf16.gmra.mxu0 %v246
      %v301 = vpop.f32.mrf.mxu0
      %v302 = vadd.f32 0.0, %v301
      %v303 = vpop.f32.mrf.mxu0
      %v304 = vpop.f32.mrf.mxu0
      %v305 = vadd.f32 0.0, %v304
      %v306 = vpop.f32.mrf.mxu0
      %307 = vmatprep.mubr.bf16.mxu0 0
      %308 = vmatmul.mubr.bf16.gmra.mxu0 %v249
      %v309 = vpop.f32.mrf.mxu0
      %v310 = vadd.f32 0.0, %v309
      %v311 = vpop.f32.mrf.mxu0
      %v312 = vpop.f32.mrf.mxu0
      %v313 = vadd.f32 0.0, %v312
      %v314 = vpop.f32.mrf.mxu0
      %315 = vdwg.mxu0
      %v316 = vld [vmem:[%s2] sm:$0x1]
      %v318 = vlaneseq
      %v319 = vshrl.u32 %v318, 7
      %v320 = vsub.s32 0, %v319
      %v321 = vrot.slane %v316, %v320
      %v323 = vmul.f32 %v286, %v321
      %v324 = vmul.f32 %v289, %v321
      %v325 = vmul.f32 %v294, %v321
      %v326 = vmul.f32 %v297, %v321
      %v327 = vmul.f32 %v302, %v321
      %v328 = vmul.f32 %v305, %v321
      %v329 = vmul.f32 %v310, %v321
      %v330 = vmul.f32 %v313, %v321
      %v331 = vld [vmem:[%s3] sm:$0x1]
      %v333 = vlaneseq
      %v334 = vshrl.u32 %v333, 7
      %v335 = vsub.s32 0, %v334
      %v336 = vrot.slane %v331, %v335
      %v338 = vadd.f32 %v323, %v336
      %v339 = vadd.f32 %v324, %v336
      %v340 = vadd.f32 %v325, %v336
      %v341 = vadd.f32 %v326, %v336
      %v342 = vadd.f32 %v327, %v336
      %v343 = vadd.f32 %v328, %v336
      %v344 = vadd.f32 %v329, %v336
      %v345 = vadd.f32 %v330, %v336
      %vm346 = vcmp.gt.f32.partialorder %v338, 0.0
      %vm347 = vcmp.gt.f32.partialorder %v339, 0.0
      %vm348 = vcmp.gt.f32.partialorder %v340, 0.0
      %vm349 = vcmp.gt.f32.partialorder %v341, 0.0
      %vm350 = vcmp.gt.f32.partialorder %v342, 0.0
      %vm351 = vcmp.gt.f32.partialorder %v343, 0.0
      %vm352 = vcmp.gt.f32.partialorder %v344, 0.0
      %vm353 = vcmp.gt.f32.partialorder %v345, 0.0
      %v354 = vmul.f32 %v338, 0.1
      %v355 = vmul.f32 %v339, 0.1
      %v356 = vmul.f32 %v340, 0.1
      %v357 = vmul.f32 %v341, 0.1
      %v358 = vmul.f32 %v342, 0.1
      %v359 = vmul.f32 %v343, 0.1
      %v360 = vmul.f32 %v344, 0.1
      %v361 = vmul.f32 %v345, 0.1
      %v362 = vsel %vm346, %v338, %v354
      %v363 = vsel %vm347, %v339, %v355
      %v364 = vsel %vm348, %v340, %v356
      %v365 = vsel %vm349, %v341, %v357
      %v366 = vsel %vm350, %v342, %v358
      %v367 = vsel %vm351, %v343, %v359
      %v368 = vsel %vm352, %v344, %v360
      %v369 = vsel %vm353, %v345, %v361
      %vm370 = vcmask 64512
      %371 = vst.msk [vmem:[%s199] sm:$0xff] %vm370, %v362
      %372 = vst.msk [vmem:[%s199 + $0x8] sm:$0xff] %vm370, %v363
      %373 = vst.msk [vmem:[%s199 + $0x10] sm:$0xff] %vm370, %v364
      %374 = vst.msk [vmem:[%s199 + $0x18] sm:$0xff] %vm370, %v365
      %375 = vst.msk [vmem:[%s199 + $0x20] sm:$0xff] %vm370, %v366
      %376 = vst.msk [vmem:[%s199 + $0x28] sm:$0xff] %vm370, %v367
      %377 = vst.msk [vmem:[%s199 + $0x30] sm:$0xff] %vm370, %v368
      %378 = vst.msk [vmem:[%s199 + $0x38] sm:$0xff] %vm370, %v369
      %s379 = smul.u32 8, %s15
      %p380 = scmp.lt.s32.totalorder %s379, 15
      %s381 = scalar_select %p380, %s379, 15
      %s382 = smul.addr %s381, 8
      %s383 = scalar_lea.vmem %s4, %s382
      // Predicated region
      $region37: #{_lambda_.12} parent=35 // pred_check
        %p384 = pneg %p122
      $region38: #{_lambda_.12} parent=35 // pred_check_branch
        %386 = sbr.rel (%p384) target = $region40
      $region39: #{_lambda_.12} parent=35 // pred_region
        %s387 = smul.u32 8, %s15
      $region40: #{_lambda_.12} parent=35 // pred_fallthru
        _
    $region36: #{_lambda_.12} parent=5 // pred_fallthru
      _
    %p388 = scmp.le.s32.totalorder 2, %s10
    // Predicated region
    $region41: #{_lambda_.12} parent=5 // pred_check
      %p389 = pneg %p388
    $region42: #{_lambda_.12} parent=5 // pred_check_branch
      %391 = sbr.rel (%p389) target = $region44
    $region43: #{_lambda_.12} parent=5 // pred_region
      %s392 = ssub.s32 %s10, 2
      // Predicated region
      $region45: #{_lambda_.12} parent=43 // pred_check
        %p393 = pneg %p128
      $region46: #{_lambda_.12} parent=43 // pred_check_branch
        %395 = sbr.rel (%p393) target = $region48
      $region47: #{_lambda_.12} parent=43 // pred_region
        %s396 = smul.u32 8, %s16
        %p397 = scmp.lt.s32.totalorder %s396, 15
        %s398 = scalar_select %p397, %s396, 15
        %s399 = smul.addr %s398, 8
        %s400 = scalar_lea.vmem %s4, %s399
      $region48: #{_lambda_.12} parent=43 // pred_fallthru
        _
    $region44: #{_lambda_.12} parent=5 // pred_fallthru
      _
  $region6: #{_lambda_.12} parent=0 // loop_footer
    %s14 = sadd.s32 1, %s10
  $region7: #{_lambda_.12} parent=0 // loop_footer_branch
    %9 = sbr.rel target = $region3
  $region8: #{_lambda_.12} parent=0 // loop_exit
    _

// kernel: _lambda_.11
$region0: #{_lambda_.11}
  #allocation0 [shape = 'u32[]', space=smem, size = 0x4, offset = 0x4, fixed_abs, tag = 'smem constant byte address 0x4 - core index']
  #allocation1 [shape = 'u32[144,128]{1,0:T(1,128)}', space=vmem, size = 0x12000, scoped, tag = 'internal scratch']
  %s0 = inlined_call_operand.vmem [shape: bf16[128,72], index: 0, kind: input, shape index: {}]
  %s1 = inlined_call_operand.vmem [shape: bf16[72,16], index: 1, kind: input, shape index: {}]
  %s2 = inlined_call_operand.vmem [shape: f32[1,16], index: 2, kind: input, shape index: {}]
  %s3 = inlined_call_operand.vmem [shape: f32[1,16], index: 3, kind: input, shape index: {}]
  %s4 = inlined_call_operand.vmem [shape: f32[128,16], index: 4, kind: output, shape index: {}]
  %s5 = sld [smem:[#allocation0]]
  $region49: #{_lambda_.11} parent=0
    _
  %s7 = ssub.s32 1, %s5
  %s8 = scalar_select 0, %s7, %s5
  loop: start=0, step=1, limit=4
  $region2: #{_lambda_.11} parent=0 // loop_pre_header
    _
  $region3: #{_lambda_.11} parent=0 // loop_header
    %s10 = sphi 0, %s14
    %p11 = scmp.ge.s32.totalorder %s10, 4
    %s20 = sphi 0, %s22
    %s23 = sphi 0, %s20
    %s24 = sphi 0, %s23
    %s40 = sphi 0, %s24
    %s44 = sphi 0, %s44
    %s46 = sphi 0, %s44
    %s47 = sphi 0, %s46
    %s61 = sphi 0, %s47
    %s65 = sphi 0, %s65
    %s67 = sphi 0, %s65
    %s68 = sphi 0, %s67
    %s82 = sphi 0, %s68
    %s86 = sphi 0, %s86
    %s88 = sphi 0, %s86
    %s89 = sphi 0, %s88
    %s103 = sphi 0, %s89
    %s109 = sphi 0, %s111
    %s112 = sphi 0, %s109
    %s113 = sphi 0, %s112
    %s129 = sphi 0, %s113
  $region4: #{_lambda_.11} parent=0 // loop_header_branch
    %13 = sbr.rel (%p11) target = $region8
  $region5: #{_lambda_.11} parent=0 // loop_body
    %s15 = ssub.s32 %s10, 1
    %s16 = ssub.s32 %s10, 2
    %s17 = sadd.s32 %s10, 1
    %s18 = ssub.s32 %s10, %s17
    %p19 = scmp.eq.s32.totalorder %s18, 0
    %s21 = sadd.s32 %s20, 1
    %s22 = scalar_select %p19, %s20, %s21
    %p25 = pneg %p19
    %p26 = scmp.eq.s32.totalorder %s10, 1
    %p27 = por %p25, %p26
    %p28 = scmp.ne.s32.totalorder %s20, %s23
    %p29 = scmp.eq.s32.totalorder %s10, 0
    %p30 = por %p28, %p29
    %p31 = scmp.ne.s32.totalorder %s20, %s23
    %p32 = scmp.eq.s32.totalorder %s15, 1
    %p33 = por %p31, %p32
    %p34 = scmp.ne.s32.totalorder %s23, %s24
    %p35 = scmp.eq.s32.totalorder %s15, 0
    %p36 = por %p34, %p35
    %p37 = scmp.ne.s32.totalorder %s23, %s24
    %p38 = scmp.eq.s32.totalorder %s16, 1
    %p39 = por %p37, %p38
    %p41 = scmp.ne.s32.totalorder %s24, %s40
    %p42 = scmp.eq.s32.totalorder %s16, 0
    %p43 = por %p41, %p42
    %s45 = sadd.s32 %s44, 1
    %p48 = scmp.eq.s32.totalorder %s10, 1
    %p49 = scmp.ne.s32.totalorder %s44, %s46
    %p50 = scmp.eq.s32.totalorder %s10, 0
    %p51 = por %p49, %p50
    %p52 = scmp.ne.s32.totalorder %s44, %s46
    %p53 = scmp.eq.s32.totalorder %s15, 1
    %p54 = por %p52, %p53
    %p55 = scmp.ne.s32.totalorder %s46, %s47
    %p56 = scmp.eq.s32.totalorder %s15, 0
    %p57 = por %p55, %p56
    %p58 = scmp.ne.s32.totalorder %s46, %s47
    %p59 = scmp.eq.s32.totalorder %s16, 1
    %p60 = por %p58, %p59
    %p62 = scmp.ne.s32.totalorder %s47, %s61
    %p63 = scmp.eq.s32.totalorder %s16, 0
    %p64 = por %p62, %p63
    %s66 = sadd.s32 %s65, 1
    %p69 = scmp.eq.s32.totalorder %s10, 1
    %p70 = scmp.ne.s32.totalorder %s65, %s67
    %p71 = scmp.eq.s32.totalorder %s10, 0
    %p72 = por %p70, %p71
    %p73 = scmp.ne.s32.totalorder %s65, %s67
    %p74 = scmp.eq.s32.totalorder %s15, 1
    %p75 = por %p73, %p74
    %p76 = scmp.ne.s32.totalorder %s67, %s68
    %p77 = scmp.eq.s32.totalorder %s15, 0
    %p78 = por %p76, %p77
    %p79 = scmp.ne.s32.totalorder %s67, %s68
    %p80 = scmp.eq.s32.totalorder %s16, 1
    %p81 = por %p79, %p80
    %p83 = scmp.ne.s32.totalorder %s68, %s82
    %p84 = scmp.eq.s32.totalorder %s16, 0
    %p85 = por %p83, %p84
    %s87 = sadd.s32 %s86, 1
    %p90 = scmp.eq.s32.totalorder %s10, 1
    %p91 = scmp.ne.s32.totalorder %s86, %s88
    %p92 = scmp.eq.s32.totalorder %s10, 0
    %p93 = por %p91, %p92
    %p94 = scmp.ne.s32.totalorder %s86, %s88
    %p95 = scmp.eq.s32.totalorder %s15, 1
    %p96 = por %p94, %p95
    %p97 = scmp.ne.s32.totalorder %s88, %s89
    %p98 = scmp.eq.s32.totalorder %s15, 0
    %p99 = por %p97, %p98
    %p100 = scmp.ne.s32.totalorder %s88, %s89
    %p101 = scmp.eq.s32.totalorder %s16, 1
    %p102 = por %p100, %p101
    %p104 = scmp.ne.s32.totalorder %s89, %s103
    %p105 = scmp.eq.s32.totalorder %s16, 0
    %p106 = por %p104, %p105
    %s107 = ssub.s32 %s10, %s17
    %p108 = scmp.eq.s32.totalorder %s107, 0
    %s110 = sadd.s32 %s109, 1
    %s111 = scalar_select %p108, %s109, %s110
    %p114 = pneg %p108
    %p115 = scmp.eq.s32.totalorder %s10, 1
    %p116 = por %p114, %p115
    %p117 = scmp.ne.s32.totalorder %s109, %s112
    %p118 = scmp.eq.s32.totalorder %s10, 0
    %p119 = por %p117, %p118
    %p120 = scmp.ne.s32.totalorder %s109, %s112
    %p121 = scmp.eq.s32.totalorder %s15, 1
    %p122 = por %p120, %p121
    %p123 = scmp.ne.s32.totalorder %s112, %s113
    %p124 = scmp.eq.s32.totalorder %s15, 0
    %p125 = por %p123, %p124
    %p126 = scmp.ne.s32.totalorder %s112, %s113
    %p127 = scmp.eq.s32.totalorder %s16, 1
    %p128 = por %p126, %p127
    %p130 = scmp.ne.s32.totalorder %s113, %s129
    %p131 = scmp.eq.s32.totalorder %s16, 0
    %p132 = por %p130, %p131
    %p133 = scmp.le.s32.totalorder 1, %s10
    %p134 = scmp.lt.s32.totalorder %s10, 3
    %p135 = pnand %p133, %p134
    %p136 = pneg %p135
    // Predicated region
    $region9: #{_lambda_.11} parent=5 // pred_check
      _
    $region10: #{_lambda_.11} parent=5 // pred_check_branch
      %138 = sbr.rel (%p135) target = $region12
    $region11: #{_lambda_.11} parent=5 // pred_region
      %s139 = ssub.s32 %s10, 1
      // Predicated region
      $region13: #{_lambda_.11} parent=11 // pred_check
        %p140 = pneg %p57
      $region14: #{_lambda_.11} parent=11 // pred_check_branch
        %142 = sbr.rel (%p140) target = $region16
      $region15: #{_lambda_.11} parent=11 // pred_region
        _
      $region16: #{_lambda_.11} parent=11 // pred_fallthru
        _
      // Predicated region
      $region17: #{_lambda_.11} parent=11 // pred_check
        %p143 = pneg %p78
      $region18: #{_lambda_.11} parent=11 // pred_check_branch
        %145 = sbr.rel (%p143) target = $region20
      $region19: #{_lambda_.11} parent=11 // pred_region
        _
      $region20: #{_lambda_.11} parent=11 // pred_fallthru
        _
      // Predicated region
      $region21: #{_lambda_.11} parent=11 // pred_check
        %p146 = pneg %p99
      $region22: #{_lambda_.11} parent=11 // pred_check_branch
        %148 = sbr.rel (%p146) target = $region24
      $region23: #{_lambda_.11} parent=11 // pred_region
        _
      $region24: #{_lambda_.11} parent=11 // pred_fallthru
        _
    $region12: #{_lambda_.11} parent=5 // pred_fallthru
      _
    %p149 = scmp.lt.s32.totalorder %s10, 2
    // Predicated region
    $region25: #{_lambda_.11} parent=5 // pred_check
      %p150 = pneg %p149
    $region26: #{_lambda_.11} parent=5 // pred_check_branch
      %152 = sbr.rel (%p150) target = $region28
    $region27: #{_lambda_.11} parent=5 // pred_region
      // Predicated region
      $region29: #{_lambda_.11} parent=27 // pred_check
        %p153 = pneg %p30
      $region30: #{_lambda_.11} parent=27 // pred_check_branch
        %155 = sbr.rel (%p153) target = $region32
      $region31: #{_lambda_.11} parent=27 // pred_region
        %s156 = smul.u32 8, %s10
        %p157 = scmp.lt.s32.totalorder %s156, 15
        %s158 = scalar_select %p157, %s156, 15
        %s159 = smul.addr %s158, 4
        %s160 = scalar_lea.vmem %s0, %s159
        %s161 = smul.u32 8, %s10
      $region32: #{_lambda_.11} parent=27 // pred_fallthru
        _
    $region28: #{_lambda_.11} parent=5 // pred_fallthru
      _
    %p162 = scmp.le.s32.totalorder 1, %s10
    %p163 = scmp.lt.s32.totalorder %s10, 3
    %p164 = pnand %p162, %p163
    %p165 = pneg %p164
    // Predicated region
    $region33: #{_lambda_.11} parent=5 // pred_check
      _
    $region34: #{_lambda_.11} parent=5 // pred_check_branch
      %167 = sbr.rel (%p164) target = $region36
    $region35: #{_lambda_.11} parent=5 // pred_region
      %s168 = ssub.s32 %s10, 1
      %s169 = smul.u32 8, %s15
      %p170 = scmp.lt.s32.totalorder %s169, 15
      %s171 = scalar_select %p170, %s169, 15
      %s172 = smul.addr %s171, 4
      %s173 = scalar_lea.vmem %s0, %s172
      %p174 = pneg %p36
      %p175 = pneg %p33
      %p176 = pneg %p57
      %p177 = pneg %p54
      %p178 = pneg %p78
      %p179 = pneg %p75
      %p180 = pneg %p99
      %p181 = pneg %p96
      %p182 = pneg %p125
      %p183 = pneg %p122
      %s184 = smul.u32 8, %s15
      %p185 = scmp.lt.s32.totalorder %s184, 15
      %s186 = scalar_select %p185, %s184, 15
      %s187 = smul.addr %s186, 8
      %s188 = scalar_lea.vmem %s4, %s187
      %s189 = smul.u32 8, %s15
      %p190 = scmp.lt.s32.totalorder %s189, 15
      %s191 = scalar_select %p190, %s189, 15
      %s192 = smul.addr %s191, 4
      %s193 = scalar_lea.vmem %s0, %s192
      %s194 = smul.u32 8, %s15
      %s195 = smul.u32 8, %s15
      %p196 = scmp.lt.s32.totalorder %s195, 15
      %s197 = scalar_select %p196, %s195, 15
      %s198 = smul.addr %s197, 8
      %s199 = scalar_lea.vmem %s4, %s198
      %s200 = smul.u32 8, %s15
      %v202 = vld [vmem:[%s193] sm:$0xf]
      %v203 = vld [vmem:[%s193 + $0x4] sm:$0xf]
      %v204 = vld [vmem:[%s193 + $0x8] sm:$0xf]
      %v205 = vld [vmem:[%s193 + $0xc] sm:$0xf]
      %v206 = vld [vmem:[%s193 + $0x10] sm:$0xf]
      %v207 = vld [vmem:[%s193 + $0x14] sm:$0xf]
      %v208 = vld [vmem:[%s193 + $0x18] sm:$0xf]
      %v209 = vld [vmem:[%s193 + $0x1c] sm:$0xf]
      %v210 = vld [vmem:[%s1] sm:$0xf]
      %v211 = vld [vmem:[%s1 + $0x4] sm:$0xf]
      %v212 = vld [vmem:[%s1 + $0x8] sm:$0xf]
      %v213 = vld [vmem:[%s1 + $0xc] sm:$0xf]
      %v214 = vld [vmem:[%s1 + $0x10] sm:$0xf]
      %v215 = vld [vmem:[%s1 + $0x14] sm:$0xf]
      %v216 = vld [vmem:[%s1 + $0x18] sm:$0xf]
      %v217 = vld [vmem:[%s1 + $0x1c] sm:$0xf]
      %v218 = vld [vmem:[%s1 + $0x20] sm:$0xf]
      %v227 = vunpack.c.l.b16 %v202
      %v228 = vunpack.c.l.b16 %v203
      %v229 = vunpack.c.l.b16 %v204
      %v230 = vunpack.c.l.b16 %v205
      %v231 = vunpack.c.l.b16 %v206
      %v232 = vunpack.c.l.b16 %v207
      %v233 = vunpack.c.l.b16 %v208
      %v234 = vunpack.c.l.b16 %v209
      %v235 = vpack.c.b16 %v228, %v227
      %v236 = vpack.c.b16 %v230, %v229
      %v237 = vpack.c.b16 %v232, %v231
      %v238 = vpack.c.b16 %v234, %v233
      %v248 = vunpack.c.l.b16 %v210
      %v249 = vunpack.c.l.b16 %v211
      %v250 = vunpack.c.l.b16 %v212
      %v251 = vunpack.c.l.b16 %v213
      %v252 = vunpack.c.l.b16 %v214
      %v253 = vunpack.c.l.b16 %v215
      %v254 = vunpack.c.l.b16 %v216
      %v255 = vunpack.c.l.b16 %v217
      %v256 = vunpack.c.l.b16 %v218
      %v257 = vpack.c.b16 %v249, %v248
      %v258 = vpack.c.b16 %v251, %v250
      %v259 = vpack.c.b16 %v253, %v252
      %v260 = vpack.c.b16 %v255, %v254
      %v261 = vpack.c.b16 %v256, %v256
      %vm266 = vcmask 588800
      %v268 = vsel %vm266, %v235, 0
      %v271 = vsel %vm266, %v236, 0
      %v274 = vsel %vm266, %v237, 0
      %v277 = vsel %vm266, %v238, 0
      %vm279 = vcmask 1043456
      %v281 = vsel %vm279, %v261, 0
      %283 = vmatprep.subr.bf16.mxu0 0
      %284 = vmatpush1.bf16.msra.mxu0 0
      %285 = vmatprep.subr.bf16.mxu0 0
      %286 = vmatpush1.bf16.msra.mxu0 0
      %287 = vmatprep.subr.bf16.mxu0 0
      %288 = vmatpush1.bf16.msra.mxu0 0
      %289 = vmatprep.subr.bf16.mxu0 0
      %290 = vmatpush1.bf16.msra.mxu0 %v281
      %291 = vmatprep.subr.bf16.mxu0 0
      %292 = vmatpush1.bf16.msra.mxu0 %v260
      %293 = vmatprep.subr.bf16.mxu0 0
      %294 = vmatpush1.bf16.msra.mxu0 %v259
      %295 = vmatprep.subr.bf16.mxu0 0
      %296 = vmatpush1.bf16.msra.mxu0 %v258
      %297 = vmatprep.subr.bf16.mxu0 0
      %298 = vmatpush1.bf16.msra.mxu0 %v257
      %299 = vmatprep.subr.bf16.mxu0 0
      %300 = vmatpush2.bf16.msra.mxu0 0
      %301 = vmatprep.subr.bf16.mxu0 0
      %302 = vmatpush2.bf16.msra.mxu0 0
      %303 = vmatprep.subr.bf16.mxu0 0
      %304 = vmatpush2.bf16.msra.mxu0 0
      %305 = vmatprep.subr.bf16.mxu0 0
      %306 = vmatpush2.bf16.msra.mxu0 0
      %307 = vmatprep.subr.bf16.mxu0 0
      %308 = vmatpush2.bf16.msra.mxu0 0
      %309 = vmatprep.subr.bf16.mxu0 0
      %310 = vmatpush2.bf16.msra.mxu0 0
      %311 = vmatprep.subr.bf16.mxu0 0
      %312 = vmatpush2.bf16.msra.mxu0 0
      %313 = vmatprep.subr.bf16.mxu0 0
      %314 = vmatpush2.bf16.msra.mxu0 0
      %315 = vmatprep.mubr.bf16.mxu0 0
      %316 = vmatmul.mubr.bf16.gmra.mxu0 %v268
      %v317 = vpop.f32.mrf.mxu0
      %v318 = vadd.f32 0.0, %v317
      %v319 = vpop.f32.mrf.mxu0
      %v320 = vpop.f32.mrf.mxu0
      %v321 = vadd.f32 0.0, %v320
      %v322 = vpop.f32.mrf.mxu0
      %323 = vmatprep.mubr.bf16.mxu0 0
      %324 = vmatmul.mubr.bf16.gmra.mxu0 %v271
      %v325 = vpop.f32.mrf.mxu0
      %v326 = vadd.f32 0.0, %v325
      %v327 = vpop.f32.mrf.mxu0
      %v328 = vpop.f32.mrf.mxu0
      %v329 = vadd.f32 0.0, %v328
      %v330 = vpop.f32.mrf.mxu0
      %331 = vmatprep.mubr.bf16.mxu0 0
      %332 = vmatmul.mubr.bf16.gmra.mxu0 %v274
      %v333 = vpop.f32.mrf.mxu0
      %v334 = vadd.f32 0.0, %v333
      %v335 = vpop.f32.mrf.mxu0
      %v336 = vpop.f32.mrf.mxu0
      %v337 = vadd.f32 0.0, %v336
      %v338 = vpop.f32.mrf.mxu0
      %339 = vmatprep.mubr.bf16.mxu0 0
      %340 = vmatmul.mubr.bf16.gmra.mxu0 %v277
      %v341 = vpop.f32.mrf.mxu0
      %v342 = vadd.f32 0.0, %v341
      %v343 = vpop.f32.mrf.mxu0
      %v344 = vpop.f32.mrf.mxu0
      %v345 = vadd.f32 0.0, %v344
      %v346 = vpop.f32.mrf.mxu0
      %347 = vdwg.mxu0
      %v348 = vld [vmem:[%s2] sm:$0x1]
      %v350 = vlaneseq
      %v351 = vshrl.u32 %v350, 7
      %v352 = vsub.s32 0, %v351
      %v353 = vrot.slane %v348, %v352
      %v355 = vmul.f32 %v318, %v353
      %v356 = vmul.f32 %v321, %v353
      %v357 = vmul.f32 %v326, %v353
      %v358 = vmul.f32 %v329, %v353
      %v359 = vmul.f32 %v334, %v353
      %v360 = vmul.f32 %v337, %v353
      %v361 = vmul.f32 %v342, %v353
      %v362 = vmul.f32 %v345, %v353
      %v363 = vld [vmem:[%s3] sm:$0x1]
      %v365 = vlaneseq
      %v366 = vshrl.u32 %v365, 7
      %v367 = vsub.s32 0, %v366
      %v368 = vrot.slane %v363, %v367
      %v370 = vadd.f32 %v355, %v368
      %v371 = vadd.f32 %v356, %v368
      %v372 = vadd.f32 %v357, %v368
      %v373 = vadd.f32 %v358, %v368
      %v374 = vadd.f32 %v359, %v368
      %v375 = vadd.f32 %v360, %v368
      %v376 = vadd.f32 %v361, %v368
      %v377 = vadd.f32 %v362, %v368
      %vm378 = vcmp.gt.f32.partialorder %v370, 0.0
      %vm379 = vcmp.gt.f32.partialorder %v371, 0.0
      %vm380 = vcmp.gt.f32.partialorder %v372, 0.0
      %vm381 = vcmp.gt.f32.partialorder %v373, 0.0
      %vm382 = vcmp.gt.f32.partialorder %v374, 0.0
      %vm383 = vcmp.gt.f32.partialorder %v375, 0.0
      %vm384 = vcmp.gt.f32.partialorder %v376, 0.0
      %vm385 = vcmp.gt.f32.partialorder %v377, 0.0
      %v386 = vmul.f32 %v370, 0.1
      %v387 = vmul.f32 %v371, 0.1
      %v388 = vmul.f32 %v372, 0.1
      %v389 = vmul.f32 %v373, 0.1
      %v390 = vmul.f32 %v374, 0.1
      %v391 = vmul.f32 %v375, 0.1
      %v392 = vmul.f32 %v376, 0.1
      %v393 = vmul.f32 %v377, 0.1
      %v394 = vsel %vm378, %v370, %v386
      %v395 = vsel %vm379, %v371, %v387
      %v396 = vsel %vm380, %v372, %v388
      %v397 = vsel %vm381, %v373, %v389
      %v398 = vsel %vm382, %v374, %v390
      %v399 = vsel %vm383, %v375, %v391
      %v400 = vsel %vm384, %v376, %v392
      %v401 = vsel %vm385, %v377, %v393
      %vm402 = vcmask 130048
      %403 = vst.msk [vmem:[%s199] sm:$0xff] %vm402, %v394
      %404 = vst.msk [vmem:[%s199 + $0x8] sm:$0xff] %vm402, %v395
      %405 = vst.msk [vmem:[%s199 + $0x10] sm:$0xff] %vm402, %v396
      %406 = vst.msk [vmem:[%s199 + $0x18] sm:$0xff] %vm402, %v397
      %407 = vst.msk [vmem:[%s199 + $0x20] sm:$0xff] %vm402, %v398
      %408 = vst.msk [vmem:[%s199 + $0x28] sm:$0xff] %vm402, %v399
      %409 = vst.msk [vmem:[%s199 + $0x30] sm:$0xff] %vm402, %v400
      %410 = vst.msk [vmem:[%s199 + $0x38] sm:$0xff] %vm402, %v401
      %s411 = smul.u32 8, %s15
      %p412 = scmp.lt.s32.totalorder %s411, 15
      %s413 = scalar_select %p412, %s411, 15
      %s414 = smul.addr %s413, 8
      %s415 = scalar_lea.vmem %s4, %s414
      // Predicated region
      $region37: #{_lambda_.11} parent=35 // pred_check
        %p416 = pneg %p122
      $region38: #{_lambda_.11} parent=35 // pred_check_branch
        %418 = sbr.rel (%p416) target = $region40
      $region39: #{_lambda_.11} parent=35 // pred_region
        %s419 = smul.u32 8, %s15
      $region40: #{_lambda_.11} parent=35 // pred_fallthru
        _
    $region36: #{_lambda_.11} parent=5 // pred_fallthru
      _
    %p420 = scmp.le.s32.totalorder 2, %s10
    // Predicated region
    $region41: #{_lambda_.11} parent=5 // pred_check
      %p421 = pneg %p420
    $region42: #{_lambda_.11} parent=5 // pred_check_branch
      %423 = sbr.rel (%p421) target = $region44
    $region43: #{_lambda_.11} parent=5 // pred_region
      %s424 = ssub.s32 %s10, 2
      // Predicated region
      $region45: #{_lambda_.11} parent=43 // pred_check
        %p425 = pneg %p128
      $region46: #{_lambda_.11} parent=43 // pred_check_branch
        %427 = sbr.rel (%p425) target = $region48
      $region47: #{_lambda_.11} parent=43 // pred_region
        %s428 = smul.u32 8, %s16
        %p429 = scmp.lt.s32.totalorder %s428, 15
        %s430 = scalar_select %p429, %s428, 15
        %s431 = smul.addr %s430, 8
        %s432 = scalar_lea.vmem %s4, %s431
      $region48: #{_lambda_.11} parent=43 // pred_fallthru
        _
    $region44: #{_lambda_.11} parent=5 // pred_fallthru
      _
  $region6: #{_lambda_.11} parent=0 // loop_footer
    %s14 = sadd.s32 1, %s10
  $region7: #{_lambda_.11} parent=0 // loop_footer_branch
    %9 = sbr.rel target = $region3
  $region8: #{_lambda_.11} parent=0 // loop_exit
    _

// kernel: _lambda_.13
$region0: #{_lambda_.13}
  #allocation0 [shape = 'u32[]', space=smem, size = 0x4, offset = 0x4, fixed_abs, tag = 'smem constant byte address 0x4 - core index']
  #allocation1 [shape = 'u32[144,128]{1,0:T(1,128)}', space=vmem, size = 0x12000, scoped, tag = 'internal scratch']
  %s0 = inlined_call_operand.vmem [shape: bf16[128,72], index: 0, kind: input, shape index: {}]
  %s1 = inlined_call_operand.vmem [shape: bf16[72,16], index: 1, kind: input, shape index: {}]
  %s2 = inlined_call_operand.vmem [shape: f32[1,16], index: 2, kind: input, shape index: {}]
  %s3 = inlined_call_operand.vmem [shape: f32[1,16], index: 3, kind: input, shape index: {}]
  %s4 = inlined_call_operand.vmem [shape: f32[128,16], index: 4, kind: input, shape index: {}]
  %s5 = inlined_call_operand.vmem [shape: f32[128,16], index: 5, kind: output, shape index: {}]
  %s6 = sld [smem:[#allocation0]]
  $region53: #{_lambda_.13} parent=0
    _
  %s8 = ssub.s32 1, %s6
  %s9 = scalar_select 0, %s8, %s6
  loop: start=0, step=1, limit=4
  $region2: #{_lambda_.13} parent=0 // loop_pre_header
    _
  $region3: #{_lambda_.13} parent=0 // loop_header
    %s11 = sphi 0, %s15
    %p12 = scmp.ge.s32.totalorder %s11, 4
    %s21 = sphi 0, %s23
    %s24 = sphi 0, %s21
    %s25 = sphi 0, %s24
    %s41 = sphi 0, %s25
    %s45 = sphi 0, %s45
    %s47 = sphi 0, %s45
    %s48 = sphi 0, %s47
    %s62 = sphi 0, %s48
    %s66 = sphi 0, %s66
    %s68 = sphi 0, %s66
    %s69 = sphi 0, %s68
    %s83 = sphi 0, %s69
    %s87 = sphi 0, %s87
    %s89 = sphi 0, %s87
    %s90 = sphi 0, %s89
    %s104 = sphi 0, %s90
    %s110 = sphi 0, %s112
    %s113 = sphi 0, %s110
    %s114 = sphi 0, %s113
    %s130 = sphi 0, %s114
    %s136 = sphi 0, %s138
    %s139 = sphi 0, %s136
    %s140 = sphi 0, %s139
    %s156 = sphi 0, %s140
  $region4: #{_lambda_.13} parent=0 // loop_header_branch
    %14 = sbr.rel (%p12) target = $region8
  $region5: #{_lambda_.13} parent=0 // loop_body
    %s16 = ssub.s32 %s11, 1
    %s17 = ssub.s32 %s11, 2
    %s18 = sadd.s32 %s11, 1
    %s19 = ssub.s32 %s11, %s18
    %p20 = scmp.eq.s32.totalorder %s19, 0
    %s22 = sadd.s32 %s21, 1
    %s23 = scalar_select %p20, %s21, %s22
    %p26 = pneg %p20
    %p27 = scmp.eq.s32.totalorder %s11, 1
    %p28 = por %p26, %p27
    %p29 = scmp.ne.s32.totalorder %s21, %s24
    %p30 = scmp.eq.s32.totalorder %s11, 0
    %p31 = por %p29, %p30
    %p32 = scmp.ne.s32.totalorder %s21, %s24
    %p33 = scmp.eq.s32.totalorder %s16, 1
    %p34 = por %p32, %p33
    %p35 = scmp.ne.s32.totalorder %s24, %s25
    %p36 = scmp.eq.s32.totalorder %s16, 0
    %p37 = por %p35, %p36
    %p38 = scmp.ne.s32.totalorder %s24, %s25
    %p39 = scmp.eq.s32.totalorder %s17, 1
    %p40 = por %p38, %p39
    %p42 = scmp.ne.s32.totalorder %s25, %s41
    %p43 = scmp.eq.s32.totalorder %s17, 0
    %p44 = por %p42, %p43
    %s46 = sadd.s32 %s45, 1
    %p49 = scmp.eq.s32.totalorder %s11, 1
    %p50 = scmp.ne.s32.totalorder %s45, %s47
    %p51 = scmp.eq.s32.totalorder %s11, 0
    %p52 = por %p50, %p51
    %p53 = scmp.ne.s32.totalorder %s45, %s47
    %p54 = scmp.eq.s32.totalorder %s16, 1
    %p55 = por %p53, %p54
    %p56 = scmp.ne.s32.totalorder %s47, %s48
    %p57 = scmp.eq.s32.totalorder %s16, 0
    %p58 = por %p56, %p57
    %p59 = scmp.ne.s32.totalorder %s47, %s48
    %p60 = scmp.eq.s32.totalorder %s17, 1
    %p61 = por %p59, %p60
    %p63 = scmp.ne.s32.totalorder %s48, %s62
    %p64 = scmp.eq.s32.totalorder %s17, 0
    %p65 = por %p63, %p64
    %s67 = sadd.s32 %s66, 1
    %p70 = scmp.eq.s32.totalorder %s11, 1
    %p71 = scmp.ne.s32.totalorder %s66, %s68
    %p72 = scmp.eq.s32.totalorder %s11, 0
    %p73 = por %p71, %p72
    %p74 = scmp.ne.s32.totalorder %s66, %s68
    %p75 = scmp.eq.s32.totalorder %s16, 1
    %p76 = por %p74, %p75
    %p77 = scmp.ne.s32.totalorder %s68, %s69
    %p78 = scmp.eq.s32.totalorder %s16, 0
    %p79 = por %p77, %p78
    %p80 = scmp.ne.s32.totalorder %s68, %s69
    %p81 = scmp.eq.s32.totalorder %s17, 1
    %p82 = por %p80, %p81
    %p84 = scmp.ne.s32.totalorder %s69, %s83
    %p85 = scmp.eq.s32.totalorder %s17, 0
    %p86 = por %p84, %p85
    %s88 = sadd.s32 %s87, 1
    %p91 = scmp.eq.s32.totalorder %s11, 1
    %p92 = scmp.ne.s32.totalorder %s87, %s89
    %p93 = scmp.eq.s32.totalorder %s11, 0
    %p94 = por %p92, %p93
    %p95 = scmp.ne.s32.totalorder %s87, %s89
    %p96 = scmp.eq.s32.totalorder %s16, 1
    %p97 = por %p95, %p96
    %p98 = scmp.ne.s32.totalorder %s89, %s90
    %p99 = scmp.eq.s32.totalorder %s16, 0
    %p100 = por %p98, %p99
    %p101 = scmp.ne.s32.totalorder %s89, %s90
    %p102 = scmp.eq.s32.totalorder %s17, 1
    %p103 = por %p101, %p102
    %p105 = scmp.ne.s32.totalorder %s90, %s104
    %p106 = scmp.eq.s32.totalorder %s17, 0
    %p107 = por %p105, %p106
    %s108 = ssub.s32 %s11, %s18
    %p109 = scmp.eq.s32.totalorder %s108, 0
    %s111 = sadd.s32 %s110, 1
    %s112 = scalar_select %p109, %s110, %s111
    %p115 = pneg %p109
    %p116 = scmp.eq.s32.totalorder %s11, 1
    %p117 = por %p115, %p116
    %p118 = scmp.ne.s32.totalorder %s110, %s113
    %p119 = scmp.eq.s32.totalorder %s11, 0
    %p120 = por %p118, %p119
    %p121 = scmp.ne.s32.totalorder %s110, %s113
    %p122 = scmp.eq.s32.totalorder %s16, 1
    %p123 = por %p121, %p122
    %p124 = scmp.ne.s32.totalorder %s113, %s114
    %p125 = scmp.eq.s32.totalorder %s16, 0
    %p126 = por %p124, %p125
    %p127 = scmp.ne.s32.totalorder %s113, %s114
    %p128 = scmp.eq.s32.totalorder %s17, 1
    %p129 = por %p127, %p128
    %p131 = scmp.ne.s32.totalorder %s114, %s130
    %p132 = scmp.eq.s32.totalorder %s17, 0
    %p133 = por %p131, %p132
    %s134 = ssub.s32 %s11, %s18
    %p135 = scmp.eq.s32.totalorder %s134, 0
    %s137 = sadd.s32 %s136, 1
    %s138 = scalar_select %p135, %s136, %s137
    %p141 = pneg %p135
    %p142 = scmp.eq.s32.totalorder %s11, 1
    %p143 = por %p141, %p142
    %p144 = scmp.ne.s32.totalorder %s136, %s139
    %p145 = scmp.eq.s32.totalorder %s11, 0
    %p146 = por %p144, %p145
    %p147 = scmp.ne.s32.totalorder %s136, %s139
    %p148 = scmp.eq.s32.totalorder %s16, 1
    %p149 = por %p147, %p148
    %p150 = scmp.ne.s32.totalorder %s139, %s140
    %p151 = scmp.eq.s32.totalorder %s16, 0
    %p152 = por %p150, %p151
    %p153 = scmp.ne.s32.totalorder %s139, %s140
    %p154 = scmp.eq.s32.totalorder %s17, 1
    %p155 = por %p153, %p154
    %p157 = scmp.ne.s32.totalorder %s140, %s156
    %p158 = scmp.eq.s32.totalorder %s17, 0
    %p159 = por %p157, %p158
    %p160 = scmp.le.s32.totalorder 1, %s11
    %p161 = scmp.lt.s32.totalorder %s11, 3
    %p162 = pnand %p160, %p161
    %p163 = pneg %p162
    // Predicated region
    $region9: #{_lambda_.13} parent=5 // pred_check
      _
    $region10: #{_lambda_.13} parent=5 // pred_check_branch
      %165 = sbr.rel (%p162) target = $region12
    $region11: #{_lambda_.13} parent=5 // pred_region
      %s166 = ssub.s32 %s11, 1
      // Predicated region
      $region13: #{_lambda_.13} parent=11 // pred_check
        %p167 = pneg %p58
      $region14: #{_lambda_.13} parent=11 // pred_check_branch
        %169 = sbr.rel (%p167) target = $region16
      $region15: #{_lambda_.13} parent=11 // pred_region
        _
      $region16: #{_lambda_.13} parent=11 // pred_fallthru
        _
      // Predicated region
      $region17: #{_lambda_.13} parent=11 // pred_check
        %p170 = pneg %p79
      $region18: #{_lambda_.13} parent=11 // pred_check_branch
        %172 = sbr.rel (%p170) target = $region20
      $region19: #{_lambda_.13} parent=11 // pred_region
        _
      $region20: #{_lambda_.13} parent=11 // pred_fallthru
        _
      // Predicated region
      $region21: #{_lambda_.13} parent=11 // pred_check
        %p173 = pneg %p100
      $region22: #{_lambda_.13} parent=11 // pred_check_branch
        %175 = sbr.rel (%p173) target = $region24
      $region23: #{_lambda_.13} parent=11 // pred_region
        _
      $region24: #{_lambda_.13} parent=11 // pred_fallthru
        _
    $region12: #{_lambda_.13} parent=5 // pred_fallthru
      _
    %p176 = scmp.lt.s32.totalorder %s11, 2
    // Predicated region
    $region25: #{_lambda_.13} parent=5 // pred_check
      %p177 = pneg %p176
    $region26: #{_lambda_.13} parent=5 // pred_check_branch
      %179 = sbr.rel (%p177) target = $region28
    $region27: #{_lambda_.13} parent=5 // pred_region
      // Predicated region
      $region29: #{_lambda_.13} parent=27 // pred_check
        %p180 = pneg %p31
      $region30: #{_lambda_.13} parent=27 // pred_check_branch
        %182 = sbr.rel (%p180) target = $region32
      $region31: #{_lambda_.13} parent=27 // pred_region
        %s183 = smul.u32 8, %s11
        %p184 = scmp.lt.s32.totalorder %s183, 15
        %s185 = scalar_select %p184, %s183, 15
        %s186 = smul.addr %s185, 4
        %s187 = scalar_lea.vmem %s0, %s186
        %s188 = smul.u32 8, %s11
      $region32: #{_lambda_.13} parent=27 // pred_fallthru
        _
      // Predicated region
      $region33: #{_lambda_.13} parent=27 // pred_check
        %p189 = pneg %p120
      $region34: #{_lambda_.13} parent=27 // pred_check_branch
        %191 = sbr.rel (%p189) target = $region36
      $region35: #{_lambda_.13} parent=27 // pred_region
        %s192 = smul.u32 8, %s11
        %p193 = scmp.lt.s32.totalorder %s192, 15
        %s194 = scalar_select %p193, %s192, 15
        %s195 = smul.addr %s194, 8
        %s196 = scalar_lea.vmem %s4, %s195
        %s197 = smul.u32 8, %s11
      $region36: #{_lambda_.13} parent=27 // pred_fallthru
        _
    $region28: #{_lambda_.13} parent=5 // pred_fallthru
      _
    %p198 = scmp.le.s32.totalorder 1, %s11
    %p199 = scmp.lt.s32.totalorder %s11, 3
    %p200 = pnand %p198, %p199
    %p201 = pneg %p200
    // Predicated region
    $region37: #{_lambda_.13} parent=5 // pred_check
      _
    $region38: #{_lambda_.13} parent=5 // pred_check_branch
      %203 = sbr.rel (%p200) target = $region40
    $region39: #{_lambda_.13} parent=5 // pred_region
      %s204 = ssub.s32 %s11, 1
      %s205 = smul.u32 8, %s16
      %p206 = scmp.lt.s32.totalorder %s205, 15
      %s207 = scalar_select %p206, %s205, 15
      %s208 = smul.addr %s207, 4
      %s209 = scalar_lea.vmem %s0, %s208
      %p210 = pneg %p37
      %p211 = pneg %p34
      %p212 = pneg %p58
      %p213 = pneg %p55
      %p214 = pneg %p79
      %p215 = pneg %p76
      %p216 = pneg %p100
      %p217 = pneg %p97
      %s218 = smul.u32 8, %s16
      %p219 = scmp.lt.s32.totalorder %s218, 15
      %s220 = scalar_select %p219, %s218, 15
      %s221 = smul.addr %s220, 8
      %s222 = scalar_lea.vmem %s4, %s221
      %p223 = pneg %p126
      %p224 = pneg %p123
      %p225 = pneg %p152
      %p226 = pneg %p149
      %s227 = smul.u32 8, %s16
      %p228 = scmp.lt.s32.totalorder %s227, 15
      %s229 = scalar_select %p228, %s227, 15
      %s230 = smul.addr %s229, 8
      %s231 = scalar_lea.vmem %s5, %s230
      %s232 = smul.u32 8, %s16
      %p233 = scmp.lt.s32.totalorder %s232, 15
      %s234 = scalar_select %p233, %s232, 15
      %s235 = smul.addr %s234, 4
      %s236 = scalar_lea.vmem %s0, %s235
      %s237 = smul.u32 8, %s16
      %s238 = smul.u32 8, %s16
      %p239 = scmp.lt.s32.totalorder %s238, 15
      %s240 = scalar_select %p239, %s238, 15
      %s241 = smul.addr %s240, 8
      %s242 = scalar_lea.vmem %s4, %s241
      %s243 = smul.u32 8, %s16
      %s244 = smul.u32 8, %s16
      %p245 = scmp.lt.s32.totalorder %s244, 15
      %s246 = scalar_select %p245, %s244, 15
      %s247 = smul.addr %s246, 8
      %s248 = scalar_lea.vmem %s5, %s247
      %s249 = smul.u32 8, %s16
      %v251 = vld [vmem:[%s236] sm:$0xf]
      %v252 = vld [vmem:[%s236 + $0x4] sm:$0xf]
      %v253 = vld [vmem:[%s236 + $0x8] sm:$0xf]
      %v254 = vld [vmem:[%s236 + $0xc] sm:$0xf]
      %v255 = vld [vmem:[%s236 + $0x10] sm:$0xf]
      %v256 = vld [vmem:[%s236 + $0x14] sm:$0xf]
      %v257 = vld [vmem:[%s236 + $0x18] sm:$0xf]
      %v258 = vld [vmem:[%s236 + $0x1c] sm:$0xf]
      %v259 = vld [vmem:[%s1] sm:$0xf]
      %v260 = vld [vmem:[%s1 + $0x4] sm:$0xf]
      %v261 = vld [vmem:[%s1 + $0x8] sm:$0xf]
      %v262 = vld [vmem:[%s1 + $0xc] sm:$0xf]
      %v263 = vld [vmem:[%s1 + $0x10] sm:$0xf]
      %v264 = vld [vmem:[%s1 + $0x14] sm:$0xf]
      %v265 = vld [vmem:[%s1 + $0x18] sm:$0xf]
      %v266 = vld [vmem:[%s1 + $0x1c] sm:$0xf]
      %v267 = vld [vmem:[%s1 + $0x20] sm:$0xf]
      %v276 = vunpack.c.l.b16 %v251
      %v277 = vunpack.c.l.b16 %v252
      %v278 = vunpack.c.l.b16 %v253
      %v279 = vunpack.c.l.b16 %v254
      %v280 = vunpack.c.l.b16 %v255
      %v281 = vunpack.c.l.b16 %v256
      %v282 = vunpack.c.l.b16 %v257
      %v283 = vunpack.c.l.b16 %v258
      %v284 = vpack.c.b16 %v277, %v276
      %v285 = vpack.c.b16 %v279, %v278
      %v286 = vpack.c.b16 %v281, %v280
      %v287 = vpack.c.b16 %v283, %v282
      %v297 = vunpack.c.l.b16 %v259
      %v298 = vunpack.c.l.b16 %v260
      %v299 = vunpack.c.l.b16 %v261
      %v300 = vunpack.c.l.b16 %v262
      %v301 = vunpack.c.l.b16 %v263
      %v302 = vunpack.c.l.b16 %v264
      %v303 = vunpack.c.l.b16 %v265
      %v304 = vunpack.c.l.b16 %v266
      %v305 = vunpack.c.l.b16 %v267
      %v306 = vpack.c.b16 %v298, %v297
      %v307 = vpack.c.b16 %v300, %v299
      %v308 = vpack.c.b16 %v302, %v301
      %v309 = vpack.c.b16 %v304, %v303
      %v310 = vpack.c.b16 %v305, %v305
      %vm315 = vcmask 588800
      %v317 = vsel %vm315, %v284, 0
      %v320 = vsel %vm315, %v285, 0
      %v323 = vsel %vm315, %v286, 0
      %v326 = vsel %vm315, %v287, 0
      %vm328 = vcmask 1043456
      %v330 = vsel %vm328, %v310, 0
      %332 = vmatprep.subr.bf16.mxu0 0
      %333 = vmatpush1.bf16.msra.mxu0 0
      %334 = vmatprep.subr.bf16.mxu0 0
      %335 = vmatpush1.bf16.msra.mxu0 0
      %336 = vmatprep.subr.bf16.mxu0 0
      %337 = vmatpush1.bf16.msra.mxu0 0
      %338 = vmatprep.subr.bf16.mxu0 0
      %339 = vmatpush1.bf16.msra.mxu0 %v330
      %340 = vmatprep.subr.bf16.mxu0 0
      %341 = vmatpush1.bf16.msra.mxu0 %v309
      %342 = vmatprep.subr.bf16.mxu0 0
      %343 = vmatpush1.bf16.msra.mxu0 %v308
      %344 = vmatprep.subr.bf16.mxu0 0
      %345 = vmatpush1.bf16.msra.mxu0 %v307
      %346 = vmatprep.subr.bf16.mxu0 0
      %347 = vmatpush1.bf16.msra.mxu0 %v306
      %348 = vmatprep.subr.bf16.mxu0 0
      %349 = vmatpush2.bf16.msra.mxu0 0
      %350 = vmatprep.subr.bf16.mxu0 0
      %351 = vmatpush2.bf16.msra.mxu0 0
      %352 = vmatprep.subr.bf16.mxu0 0
      %353 = vmatpush2.bf16.msra.mxu0 0
      %354 = vmatprep.subr.bf16.mxu0 0
      %355 = vmatpush2.bf16.msra.mxu0 0
      %356 = vmatprep.subr.bf16.mxu0 0
      %357 = vmatpush2.bf16.msra.mxu0 0
      %358 = vmatprep.subr.bf16.mxu0 0
      %359 = vmatpush2.bf16.msra.mxu0 0
      %360 = vmatprep.subr.bf16.mxu0 0
      %361 = vmatpush2.bf16.msra.mxu0 0
      %362 = vmatprep.subr.bf16.mxu0 0
      %363 = vmatpush2.bf16.msra.mxu0 0
      %364 = vmatprep.mubr.bf16.mxu0 0
      %365 = vmatmul.mubr.bf16.gmra.mxu0 %v317
      %v366 = vpop.f32.mrf.mxu0
      %v367 = vadd.f32 0.0, %v366
      %v368 = vpop.f32.mrf.mxu0
      %v369 = vpop.f32.mrf.mxu0
      %v370 = vadd.f32 0.0, %v369
      %v371 = vpop.f32.mrf.mxu0
      %372 = vmatprep.mubr.bf16.mxu0 0
      %373 = vmatmul.mubr.bf16.gmra.mxu0 %v320
      %v374 = vpop.f32.mrf.mxu0
      %v375 = vadd.f32 0.0, %v374
      %v376 = vpop.f32.mrf.mxu0
      %v377 = vpop.f32.mrf.mxu0
      %v378 = vadd.f32 0.0, %v377
      %v379 = vpop.f32.mrf.mxu0
      %380 = vmatprep.mubr.bf16.mxu0 0
      %381 = vmatmul.mubr.bf16.gmra.mxu0 %v323
      %v382 = vpop.f32.mrf.mxu0
      %v383 = vadd.f32 0.0, %v382
      %v384 = vpop.f32.mrf.mxu0
      %v385 = vpop.f32.mrf.mxu0
      %v386 = vadd.f32 0.0, %v385
      %v387 = vpop.f32.mrf.mxu0
      %388 = vmatprep.mubr.bf16.mxu0 0
      %389 = vmatmul.mubr.bf16.gmra.mxu0 %v326
      %v390 = vpop.f32.mrf.mxu0
      %v391 = vadd.f32 0.0, %v390
      %v392 = vpop.f32.mrf.mxu0
      %v393 = vpop.f32.mrf.mxu0
      %v394 = vadd.f32 0.0, %v393
      %v395 = vpop.f32.mrf.mxu0
      %396 = vdwg.mxu0
      %v397 = vld [vmem:[%s2] sm:$0x1]
      %v399 = vlaneseq
      %v400 = vshrl.u32 %v399, 7
      %v401 = vsub.s32 0, %v400
      %v402 = vrot.slane %v397, %v401
      %v404 = vmul.f32 %v367, %v402
      %v405 = vmul.f32 %v370, %v402
      %v406 = vmul.f32 %v375, %v402
      %v407 = vmul.f32 %v378, %v402
      %v408 = vmul.f32 %v383, %v402
      %v409 = vmul.f32 %v386, %v402
      %v410 = vmul.f32 %v391, %v402
      %v411 = vmul.f32 %v394, %v402
      %v412 = vld [vmem:[%s3] sm:$0x1]
      %v414 = vlaneseq
      %v415 = vshrl.u32 %v414, 7
      %v416 = vsub.s32 0, %v415
      %v417 = vrot.slane %v412, %v416
      %v419 = vadd.f32 %v404, %v417
      %v420 = vadd.f32 %v405, %v417
      %v421 = vadd.f32 %v406, %v417
      %v422 = vadd.f32 %v407, %v417
      %v423 = vadd.f32 %v408, %v417
      %v424 = vadd.f32 %v409, %v417
      %v425 = vadd.f32 %v410, %v417
      %v426 = vadd.f32 %v411, %v417
      %vm427 = vcmp.gt.f32.partialorder %v419, 0.0
      %vm428 = vcmp.gt.f32.partialorder %v420, 0.0
      %vm429 = vcmp.gt.f32.partialorder %v421, 0.0
      %vm430 = vcmp.gt.f32.partialorder %v422, 0.0
      %vm431 = vcmp.gt.f32.partialorder %v423, 0.0
      %vm432 = vcmp.gt.f32.partialorder %v424, 0.0
      %vm433 = vcmp.gt.f32.partialorder %v425, 0.0
      %vm434 = vcmp.gt.f32.partialorder %v426, 0.0
      %v435 = vmul.f32 %v419, 0.1
      %v436 = vmul.f32 %v420, 0.1
      %v437 = vmul.f32 %v421, 0.1
      %v438 = vmul.f32 %v422, 0.1
      %v439 = vmul.f32 %v423, 0.1
      %v440 = vmul.f32 %v424, 0.1
      %v441 = vmul.f32 %v425, 0.1
      %v442 = vmul.f32 %v426, 0.1
      %v443 = vsel %vm427, %v419, %v435
      %v444 = vsel %vm428, %v420, %v436
      %v445 = vsel %vm429, %v421, %v437
      %v446 = vsel %vm430, %v422, %v438
      %v447 = vsel %vm431, %v423, %v439
      %v448 = vsel %vm432, %v424, %v440
      %v449 = vsel %vm433, %v425, %v441
      %v450 = vsel %vm434, %v426, %v442
      %v451 = vld [vmem:[%s242] sm:$0xff]
      %v452 = vld [vmem:[%s242 + $0x8] sm:$0xff]
      %v453 = vld [vmem:[%s242 + $0x10] sm:$0xff]
      %v454 = vld [vmem:[%s242 + $0x18] sm:$0xff]
      %v455 = vld [vmem:[%s242 + $0x20] sm:$0xff]
      %v456 = vld [vmem:[%s242 + $0x28] sm:$0xff]
      %v457 = vld [vmem:[%s242 + $0x30] sm:$0xff]
      %v458 = vld [vmem:[%s242 + $0x38] sm:$0xff]
      %v459 = vadd.f32 %v443, %v451
      %v460 = vadd.f32 %v444, %v452
      %v461 = vadd.f32 %v445, %v453
      %v462 = vadd.f32 %v446, %v454
      %v463 = vadd.f32 %v447, %v455
      %v464 = vadd.f32 %v448, %v456
      %v465 = vadd.f32 %v449, %v457
      %v466 = vadd.f32 %v450, %v458
      %vm467 = vcmask 130048
      %468 = vst.msk [vmem:[%s248] sm:$0xff] %vm467, %v459
      %469 = vst.msk [vmem:[%s248 + $0x8] sm:$0xff] %vm467, %v460
      %470 = vst.msk [vmem:[%s248 + $0x10] sm:$0xff] %vm467, %v461
      %471 = vst.msk [vmem:[%s248 + $0x18] sm:$0xff] %vm467, %v462
      %472 = vst.msk [vmem:[%s248 + $0x20] sm:$0xff] %vm467, %v463
      %473 = vst.msk [vmem:[%s248 + $0x28] sm:$0xff] %vm467, %v464
      %474 = vst.msk [vmem:[%s248 + $0x30] sm:$0xff] %vm467, %v465
      %475 = vst.msk [vmem:[%s248 + $0x38] sm:$0xff] %vm467, %v466
      %s476 = smul.u32 8, %s16
      %p477 = scmp.lt.s32.totalorder %s476, 15
      %s478 = scalar_select %p477, %s476, 15
      %s479 = smul.addr %s478, 8
      %s480 = scalar_lea.vmem %s5, %s479
      // Predicated region
      $region41: #{_lambda_.13} parent=39 // pred_check
        %p481 = pneg %p149
      $region42: #{_lambda_.13} parent=39 // pred_check_branch
        %483 = sbr.rel (%p481) target = $region44
      $region43: #{_lambda_.13} parent=39 // pred_region
        %s484 = smul.u32 8, %s16
      $region44: #{_lambda_.13} parent=39 // pred_fallthru
        _
    $region40: #{_lambda_.13} parent=5 // pred_fallthru
      _
    %p485 = scmp.le.s32.totalorder 2, %s11
    // Predicated region
    $region45: #{_lambda_.13} parent=5 // pred_check
      %p486 = pneg %p485
    $region46: #{_lambda_.13} parent=5 // pred_check_branch
      %488 = sbr.rel (%p486) target = $region48
    $region47: #{_lambda_.13} parent=5 // pred_region
      %s489 = ssub.s32 %s11, 2
      // Predicated region
      $region49: #{_lambda_.13} parent=47 // pred_check
        %p490 = pneg %p155
      $region50: #{_lambda_.13} parent=47 // pred_check_branch
        %492 = sbr.rel (%p490) target = $region52
      $region51: #{_lambda_.13} parent=47 // pred_region
        %s493 = smul.u32 8, %s17
        %p494 = scmp.lt.s32.totalorder %s493, 15
        %s495 = scalar_select %p494, %s493, 15
        %s496 = smul.addr %s495, 8
        %s497 = scalar_lea.vmem %s5, %s496
      $region52: #{_lambda_.13} parent=47 // pred_fallthru
        _
    $region48: #{_lambda_.13} parent=5 // pred_fallthru
      _
  $region6: #{_lambda_.13} parent=0 // loop_footer
    %s15 = sadd.s32 1, %s11
  $region7: #{_lambda_.13} parent=0 // loop_footer_branch
    %10 = sbr.rel target = $region3
  $region8: #{_lambda_.13} parent=0 // loop_exit
    _

// kernel: _lambda_.14
$region0: #{_lambda_.14}
  #allocation0 [shape = 'u32[]', space=smem, size = 0x4, offset = 0x4, fixed_abs, tag = 'smem constant byte address 0x4 - core index']
  #allocation1 [shape = 'u32[144,128]{1,0:T(1,128)}', space=vmem, size = 0x12000, scoped, tag = 'internal scratch']
  %s0 = inlined_call_operand.vmem [shape: bf16[128,16], index: 0, kind: input, shape index: {}]
  %s1 = inlined_call_operand.vmem [shape: bf16[16,21], index: 1, kind: input, shape index: {}]
  %s2 = inlined_call_operand.vmem [shape: f32[1,21], index: 2, kind: input, shape index: {}]
  %s3 = inlined_call_operand.vmem [shape: f32[1,21], index: 3, kind: input, shape index: {}]
  %s4 = inlined_call_operand.vmem [shape: f32[128,21], index: 4, kind: output, shape index: {}]
  %s5 = sld [smem:[#allocation0]]
  $region49: #{_lambda_.14} parent=0
    _
  %s7 = ssub.s32 1, %s5
  %s8 = scalar_select 0, %s7, %s5
  loop: start=0, step=1, limit=4
  $region2: #{_lambda_.14} parent=0 // loop_pre_header
    _
  $region3: #{_lambda_.14} parent=0 // loop_header
    %s10 = sphi 0, %s14
    %p11 = scmp.ge.s32.totalorder %s10, 4
    %s20 = sphi 0, %s22
    %s23 = sphi 0, %s20
    %s24 = sphi 0, %s23
    %s40 = sphi 0, %s24
    %s44 = sphi 0, %s44
    %s46 = sphi 0, %s44
    %s47 = sphi 0, %s46
    %s61 = sphi 0, %s47
    %s65 = sphi 0, %s65
    %s67 = sphi 0, %s65
    %s68 = sphi 0, %s67
    %s82 = sphi 0, %s68
    %s86 = sphi 0, %s86
    %s88 = sphi 0, %s86
    %s89 = sphi 0, %s88
    %s103 = sphi 0, %s89
    %s109 = sphi 0, %s111
    %s112 = sphi 0, %s109
    %s113 = sphi 0, %s112
    %s129 = sphi 0, %s113
  $region4: #{_lambda_.14} parent=0 // loop_header_branch
    %13 = sbr.rel (%p11) target = $region8
  $region5: #{_lambda_.14} parent=0 // loop_body
    %s15 = ssub.s32 %s10, 1
    %s16 = ssub.s32 %s10, 2
    %s17 = sadd.s32 %s10, 1
    %s18 = ssub.s32 %s10, %s17
    %p19 = scmp.eq.s32.totalorder %s18, 0
    %s21 = sadd.s32 %s20, 1
    %s22 = scalar_select %p19, %s20, %s21
    %p25 = pneg %p19
    %p26 = scmp.eq.s32.totalorder %s10, 1
    %p27 = por %p25, %p26
    %p28 = scmp.ne.s32.totalorder %s20, %s23
    %p29 = scmp.eq.s32.totalorder %s10, 0
    %p30 = por %p28, %p29
    %p31 = scmp.ne.s32.totalorder %s20, %s23
    %p32 = scmp.eq.s32.totalorder %s15, 1
    %p33 = por %p31, %p32
    %p34 = scmp.ne.s32.totalorder %s23, %s24
    %p35 = scmp.eq.s32.totalorder %s15, 0
    %p36 = por %p34, %p35
    %p37 = scmp.ne.s32.totalorder %s23, %s24
    %p38 = scmp.eq.s32.totalorder %s16, 1
    %p39 = por %p37, %p38
    %p41 = scmp.ne.s32.totalorder %s24, %s40
    %p42 = scmp.eq.s32.totalorder %s16, 0
    %p43 = por %p41, %p42
    %s45 = sadd.s32 %s44, 1
    %p48 = scmp.eq.s32.totalorder %s10, 1
    %p49 = scmp.ne.s32.totalorder %s44, %s46
    %p50 = scmp.eq.s32.totalorder %s10, 0
    %p51 = por %p49, %p50
    %p52 = scmp.ne.s32.totalorder %s44, %s46
    %p53 = scmp.eq.s32.totalorder %s15, 1
    %p54 = por %p52, %p53
    %p55 = scmp.ne.s32.totalorder %s46, %s47
    %p56 = scmp.eq.s32.totalorder %s15, 0
    %p57 = por %p55, %p56
    %p58 = scmp.ne.s32.totalorder %s46, %s47
    %p59 = scmp.eq.s32.totalorder %s16, 1
    %p60 = por %p58, %p59
    %p62 = scmp.ne.s32.totalorder %s47, %s61
    %p63 = scmp.eq.s32.totalorder %s16, 0
    %p64 = por %p62, %p63
    %s66 = sadd.s32 %s65, 1
    %p69 = scmp.eq.s32.totalorder %s10, 1
    %p70 = scmp.ne.s32.totalorder %s65, %s67
    %p71 = scmp.eq.s32.totalorder %s10, 0
    %p72 = por %p70, %p71
    %p73 = scmp.ne.s32.totalorder %s65, %s67
    %p74 = scmp.eq.s32.totalorder %s15, 1
    %p75 = por %p73, %p74
    %p76 = scmp.ne.s32.totalorder %s67, %s68
    %p77 = scmp.eq.s32.totalorder %s15, 0
    %p78 = por %p76, %p77
    %p79 = scmp.ne.s32.totalorder %s67, %s68
    %p80 = scmp.eq.s32.totalorder %s16, 1
    %p81 = por %p79, %p80
    %p83 = scmp.ne.s32.totalorder %s68, %s82
    %p84 = scmp.eq.s32.totalorder %s16, 0
    %p85 = por %p83, %p84
    %s87 = sadd.s32 %s86, 1
    %p90 = scmp.eq.s32.totalorder %s10, 1
    %p91 = scmp.ne.s32.totalorder %s86, %s88
    %p92 = scmp.eq.s32.totalorder %s10, 0
    %p93 = por %p91, %p92
    %p94 = scmp.ne.s32.totalorder %s86, %s88
    %p95 = scmp.eq.s32.totalorder %s15, 1
    %p96 = por %p94, %p95
    %p97 = scmp.ne.s32.totalorder %s88, %s89
    %p98 = scmp.eq.s32.totalorder %s15, 0
    %p99 = por %p97, %p98
    %p100 = scmp.ne.s32.totalorder %s88, %s89
    %p101 = scmp.eq.s32.totalorder %s16, 1
    %p102 = por %p100, %p101
    %p104 = scmp.ne.s32.totalorder %s89, %s103
    %p105 = scmp.eq.s32.totalorder %s16, 0
    %p106 = por %p104, %p105
    %s107 = ssub.s32 %s10, %s17
    %p108 = scmp.eq.s32.totalorder %s107, 0
    %s110 = sadd.s32 %s109, 1
    %s111 = scalar_select %p108, %s109, %s110
    %p114 = pneg %p108
    %p115 = scmp.eq.s32.totalorder %s10, 1
    %p116 = por %p114, %p115
    %p117 = scmp.ne.s32.totalorder %s109, %s112
    %p118 = scmp.eq.s32.totalorder %s10, 0
    %p119 = por %p117, %p118
    %p120 = scmp.ne.s32.totalorder %s109, %s112
    %p121 = scmp.eq.s32.totalorder %s15, 1
    %p122 = por %p120, %p121
    %p123 = scmp.ne.s32.totalorder %s112, %s113
    %p124 = scmp.eq.s32.totalorder %s15, 0
    %p125 = por %p123, %p124
    %p126 = scmp.ne.s32.totalorder %s112, %s113
    %p127 = scmp.eq.s32.totalorder %s16, 1
    %p128 = por %p126, %p127
    %p130 = scmp.ne.s32.totalorder %s113, %s129
    %p131 = scmp.eq.s32.totalorder %s16, 0
    %p132 = por %p130, %p131
    %p133 = scmp.le.s32.totalorder 1, %s10
    %p134 = scmp.lt.s32.totalorder %s10, 3
    %p135 = pnand %p133, %p134
    %p136 = pneg %p135
    // Predicated region
    $region9: #{_lambda_.14} parent=5 // pred_check
      _
    $region10: #{_lambda_.14} parent=5 // pred_check_branch
      %138 = sbr.rel (%p135) target = $region12
    $region11: #{_lambda_.14} parent=5 // pred_region
      %s139 = ssub.s32 %s10, 1
      // Predicated region
      $region13: #{_lambda_.14} parent=11 // pred_check
        %p140 = pneg %p57
      $region14: #{_lambda_.14} parent=11 // pred_check_branch
        %142 = sbr.rel (%p140) target = $region16
      $region15: #{_lambda_.14} parent=11 // pred_region
        _
      $region16: #{_lambda_.14} parent=11 // pred_fallthru
        _
      // Predicated region
      $region17: #{_lambda_.14} parent=11 // pred_check
        %p143 = pneg %p78
      $region18: #{_lambda_.14} parent=11 // pred_check_branch
        %145 = sbr.rel (%p143) target = $region20
      $region19: #{_lambda_.14} parent=11 // pred_region
        _
      $region20: #{_lambda_.14} parent=11 // pred_fallthru
        _
      // Predicated region
      $region21: #{_lambda_.14} parent=11 // pred_check
        %p146 = pneg %p99
      $region22: #{_lambda_.14} parent=11 // pred_check_branch
        %148 = sbr.rel (%p146) target = $region24
      $region23: #{_lambda_.14} parent=11 // pred_region
        _
      $region24: #{_lambda_.14} parent=11 // pred_fallthru
        _
    $region12: #{_lambda_.14} parent=5 // pred_fallthru
      _
    %p149 = scmp.lt.s32.totalorder %s10, 2
    // Predicated region
    $region25: #{_lambda_.14} parent=5 // pred_check
      %p150 = pneg %p149
    $region26: #{_lambda_.14} parent=5 // pred_check_branch
      %152 = sbr.rel (%p150) target = $region28
    $region27: #{_lambda_.14} parent=5 // pred_region
      // Predicated region
      $region29: #{_lambda_.14} parent=27 // pred_check
        %p153 = pneg %p30
      $region30: #{_lambda_.14} parent=27 // pred_check_branch
        %155 = sbr.rel (%p153) target = $region32
      $region31: #{_lambda_.14} parent=27 // pred_region
        %s156 = smul.u32 8, %s10
        %p157 = scmp.lt.s32.totalorder %s156, 15
        %s158 = scalar_select %p157, %s156, 15
        %s159 = smul.addr %s158, 4
        %s160 = scalar_lea.vmem %s0, %s159
        %s161 = smul.u32 8, %s10
      $region32: #{_lambda_.14} parent=27 // pred_fallthru
        _
    $region28: #{_lambda_.14} parent=5 // pred_fallthru
      _
    %p162 = scmp.le.s32.totalorder 1, %s10
    %p163 = scmp.lt.s32.totalorder %s10, 3
    %p164 = pnand %p162, %p163
    %p165 = pneg %p164
    // Predicated region
    $region33: #{_lambda_.14} parent=5 // pred_check
      _
    $region34: #{_lambda_.14} parent=5 // pred_check_branch
      %167 = sbr.rel (%p164) target = $region36
    $region35: #{_lambda_.14} parent=5 // pred_region
      %s168 = ssub.s32 %s10, 1
      %s169 = smul.u32 8, %s15
      %p170 = scmp.lt.s32.totalorder %s169, 15
      %s171 = scalar_select %p170, %s169, 15
      %s172 = smul.addr %s171, 4
      %s173 = scalar_lea.vmem %s0, %s172
      %p174 = pneg %p36
      %p175 = pneg %p33
      %p176 = pneg %p57
      %p177 = pneg %p54
      %p178 = pneg %p78
      %p179 = pneg %p75
      %p180 = pneg %p99
      %p181 = pneg %p96
      %p182 = pneg %p125
      %p183 = pneg %p122
      %s184 = smul.u32 8, %s15
      %p185 = scmp.lt.s32.totalorder %s184, 15
      %s186 = scalar_select %p185, %s184, 15
      %s187 = smul.addr %s186, 8
      %s188 = scalar_lea.vmem %s4, %s187
      %s189 = smul.u32 8, %s15
      %p190 = scmp.lt.s32.totalorder %s189, 15
      %s191 = scalar_select %p190, %s189, 15
      %s192 = smul.addr %s191, 4
      %s193 = scalar_lea.vmem %s0, %s192
      %s194 = smul.u32 8, %s15
      %s195 = smul.u32 8, %s15
      %p196 = scmp.lt.s32.totalorder %s195, 15
      %s197 = scalar_select %p196, %s195, 15
      %s198 = smul.addr %s197, 8
      %s199 = scalar_lea.vmem %s4, %s198
      %s200 = smul.u32 8, %s15
      %v202 = vld [vmem:[%s193] sm:$0xf]
      %v203 = vld [vmem:[%s193 + $0x4] sm:$0xf]
      %v204 = vld [vmem:[%s193 + $0x8] sm:$0xf]
      %v205 = vld [vmem:[%s193 + $0xc] sm:$0xf]
      %v206 = vld [vmem:[%s193 + $0x10] sm:$0xf]
      %v207 = vld [vmem:[%s193 + $0x14] sm:$0xf]
      %v208 = vld [vmem:[%s193 + $0x18] sm:$0xf]
      %v209 = vld [vmem:[%s193 + $0x1c] sm:$0xf]
      %v210 = vld [vmem:[%s1] sm:$0xf]
      %v211 = vld [vmem:[%s1 + $0x4] sm:$0xf]
      %v220 = vunpack.c.l.b16 %v202
      %v221 = vunpack.c.l.b16 %v203
      %v222 = vunpack.c.l.b16 %v204
      %v223 = vunpack.c.l.b16 %v205
      %v224 = vunpack.c.l.b16 %v206
      %v225 = vunpack.c.l.b16 %v207
      %v226 = vunpack.c.l.b16 %v208
      %v227 = vunpack.c.l.b16 %v209
      %v228 = vpack.c.b16 %v221, %v220
      %v229 = vpack.c.b16 %v223, %v222
      %v230 = vpack.c.b16 %v225, %v224
      %v231 = vpack.c.b16 %v227, %v226
      %v234 = vunpack.c.l.b16 %v210
      %v235 = vunpack.c.l.b16 %v211
      %v236 = vpack.c.b16 %v235, %v234
      %vm238 = vcmask 130048
      %v240 = vsel %vm238, %v228, 0
      %v243 = vsel %vm238, %v229, 0
      %v246 = vsel %vm238, %v230, 0
      %v249 = vsel %vm238, %v231, 0
      %251 = vmatprep.subr.bf16.mxu0 0
      %252 = vmatpush1.bf16.msra.mxu0 0
      %253 = vmatprep.subr.bf16.mxu0 0
      %254 = vmatpush1.bf16.msra.mxu0 0
      %255 = vmatprep.subr.bf16.mxu0 0
      %256 = vmatpush1.bf16.msra.mxu0 0
      %257 = vmatprep.subr.bf16.mxu0 0
      %258 = vmatpush1.bf16.msra.mxu0 0
      %259 = vmatprep.subr.bf16.mxu0 0
      %260 = vmatpush1.bf16.msra.mxu0 0
      %261 = vmatprep.subr.bf16.mxu0 0
      %262 = vmatpush1.bf16.msra.mxu0 0
      %263 = vmatprep.subr.bf16.mxu0 0
      %264 = vmatpush1.bf16.msra.mxu0 0
      %265 = vmatprep.subr.bf16.mxu0 0
      %266 = vmatpush1.bf16.msra.mxu0 %v236
      %267 = vmatprep.subr.bf16.mxu0 0
      %268 = vmatpush2.bf16.msra.mxu0 0
      %269 = vmatprep.subr.bf16.mxu0 0
      %270 = vmatpush2.bf16.msra.mxu0 0
      %271 = vmatprep.subr.bf16.mxu0 0
      %272 = vmatpush2.bf16.msra.mxu0 0
      %273 = vmatprep.subr.bf16.mxu0 0
      %274 = vmatpush2.bf16.msra.mxu0 0
      %275 = vmatprep.subr.bf16.mxu0 0
      %276 = vmatpush2.bf16.msra.mxu0 0
      %277 = vmatprep.subr.bf16.mxu0 0
      %278 = vmatpush2.bf16.msra.mxu0 0
      %279 = vmatprep.subr.bf16.mxu0 0
      %280 = vmatpush2.bf16.msra.mxu0 0
      %281 = vmatprep.subr.bf16.mxu0 0
      %282 = vmatpush2.bf16.msra.mxu0 0
      %283 = vmatprep.mubr.bf16.mxu0 0
      %284 = vmatmul.mubr.bf16.gmra.mxu0 %v240
      %v285 = vpop.f32.mrf.mxu0
      %v286 = vadd.f32 0.0, %v285
      %v287 = vpop.f32.mrf.mxu0
      %v288 = vpop.f32.mrf.mxu0
      %v289 = vadd.f32 0.0, %v288
      %v290 = vpop.f32.mrf.mxu0
      %291 = vmatprep.mubr.bf16.mxu0 0
      %292 = vmatmul.mubr.bf16.gmra.mxu0 %v243
      %v293 = vpop.f32.mrf.mxu0
      %v294 = vadd.f32 0.0, %v293
      %v295 = vpop.f32.mrf.mxu0
      %v296 = vpop.f32.mrf.mxu0
      %v297 = vadd.f32 0.0, %v296
      %v298 = vpop.f32.mrf.mxu0
      %299 = vmatprep.mubr.bf16.mxu0 0
      %300 = vmatmul.mubr.bf16.gmra.mxu0 %v246
      %v301 = vpop.f32.mrf.mxu0
      %v302 = vadd.f32 0.0, %v301
      %v303 = vpop.f32.mrf.mxu0
      %v304 = vpop.f32.mrf.mxu0
      %v305 = vadd.f32 0.0, %v304
      %v306 = vpop.f32.mrf.mxu0
      %307 = vmatprep.mubr.bf16.mxu0 0
      %308 = vmatmul.mubr.bf16.gmra.mxu0 %v249
      %v309 = vpop.f32.mrf.mxu0
      %v310 = vadd.f32 0.0, %v309
      %v311 = vpop.f32.mrf.mxu0
      %v312 = vpop.f32.mrf.mxu0
      %v313 = vadd.f32 0.0, %v312
      %v314 = vpop.f32.mrf.mxu0
      %315 = vdwg.mxu0
      %v316 = vld [vmem:[%s2] sm:$0x1]
      %v318 = vlaneseq
      %v319 = vshrl.u32 %v318, 7
      %v320 = vsub.s32 0, %v319
      %v321 = vrot.slane %v316, %v320
      %v323 = vmul.f32 %v286, %v321
      %v324 = vmul.f32 %v289, %v321
      %v325 = vmul.f32 %v294, %v321
      %v326 = vmul.f32 %v297, %v321
      %v327 = vmul.f32 %v302, %v321
      %v328 = vmul.f32 %v305, %v321
      %v329 = vmul.f32 %v310, %v321
      %v330 = vmul.f32 %v313, %v321
      %v331 = vld [vmem:[%s3] sm:$0x1]
      %v333 = vlaneseq
      %v334 = vshrl.u32 %v333, 7
      %v335 = vsub.s32 0, %v334
      %v336 = vrot.slane %v331, %v335
      %v338 = vadd.f32 %v323, %v336
      %v339 = vadd.f32 %v324, %v336
      %v340 = vadd.f32 %v325, %v336
      %v341 = vadd.f32 %v326, %v336
      %v342 = vadd.f32 %v327, %v336
      %v343 = vadd.f32 %v328, %v336
      %v344 = vadd.f32 %v329, %v336
      %v345 = vadd.f32 %v330, %v336
      %vm346 = vcmask 171008
      %347 = vst.msk [vmem:[%s199] sm:$0xff] %vm346, %v338
      %348 = vst.msk [vmem:[%s199 + $0x8] sm:$0xff] %vm346, %v339
      %349 = vst.msk [vmem:[%s199 + $0x10] sm:$0xff] %vm346, %v340
      %350 = vst.msk [vmem:[%s199 + $0x18] sm:$0xff] %vm346, %v341
      %351 = vst.msk [vmem:[%s199 + $0x20] sm:$0xff] %vm346, %v342
      %352 = vst.msk [vmem:[%s199 + $0x28] sm:$0xff] %vm346, %v343
      %353 = vst.msk [vmem:[%s199 + $0x30] sm:$0xff] %vm346, %v344
      %354 = vst.msk [vmem:[%s199 + $0x38] sm:$0xff] %vm346, %v345
      %s355 = smul.u32 8, %s15
      %p356 = scmp.lt.s32.totalorder %s355, 15
      %s357 = scalar_select %p356, %s355, 15
      %s358 = smul.addr %s357, 8
      %s359 = scalar_lea.vmem %s4, %s358
      // Predicated region
      $region37: #{_lambda_.14} parent=35 // pred_check
        %p360 = pneg %p122
      $region38: #{_lambda_.14} parent=35 // pred_check_branch
        %362 = sbr.rel (%p360) target = $region40
      $region39: #{_lambda_.14} parent=35 // pred_region
        %s363 = smul.u32 8, %s15
      $region40: #{_lambda_.14} parent=35 // pred_fallthru
        _
    $region36: #{_lambda_.14} parent=5 // pred_fallthru
      _
    %p364 = scmp.le.s32.totalorder 2, %s10
    // Predicated region
    $region41: #{_lambda_.14} parent=5 // pred_check
      %p365 = pneg %p364
    $region42: #{_lambda_.14} parent=5 // pred_check_branch
      %367 = sbr.rel (%p365) target = $region44
    $region43: #{_lambda_.14} parent=5 // pred_region
      %s368 = ssub.s32 %s10, 2
      // Predicated region
      $region45: #{_lambda_.14} parent=43 // pred_check
        %p369 = pneg %p128
      $region46: #{_lambda_.14} parent=43 // pred_check_branch
        %371 = sbr.rel (%p369) target = $region48
      $region47: #{_lambda_.14} parent=43 // pred_region
        %s372 = smul.u32 8, %s16
        %p373 = scmp.lt.s32.totalorder %s372, 15
        %s374 = scalar_select %p373, %s372, 15
        %s375 = smul.addr %s374, 8
        %s376 = scalar_lea.vmem %s4, %s375
      $region48: #{_lambda_.14} parent=43 // pred_fallthru
        _
    $region44: #{_lambda_.14} parent=5 // pred_fallthru
      _
  $region6: #{_lambda_.14} parent=0 // loop_footer
    %s14 = sadd.s32 1, %s10
  $region7: #{_lambda_.14} parent=0 // loop_footer_branch
    %9 = sbr.rel target = $region3
  $region8: #{_lambda_.14} parent=0 // loop_exit
    _

// kernel: _lambda_.15
$region0: #{_lambda_.15}
  #allocation0 [shape = 'u32[]', space=smem, size = 0x4, offset = 0x4, fixed_abs, tag = 'smem constant byte address 0x4 - core index']
  #allocation1 [shape = 'u32[144,128]{1,0:T(1,128)}', space=vmem, size = 0x12000, scoped, tag = 'internal scratch']
  %s0 = inlined_call_operand.vmem [shape: f32[2,7,192], index: 0, kind: input, shape index: {}]
  %s1 = inlined_call_operand.vmem [shape: f32[4,192], index: 1, kind: input, shape index: {}]
  %s2 = inlined_call_operand.vmem [shape: f32[2,7,192], index: 2, kind: output, shape index: {}]
  %s3 = sld [smem:[#allocation0]]
  $region18: #{_lambda_.15} parent=0
    _
  %s5 = ssub.s32 1, %s3
  %s6 = scalar_select 0, %s5, %s3
  // Predicated region
  $region2: #{_lambda_.15} parent=0 // pred_check
    _
  $region3: #{_lambda_.15} parent=0 // pred_check_branch
    %8 = sbr.rel (0) target = $region5
  $region4: #{_lambda_.15} parent=0 // pred_region
    _
  $region5: #{_lambda_.15} parent=0 // pred_fallthru
    _
  // Predicated region
  $region6: #{_lambda_.15} parent=0 // pred_check
    _
  $region7: #{_lambda_.15} parent=0 // pred_check_branch
    %10 = sbr.rel (0) target = $region9
  $region8: #{_lambda_.15} parent=0 // pred_region
    _
  $region9: #{_lambda_.15} parent=0 // pred_fallthru
    _
  %v11 = vld [vmem:[%s0] sm:$0x7f]
  %v12 = vld [vmem:[%s0 + $0x8] sm:$0x7f]
  %v13 = vld [vmem:[%s0 + $0x10] sm:$0x7f]
  %v14 = vld [vmem:[%s0 + $0x18] sm:$0x7f]
  %v15 = vld [vmem:[%s1] sm:$0xff]
  %v16 = vxor.u32 %v11, 2147483648
  %v17 = vxor.u32 %v12, 2147483648
  %v18 = vxor.u32 %v13, 2147483648
  %v19 = vxor.u32 %v14, 2147483648
  %v20 = vmul.f32 %v16, 1.442695
  %v21 = vpow.pop %v20
  %v22 = vmul.f32 %v17, 1.442695
  %v23 = vpow.pop %v22
  %v24 = vmul.f32 %v18, 1.442695
  %v25 = vpow.pop %v24
  %v26 = vmul.f32 %v19, 1.442695
  %v27 = vpow.pop %v26
  %v28 = vadd.f32 %v21, 1.0
  %v29 = vadd.f32 %v23, 1.0
  %v30 = vadd.f32 %v25, 1.0
  %v31 = vadd.f32 %v27, 1.0
  %v32 = vrcp.pop %v28
  %v33 = vmul.f32 1.0, %v32
  %v34 = vrcp.pop %v29
  %v35 = vmul.f32 1.0, %v34
  %v36 = vrcp.pop %v30
  %v37 = vmul.f32 1.0, %v36
  %v38 = vrcp.pop %v31
  %v39 = vmul.f32 1.0, %v38
  %v40 = vmul.f32 %v11, 1.442695
  %v41 = vpow.pop %v40
  %v42 = vmul.f32 %v12, 1.442695
  %v43 = vpow.pop %v42
  %v44 = vmul.f32 %v13, 1.442695
  %v45 = vpow.pop %v44
  %v46 = vmul.f32 %v14, 1.442695
  %v47 = vpow.pop %v46
  %v49 = vlaneseq
  %v50 = vshrl.u32 %v49, 7
  %v51 = vsub.s32 0, %v50
  %v52 = vrot.slane %v15, %v51
  %v53 = vlaneseq
  %v54 = vshrl.u32 %v53, 7
  %v55 = vsub.s32 4, %v54
  %v56 = vrot.slane %v15, %v55
  %v59 = vlaneseq
  %v60 = vshrl.u32 %v59, 7
  %v61 = vsub.s32 0, %v60
  %v62 = vrot.slane %v52, %v61
  %v63 = vlaneseq
  %v64 = vshrl.u32 %v63, 7
  %v65 = vsub.s32 0, %v64
  %v66 = vrot.slane %v56, %v65
  %v67 = vadd.f32 %v33, %v62
  %v68 = vadd.f32 %v35, %v66
  %v69 = vadd.f32 %v37, %v62
  %v70 = vadd.f32 %v39, %v66
  %v71 = vmul.f32 %v67, 2.0
  %v72 = vmul.f32 %v68, 2.0
  %v73 = vmul.f32 %v69, 2.0
  %v74 = vmul.f32 %v70, 2.0
  %v75 = vlaneseq
  %v76 = vshrl.u32 %v75, 7
  %v77 = vsub.s32 1, %v76
  %v78 = vrot.slane %v15, %v77
  %v79 = vlaneseq
  %v80 = vshrl.u32 %v79, 7
  %v81 = vsub.s32 5, %v80
  %v82 = vrot.slane %v15, %v81
  %v85 = vlaneseq
  %v86 = vshrl.u32 %v85, 7
  %v87 = vsub.s32 1, %v86
  %v88 = vrot.slane %v78, %v87
  %v89 = vlaneseq
  %v90 = vshrl.u32 %v89, 7
  %v91 = vsub.s32 1, %v90
  %v92 = vrot.slane %v82, %v91
  %v93 = vadd.f32 %v33, %v88
  %v94 = vadd.f32 %v35, %v92
  %v95 = vadd.f32 %v37, %v88
  %v96 = vadd.f32 %v39, %v92
  %v97 = vmul.f32 %v93, 2.0
  %v98 = vmul.f32 %v94, 2.0
  %v99 = vmul.f32 %v95, 2.0
  %v100 = vmul.f32 %v96, 2.0
  %v101 = vlaneseq
  %v102 = vshrl.u32 %v101, 7
  %v103 = vsub.s32 2, %v102
  %v104 = vrot.slane %v15, %v103
  %v105 = vlaneseq
  %v106 = vshrl.u32 %v105, 7
  %v107 = vsub.s32 6, %v106
  %v108 = vrot.slane %v15, %v107
  %v111 = vlaneseq
  %v112 = vshrl.u32 %v111, 7
  %v113 = vsub.s32 2, %v112
  %v114 = vrot.slane %v104, %v113
  %v115 = vlaneseq
  %v116 = vshrl.u32 %v115, 7
  %v117 = vsub.s32 2, %v116
  %v118 = vrot.slane %v108, %v117
  %v119 = vmul.f32 %v41, %v114
  %v120 = vmul.f32 %v43, %v118
  %v121 = vmul.f32 %v45, %v114
  %v122 = vmul.f32 %v47, %v118
  %v123 = vmul.f32 %v119, 2.0
  %v124 = vmul.f32 %v120, 2.0
  %v125 = vmul.f32 %v121, 2.0
  %v126 = vmul.f32 %v122, 2.0
  %v127 = vlaneseq
  %v128 = vshrl.u32 %v127, 7
  %v129 = vsub.s32 3, %v128
  %v130 = vrot.slane %v15, %v129
  %v131 = vlaneseq
  %v132 = vshrl.u32 %v131, 7
  %v133 = vsub.s32 7, %v132
  %v134 = vrot.slane %v15, %v133
  %v137 = vlaneseq
  %v138 = vshrl.u32 %v137, 7
  %v139 = vsub.s32 3, %v138
  %v140 = vrot.slane %v130, %v139
  %v141 = vlaneseq
  %v142 = vshrl.u32 %v141, 7
  %v143 = vsub.s32 3, %v142
  %v144 = vrot.slane %v134, %v143
  %v145 = vmul.f32 %v41, %v140
  %v146 = vmul.f32 %v43, %v144
  %v147 = vmul.f32 %v45, %v140
  %v148 = vmul.f32 %v47, %v144
  %v149 = vmul.f32 %v145, 2.0
  %v150 = vmul.f32 %v146, 2.0
  %v151 = vmul.f32 %v147, 2.0
  %v152 = vmul.f32 %v148, 2.0
  %v153 = vlaneseq
  %v154 = vshrl.u32 %v153, 7
  %vm155 = vcmp.eq.s32.totalorder %v154, 0
  %vm156 = vcmp.eq.s32.totalorder %v154, 1
  %vm157 = vcmp.eq.s32.totalorder %v154, 2
  %vm158 = vcmp.eq.s32.totalorder %v154, 3
  %v159 = vsel %vm158, %v149, %v33
  %v160 = vsel %vm158, %v150, %v35
  %v161 = vsel %vm158, %v151, %v37
  %v162 = vsel %vm158, %v152, %v39
  %v163 = vsel %vm157, %v123, %v159
  %v164 = vsel %vm157, %v124, %v160
  %v165 = vsel %vm157, %v125, %v161
  %v166 = vsel %vm157, %v126, %v162
  %v167 = vsel %vm156, %v97, %v163
  %v168 = vsel %vm156, %v98, %v164
  %v169 = vsel %vm156, %v99, %v165
  %v170 = vsel %vm156, %v100, %v166
  %v171 = vsel %vm155, %v71, %v167
  %v172 = vsel %vm155, %v72, %v168
  %v173 = vsel %vm155, %v73, %v169
  %v174 = vsel %vm155, %v74, %v170
  %175 = vst [vmem:[%s2] sm:$0x7f] %v171
  %vm176 = vcmask 522240
  %177 = vst.msk [vmem:[%s2 + $0x8] sm:$0x7f] %vm176, %v172
  %178 = vst [vmem:[%s2 + $0x10] sm:$0x7f] %v173
  %179 = vst.msk [vmem:[%s2 + $0x18] sm:$0x7f] %vm176, %v174
  // Predicated region
  $region10: #{_lambda_.15} parent=0 // pred_check
    _
  $region11: #{_lambda_.15} parent=0 // pred_check_branch
    %181 = sbr.rel (0) target = $region13
  $region12: #{_lambda_.15} parent=0 // pred_region
    _
  $region13: #{_lambda_.15} parent=0 // pred_fallthru
    _
  // Predicated region
  $region14: #{_lambda_.15} parent=0 // pred_check
    _
  $region15: #{_lambda_.15} parent=0 // pred_check_branch
    %183 = sbr.rel (0) target = $region17
  $region16: #{_lambda_.15} parent=0 // pred_region
    _
  $region17: #{_lambda_.15} parent=0 // pred_fallthru
    _

// kernel: _lambda_.17
$region0: #{_lambda_.17}
  #allocation0 [shape = 'u32[]', space=smem, size = 0x4, offset = 0x4, fixed_abs, tag = 'smem constant byte address 0x4 - core index']
  #allocation1 [shape = 'u32[144,128]{1,0:T(1,128)}', space=vmem, size = 0x12000, scoped, tag = 'internal scratch']
  %s0 = inlined_call_operand.vmem [shape: bf16[512,144], index: 0, kind: input, shape index: {}]
  %s1 = inlined_call_operand.vmem [shape: bf16[144,16], index: 1, kind: input, shape index: {}]
  %s2 = inlined_call_operand.vmem [shape: f32[1,16], index: 2, kind: input, shape index: {}]
  %s3 = inlined_call_operand.vmem [shape: f32[1,16], index: 3, kind: input, shape index: {}]
  %s4 = inlined_call_operand.vmem [shape: f32[512,16], index: 4, kind: output, shape index: {}]
  %s5 = sld [smem:[#allocation0]]
  $region49: #{_lambda_.17} parent=0
    _
  %s7 = ssub.s32 1, %s5
  %s8 = scalar_select 0, %s7, %s5
  loop: start=0, step=1, limit=4
  $region2: #{_lambda_.17} parent=0 // loop_pre_header
    _
  $region3: #{_lambda_.17} parent=0 // loop_header
    %s10 = sphi 0, %s14
    %p11 = scmp.ge.s32.totalorder %s10, 4
    %s20 = sphi 0, %s22
    %s23 = sphi 0, %s20
    %s24 = sphi 0, %s23
    %s40 = sphi 0, %s24
    %s44 = sphi 0, %s44
    %s46 = sphi 0, %s44
    %s47 = sphi 0, %s46
    %s61 = sphi 0, %s47
    %s65 = sphi 0, %s65
    %s67 = sphi 0, %s65
    %s68 = sphi 0, %s67
    %s82 = sphi 0, %s68
    %s86 = sphi 0, %s86
    %s88 = sphi 0, %s86
    %s89 = sphi 0, %s88
    %s103 = sphi 0, %s89
    %s109 = sphi 0, %s111
    %s112 = sphi 0, %s109
    %s113 = sphi 0, %s112
    %s129 = sphi 0, %s113
  $region4: #{_lambda_.17} parent=0 // loop_header_branch
    %13 = sbr.rel (%p11) target = $region8
  $region5: #{_lambda_.17} parent=0 // loop_body
    %s15 = ssub.s32 %s10, 1
    %s16 = ssub.s32 %s10, 2
    %s17 = sadd.s32 %s10, 1
    %s18 = ssub.s32 %s10, %s17
    %p19 = scmp.eq.s32.totalorder %s18, 0
    %s21 = sadd.s32 %s20, 1
    %s22 = scalar_select %p19, %s20, %s21
    %p25 = pneg %p19
    %p26 = scmp.eq.s32.totalorder %s10, 1
    %p27 = por %p25, %p26
    %p28 = scmp.ne.s32.totalorder %s20, %s23
    %p29 = scmp.eq.s32.totalorder %s10, 0
    %p30 = por %p28, %p29
    %p31 = scmp.ne.s32.totalorder %s20, %s23
    %p32 = scmp.eq.s32.totalorder %s15, 1
    %p33 = por %p31, %p32
    %p34 = scmp.ne.s32.totalorder %s23, %s24
    %p35 = scmp.eq.s32.totalorder %s15, 0
    %p36 = por %p34, %p35
    %p37 = scmp.ne.s32.totalorder %s23, %s24
    %p38 = scmp.eq.s32.totalorder %s16, 1
    %p39 = por %p37, %p38
    %p41 = scmp.ne.s32.totalorder %s24, %s40
    %p42 = scmp.eq.s32.totalorder %s16, 0
    %p43 = por %p41, %p42
    %s45 = sadd.s32 %s44, 1
    %p48 = scmp.eq.s32.totalorder %s10, 1
    %p49 = scmp.ne.s32.totalorder %s44, %s46
    %p50 = scmp.eq.s32.totalorder %s10, 0
    %p51 = por %p49, %p50
    %p52 = scmp.ne.s32.totalorder %s44, %s46
    %p53 = scmp.eq.s32.totalorder %s15, 1
    %p54 = por %p52, %p53
    %p55 = scmp.ne.s32.totalorder %s46, %s47
    %p56 = scmp.eq.s32.totalorder %s15, 0
    %p57 = por %p55, %p56
    %p58 = scmp.ne.s32.totalorder %s46, %s47
    %p59 = scmp.eq.s32.totalorder %s16, 1
    %p60 = por %p58, %p59
    %p62 = scmp.ne.s32.totalorder %s47, %s61
    %p63 = scmp.eq.s32.totalorder %s16, 0
    %p64 = por %p62, %p63
    %s66 = sadd.s32 %s65, 1
    %p69 = scmp.eq.s32.totalorder %s10, 1
    %p70 = scmp.ne.s32.totalorder %s65, %s67
    %p71 = scmp.eq.s32.totalorder %s10, 0
    %p72 = por %p70, %p71
    %p73 = scmp.ne.s32.totalorder %s65, %s67
    %p74 = scmp.eq.s32.totalorder %s15, 1
    %p75 = por %p73, %p74
    %p76 = scmp.ne.s32.totalorder %s67, %s68
    %p77 = scmp.eq.s32.totalorder %s15, 0
    %p78 = por %p76, %p77
    %p79 = scmp.ne.s32.totalorder %s67, %s68
    %p80 = scmp.eq.s32.totalorder %s16, 1
    %p81 = por %p79, %p80
    %p83 = scmp.ne.s32.totalorder %s68, %s82
    %p84 = scmp.eq.s32.totalorder %s16, 0
    %p85 = por %p83, %p84
    %s87 = sadd.s32 %s86, 1
    %p90 = scmp.eq.s32.totalorder %s10, 1
    %p91 = scmp.ne.s32.totalorder %s86, %s88
    %p92 = scmp.eq.s32.totalorder %s10, 0
    %p93 = por %p91, %p92
    %p94 = scmp.ne.s32.totalorder %s86, %s88
    %p95 = scmp.eq.s32.totalorder %s15, 1
    %p96 = por %p94, %p95
    %p97 = scmp.ne.s32.totalorder %s88, %s89
    %p98 = scmp.eq.s32.totalorder %s15, 0
    %p99 = por %p97, %p98
    %p100 = scmp.ne.s32.totalorder %s88, %s89
    %p101 = scmp.eq.s32.totalorder %s16, 1
    %p102 = por %p100, %p101
    %p104 = scmp.ne.s32.totalorder %s89, %s103
    %p105 = scmp.eq.s32.totalorder %s16, 0
    %p106 = por %p104, %p105
    %s107 = ssub.s32 %s10, %s17
    %p108 = scmp.eq.s32.totalorder %s107, 0
    %s110 = sadd.s32 %s109, 1
    %s111 = scalar_select %p108, %s109, %s110
    %p114 = pneg %p108
    %p115 = scmp.eq.s32.totalorder %s10, 1
    %p116 = por %p114, %p115
    %p117 = scmp.ne.s32.totalorder %s109, %s112
    %p118 = scmp.eq.s32.totalorder %s10, 0
    %p119 = por %p117, %p118
    %p120 = scmp.ne.s32.totalorder %s109, %s112
    %p121 = scmp.eq.s32.totalorder %s15, 1
    %p122 = por %p120, %p121
    %p123 = scmp.ne.s32.totalorder %s112, %s113
    %p124 = scmp.eq.s32.totalorder %s15, 0
    %p125 = por %p123, %p124
    %p126 = scmp.ne.s32.totalorder %s112, %s113
    %p127 = scmp.eq.s32.totalorder %s16, 1
    %p128 = por %p126, %p127
    %p130 = scmp.ne.s32.totalorder %s113, %s129
    %p131 = scmp.eq.s32.totalorder %s16, 0
    %p132 = por %p130, %p131
    %p133 = scmp.le.s32.totalorder 1, %s10
    %p134 = scmp.lt.s32.totalorder %s10, 3
    %p135 = pnand %p133, %p134
    %p136 = pneg %p135
    // Predicated region
    $region9: #{_lambda_.17} parent=5 // pred_check
      _
    $region10: #{_lambda_.17} parent=5 // pred_check_branch
      %138 = sbr.rel (%p135) target = $region12
    $region11: #{_lambda_.17} parent=5 // pred_region
      %s139 = ssub.s32 %s10, 1
      // Predicated region
      $region13: #{_lambda_.17} parent=11 // pred_check
        %p140 = pneg %p57
      $region14: #{_lambda_.17} parent=11 // pred_check_branch
        %142 = sbr.rel (%p140) target = $region16
      $region15: #{_lambda_.17} parent=11 // pred_region
        _
      $region16: #{_lambda_.17} parent=11 // pred_fallthru
        _
      // Predicated region
      $region17: #{_lambda_.17} parent=11 // pred_check
        %p143 = pneg %p78
      $region18: #{_lambda_.17} parent=11 // pred_check_branch
        %145 = sbr.rel (%p143) target = $region20
      $region19: #{_lambda_.17} parent=11 // pred_region
        _
      $region20: #{_lambda_.17} parent=11 // pred_fallthru
        _
      // Predicated region
      $region21: #{_lambda_.17} parent=11 // pred_check
        %p146 = pneg %p99
      $region22: #{_lambda_.17} parent=11 // pred_check_branch
        %148 = sbr.rel (%p146) target = $region24
      $region23: #{_lambda_.17} parent=11 // pred_region
        _
      $region24: #{_lambda_.17} parent=11 // pred_fallthru
        _
    $region12: #{_lambda_.17} parent=5 // pred_fallthru
      _
    %p149 = scmp.lt.s32.totalorder %s10, 2
    // Predicated region
    $region25: #{_lambda_.17} parent=5 // pred_check
      %p150 = pneg %p149
    $region26: #{_lambda_.17} parent=5 // pred_check_branch
      %152 = sbr.rel (%p150) target = $region28
    $region27: #{_lambda_.17} parent=5 // pred_region
      // Predicated region
      $region29: #{_lambda_.17} parent=27 // pred_check
        %p153 = pneg %p30
      $region30: #{_lambda_.17} parent=27 // pred_check_branch
        %155 = sbr.rel (%p153) target = $region32
      $region31: #{_lambda_.17} parent=27 // pred_region
        %s156 = smul.u32 32, %s10
        %p157 = scmp.lt.s32.totalorder %s156, 63
        %s158 = scalar_select %p157, %s156, 63
        %s159 = smul.addr %s158, 2
        %s160 = smul.addr %s159, 4
        %s161 = scalar_lea.vmem %s0, %s160
        %s162 = smul.u32 32, %s10
      $region32: #{_lambda_.17} parent=27 // pred_fallthru
        _
    $region28: #{_lambda_.17} parent=5 // pred_fallthru
      _
    %p163 = scmp.le.s32.totalorder 1, %s10
    %p164 = scmp.lt.s32.totalorder %s10, 3
    %p165 = pnand %p163, %p164
    %p166 = pneg %p165
    // Predicated region
    $region33: #{_lambda_.17} parent=5 // pred_check
      _
    $region34: #{_lambda_.17} parent=5 // pred_check_branch
      %168 = sbr.rel (%p165) target = $region36
    $region35: #{_lambda_.17} parent=5 // pred_region
      %s169 = ssub.s32 %s10, 1
      %s170 = smul.u32 32, %s15
      %p171 = scmp.lt.s32.totalorder %s170, 63
      %s172 = scalar_select %p171, %s170, 63
      %s173 = smul.addr %s172, 2
      %s174 = smul.addr %s173, 4
      %s175 = scalar_lea.vmem %s0, %s174
      %p176 = pneg %p36
      %p177 = pneg %p33
      %p178 = pneg %p57
      %p179 = pneg %p54
      %p180 = pneg %p78
      %p181 = pneg %p75
      %p182 = pneg %p99
      %p183 = pneg %p96
      %p184 = pneg %p125
      %p185 = pneg %p122
      %s186 = smul.u32 32, %s15
      %p187 = scmp.lt.s32.totalorder %s186, 63
      %s188 = scalar_select %p187, %s186, 63
      %s189 = smul.addr %s188, 8
      %s190 = scalar_lea.vmem %s4, %s189
      %s191 = smul.u32 32, %s15
      %p192 = scmp.lt.s32.totalorder %s191, 63
      %s193 = scalar_select %p192, %s191, 63
      %s194 = smul.addr %s193, 2
      %s195 = smul.addr %s194, 4
      %s196 = scalar_lea.vmem %s0, %s195
      %s197 = smul.u32 32, %s15
      %s198 = smul.u32 32, %s15
      %p199 = scmp.lt.s32.totalorder %s198, 63
      %s200 = scalar_select %p199, %s198, 63
      %s201 = smul.addr %s200, 8
      %s202 = scalar_lea.vmem %s4, %s201
      %s203 = smul.u32 32, %s15
      %v205 = vld [vmem:[%s196] sm:$0xff]
      %v206 = vld [vmem:[%s196 + $0x8] sm:$0xff]
      %v207 = vld [vmem:[%s196 + $0x10] sm:$0xff]
      %v208 = vld [vmem:[%s196 + $0x18] sm:$0xff]
      %v209 = vld [vmem:[%s196 + $0x20] sm:$0xff]
      %v210 = vld [vmem:[%s196 + $0x28] sm:$0xff]
      %v211 = vld [vmem:[%s196 + $0x30] sm:$0xff]
      %v212 = vld [vmem:[%s196 + $0x38] sm:$0xff]
      %v213 = vld [vmem:[%s196 + $0x40] sm:$0xff]
      %v214 = vld [vmem:[%s196 + $0x48] sm:$0xff]
      %v215 = vld [vmem:[%s196 + $0x50] sm:$0xff]
      %v216 = vld [vmem:[%s196 + $0x58] sm:$0xff]
      %v217 = vld [vmem:[%s196 + $0x60] sm:$0xff]
      %v218 = vld [vmem:[%s196 + $0x68] sm:$0xff]
      %v219 = vld [vmem:[%s196 + $0x70] sm:$0xff]
      %v220 = vld [vmem:[%s196 + $0x78] sm:$0xff]
      %v221 = vld [vmem:[%s196 + $0x80] sm:$0xff]
      %v222 = vld [vmem:[%s196 + $0x88] sm:$0xff]
      %v223 = vld [vmem:[%s196 + $0x90] sm:$0xff]
      %v224 = vld [vmem:[%s196 + $0x98] sm:$0xff]
      %v225 = vld [vmem:[%s196 + $0xa0] sm:$0xff]
      %v226 = vld [vmem:[%s196 + $0xa8] sm:$0xff]
      %v227 = vld [vmem:[%s196 + $0xb0] sm:$0xff]
      %v228 = vld [vmem:[%s196 + $0xb8] sm:$0xff]
      %v229 = vld [vmem:[%s196 + $0xc0] sm:$0xff]
      %v230 = vld [vmem:[%s196 + $0xc8] sm:$0xff]
      %v231 = vld [vmem:[%s196 + $0xd0] sm:$0xff]
      %v232 = vld [vmem:[%s196 + $0xd8] sm:$0xff]
      %v233 = vld [vmem:[%s196 + $0xe0] sm:$0xff]
      %v234 = vld [vmem:[%s196 + $0xe8] sm:$0xff]
      %v235 = vld [vmem:[%s196 + $0xf0] sm:$0xff]
      %v236 = vld [vmem:[%s196 + $0xf8] sm:$0xff]
      %v237 = vld [vmem:[%s1] sm:$0xf]
      %v238 = vld [vmem:[%s1 + $0x4] sm:$0xf]
      %v239 = vld [vmem:[%s1 + $0x8] sm:$0xf]
      %v240 = vld [vmem:[%s1 + $0xc] sm:$0xf]
      %v241 = vld [vmem:[%s1 + $0x10] sm:$0xf]
      %v242 = vld [vmem:[%s1 + $0x14] sm:$0xf]
      %v243 = vld [vmem:[%s1 + $0x18] sm:$0xf]
      %v244 = vld [vmem:[%s1 + $0x1c] sm:$0xf]
      %v245 = vld [vmem:[%s1 + $0x20] sm:$0xf]
      %v246 = vld [vmem:[%s1 + $0x24] sm:$0xf]
      %v247 = vld [vmem:[%s1 + $0x28] sm:$0xf]
      %v248 = vld [vmem:[%s1 + $0x2c] sm:$0xf]
      %v249 = vld [vmem:[%s1 + $0x30] sm:$0xf]
      %v250 = vld [vmem:[%s1 + $0x34] sm:$0xf]
      %v251 = vld [vmem:[%s1 + $0x38] sm:$0xf]
      %v252 = vld [vmem:[%s1 + $0x3c] sm:$0xf]
      %v253 = vld [vmem:[%s1 + $0x40] sm:$0xf]
      %v254 = vld [vmem:[%s1 + $0x44] sm:$0xf]
      %v287 = vunpack.c.l.b16 %v205
      %v288 = vunpack.c.h.b16 %v205
      %v289 = vunpack.c.l.b16 %v206
      %v290 = vunpack.c.h.b16 %v206
      %v291 = vunpack.c.l.b16 %v207
      %v292 = vunpack.c.h.b16 %v207
      %v293 = vunpack.c.l.b16 %v208
      %v294 = vunpack.c.h.b16 %v208
      %v295 = vunpack.c.l.b16 %v209
      %v296 = vunpack.c.h.b16 %v209
      %v297 = vunpack.c.l.b16 %v210
      %v298 = vunpack.c.h.b16 %v210
      %v299 = vunpack.c.l.b16 %v211
      %v300 = vunpack.c.h.b16 %v211
      %v301 = vunpack.c.l.b16 %v212
      %v302 = vunpack.c.h.b16 %v212
      %v303 = vunpack.c.l.b16 %v213
      %v304 = vunpack.c.h.b16 %v213
      %v305 = vunpack.c.l.b16 %v214
      %v306 = vunpack.c.h.b16 %v214
      %v307 = vunpack.c.l.b16 %v215
      %v308 = vunpack.c.h.b16 %v215
      %v309 = vunpack.c.l.b16 %v216
      %v310 = vunpack.c.h.b16 %v216
      %v311 = vunpack.c.l.b16 %v217
      %v312 = vunpack.c.h.b16 %v217
      %v313 = vunpack.c.l.b16 %v218
      %v314 = vunpack.c.h.b16 %v218
      %v315 = vunpack.c.l.b16 %v219
      %v316 = vunpack.c.h.b16 %v219
      %v317 = vunpack.c.l.b16 %v220
      %v318 = vunpack.c.h.b16 %v220
      %v319 = vunpack.c.l.b16 %v221
      %v320 = vunpack.c.h.b16 %v221
      %v321 = vunpack.c.l.b16 %v222
      %v322 = vunpack.c.h.b16 %v222
      %v323 = vunpack.c.l.b16 %v223
      %v324 = vunpack.c.h.b16 %v223
      %v325 = vunpack.c.l.b16 %v224
      %v326 = vunpack.c.h.b16 %v224
      %v327 = vunpack.c.l.b16 %v225
      %v328 = vunpack.c.h.b16 %v225
      %v329 = vunpack.c.l.b16 %v226
      %v330 = vunpack.c.h.b16 %v226
      %v331 = vunpack.c.l.b16 %v227
      %v332 = vunpack.c.h.b16 %v227
      %v333 = vunpack.c.l.b16 %v228
      %v334 = vunpack.c.h.b16 %v228
      %v335 = vunpack.c.l.b16 %v229
      %v336 = vunpack.c.h.b16 %v229
      %v337 = vunpack.c.l.b16 %v230
      %v338 = vunpack.c.h.b16 %v230
      %v339 = vunpack.c.l.b16 %v231
      %v340 = vunpack.c.h.b16 %v231
      %v341 = vunpack.c.l.b16 %v232
      %v342 = vunpack.c.h.b16 %v232
      %v343 = vunpack.c.l.b16 %v233
      %v344 = vunpack.c.h.b16 %v233
      %v345 = vunpack.c.l.b16 %v234
      %v346 = vunpack.c.h.b16 %v234
      %v347 = vunpack.c.l.b16 %v235
      %v348 = vunpack.c.h.b16 %v235
      %v349 = vunpack.c.l.b16 %v236
      %v350 = vunpack.c.h.b16 %v236
      %v351 = vpack.c.b16 %v289, %v287
      %v352 = vpack.c.b16 %v290, %v288
      %v353 = vpack.c.b16 %v293, %v291
      %v354 = vpack.c.b16 %v294, %v292
      %v355 = vpack.c.b16 %v297, %v295
      %v356 = vpack.c.b16 %v298, %v296
      %v357 = vpack.c.b16 %v301, %v299
      %v358 = vpack.c.b16 %v302, %v300
      %v359 = vpack.c.b16 %v305, %v303
      %v360 = vpack.c.b16 %v306, %v304
      %v361 = vpack.c.b16 %v309, %v307
      %v362 = vpack.c.b16 %v310, %v308
      %v363 = vpack.c.b16 %v313, %v311
      %v364 = vpack.c.b16 %v314, %v312
      %v365 = vpack.c.b16 %v317, %v315
      %v366 = vpack.c.b16 %v318, %v316
      %v367 = vpack.c.b16 %v321, %v319
      %v368 = vpack.c.b16 %v322, %v320
      %v369 = vpack.c.b16 %v325, %v323
      %v370 = vpack.c.b16 %v326, %v324
      %v371 = vpack.c.b16 %v329, %v327
      %v372 = vpack.c.b16 %v330, %v328
      %v373 = vpack.c.b16 %v333, %v331
      %v374 = vpack.c.b16 %v334, %v332
      %v375 = vpack.c.b16 %v337, %v335
      %v376 = vpack.c.b16 %v338, %v336
      %v377 = vpack.c.b16 %v341, %v339
      %v378 = vpack.c.b16 %v342, %v340
      %v379 = vpack.c.b16 %v345, %v343
      %v380 = vpack.c.b16 %v346, %v344
      %v381 = vpack.c.b16 %v349, %v347
      %v382 = vpack.c.b16 %v350, %v348
      %v417 = vunpack.c.l.b16 %v237
      %v418 = vunpack.c.l.b16 %v238
      %v419 = vunpack.c.l.b16 %v239
      %v420 = vunpack.c.l.b16 %v240
      %v421 = vunpack.c.l.b16 %v241
      %v422 = vunpack.c.l.b16 %v242
      %v423 = vunpack.c.l.b16 %v243
      %v424 = vunpack.c.l.b16 %v244
      %v425 = vunpack.c.l.b16 %v245
      %v426 = vunpack.c.l.b16 %v246
      %v427 = vunpack.c.l.b16 %v247
      %v428 = vunpack.c.l.b16 %v248
      %v429 = vunpack.c.l.b16 %v249
      %v430 = vunpack.c.l.b16 %v250
      %v431 = vunpack.c.l.b16 %v251
      %v432 = vunpack.c.l.b16 %v252
      %v433 = vunpack.c.l.b16 %v253
      %v434 = vunpack.c.l.b16 %v254
      %v435 = vpack.c.b16 %v418, %v417
      %v436 = vpack.c.b16 %v420, %v419
      %v437 = vpack.c.b16 %v422, %v421
      %v438 = vpack.c.b16 %v424, %v423
      %v439 = vpack.c.b16 %v426, %v425
      %v440 = vpack.c.b16 %v428, %v427
      %v441 = vpack.c.b16 %v430, %v429
      %v442 = vpack.c.b16 %v432, %v431
      %v443 = vpack.c.b16 %v434, %v433
      %vm453 = vcmask 130048
      %v455 = vsel %vm453, %v352, 0
      %v458 = vsel %vm453, %v354, 0
      %v461 = vsel %vm453, %v356, 0
      %v464 = vsel %vm453, %v358, 0
      %v467 = vsel %vm453, %v360, 0
      %v470 = vsel %vm453, %v362, 0
      %v473 = vsel %vm453, %v364, 0
      %v476 = vsel %vm453, %v366, 0
      %v479 = vsel %vm453, %v368, 0
      %v482 = vsel %vm453, %v370, 0
      %v485 = vsel %vm453, %v372, 0
      %v488 = vsel %vm453, %v374, 0
      %v491 = vsel %vm453, %v376, 0
      %v494 = vsel %vm453, %v378, 0
      %v497 = vsel %vm453, %v380, 0
      %v500 = vsel %vm453, %v382, 0
      %502 = vmatprep.subr.bf16.mxu0 0
      %503 = vmatpush1.bf16.msra.mxu0 %v442
      %504 = vmatprep.subr.bf16.mxu0 0
      %505 = vmatpush1.bf16.msra.mxu0 %v441
      %506 = vmatprep.subr.bf16.mxu0 0
      %507 = vmatpush1.bf16.msra.mxu0 %v440
      %508 = vmatprep.subr.bf16.mxu0 0
      %509 = vmatpush1.bf16.msra.mxu0 %v439
      %510 = vmatprep.subr.bf16.mxu0 0
      %511 = vmatpush1.bf16.msra.mxu0 %v438
      %512 = vmatprep.subr.bf16.mxu0 0
      %513 = vmatpush1.bf16.msra.mxu0 %v437
      %514 = vmatprep.subr.bf16.mxu0 0
      %515 = vmatpush1.bf16.msra.mxu0 %v436
      %516 = vmatprep.subr.bf16.mxu0 0
      %517 = vmatpush1.bf16.msra.mxu0 %v435
      %518 = vmatprep.subr.bf16.mxu0 0
      %519 = vmatpush2.bf16.msra.mxu0 0
      %520 = vmatprep.subr.bf16.mxu0 0
      %521 = vmatpush2.bf16.msra.mxu0 0
      %522 = vmatprep.subr.bf16.mxu0 0
      %523 = vmatpush2.bf16.msra.mxu0 0
      %524 = vmatprep.subr.bf16.mxu0 0
      %525 = vmatpush2.bf16.msra.mxu0 0
      %526 = vmatprep.subr.bf16.mxu0 0
      %527 = vmatpush2.bf16.msra.mxu0 0
      %528 = vmatprep.subr.bf16.mxu0 0
      %529 = vmatpush2.bf16.msra.mxu0 0
      %530 = vmatprep.subr.bf16.mxu0 0
      %531 = vmatpush2.bf16.msra.mxu0 0
      %532 = vmatprep.subr.bf16.mxu0 0
      %533 = vmatpush2.bf16.msra.mxu0 %v443
      %534 = vmatprep.mubr.bf16.mxu0 %v455
      %535 = vmatmul.mubr.bf16.gmra.mxu0 %v351
      %v536 = vpop.f32.mrf.mxu0
      %v537 = vadd.f32 0.0, %v536
      %v538 = vpop.f32.mrf.mxu0
      %v539 = vpop.f32.mrf.mxu0
      %v540 = vadd.f32 0.0, %v539
      %v541 = vpop.f32.mrf.mxu0
      %542 = vmatprep.mubr.bf16.mxu0 %v458
      %543 = vmatmul.mubr.bf16.gmra.mxu0 %v353
      %v544 = vpop.f32.mrf.mxu0
      %v545 = vadd.f32 0.0, %v544
      %v546 = vpop.f32.mrf.mxu0
      %v547 = vpop.f32.mrf.mxu0
      %v548 = vadd.f32 0.0, %v547
      %v549 = vpop.f32.mrf.mxu0
      %550 = vmatprep.mubr.bf16.mxu0 %v461
      %551 = vmatmul.mubr.bf16.gmra.mxu0 %v355
      %v552 = vpop.f32.mrf.mxu0
      %v553 = vadd.f32 0.0, %v552
      %v554 = vpop.f32.mrf.mxu0
      %v555 = vpop.f32.mrf.mxu0
      %v556 = vadd.f32 0.0, %v555
      %v557 = vpop.f32.mrf.mxu0
      %558 = vmatprep.mubr.bf16.mxu0 %v464
      %559 = vmatmul.mubr.bf16.gmra.mxu0 %v357
      %v560 = vpop.f32.mrf.mxu0
      %v561 = vadd.f32 0.0, %v560
      %v562 = vpop.f32.mrf.mxu0
      %v563 = vpop.f32.mrf.mxu0
      %v564 = vadd.f32 0.0, %v563
      %v565 = vpop.f32.mrf.mxu0
      %566 = vmatprep.mubr.bf16.mxu0 %v467
      %567 = vmatmul.mubr.bf16.gmra.mxu0 %v359
      %v568 = vpop.f32.mrf.mxu0
      %v569 = vadd.f32 0.0, %v568
      %v570 = vpop.f32.mrf.mxu0
      %v571 = vpop.f32.mrf.mxu0
      %v572 = vadd.f32 0.0, %v571
      %v573 = vpop.f32.mrf.mxu0
      %574 = vmatprep.mubr.bf16.mxu0 %v470
      %575 = vmatmul.mubr.bf16.gmra.mxu0 %v361
      %v576 = vpop.f32.mrf.mxu0
      %v577 = vadd.f32 0.0, %v576
      %v578 = vpop.f32.mrf.mxu0
      %v579 = vpop.f32.mrf.mxu0
      %v580 = vadd.f32 0.0, %v579
      %v581 = vpop.f32.mrf.mxu0
      %582 = vmatprep.mubr.bf16.mxu0 %v473
      %583 = vmatmul.mubr.bf16.gmra.mxu0 %v363
      %v584 = vpop.f32.mrf.mxu0
      %v585 = vadd.f32 0.0, %v584
      %v586 = vpop.f32.mrf.mxu0
      %v587 = vpop.f32.mrf.mxu0
      %v588 = vadd.f32 0.0, %v587
      %v589 = vpop.f32.mrf.mxu0
      %590 = vmatprep.mubr.bf16.mxu0 %v476
      %591 = vmatmul.mubr.bf16.gmra.mxu0 %v365
      %v592 = vpop.f32.mrf.mxu0
      %v593 = vadd.f32 0.0, %v592
      %v594 = vpop.f32.mrf.mxu0
      %v595 = vpop.f32.mrf.mxu0
      %v596 = vadd.f32 0.0, %v595
      %v597 = vpop.f32.mrf.mxu0
      %598 = vmatprep.mubr.bf16.mxu0 %v479
      %599 = vmatmul.mubr.bf16.gmra.mxu0 %v367
      %v600 = vpop.f32.mrf.mxu0
      %v601 = vadd.f32 0.0, %v600
      %v602 = vpop.f32.mrf.mxu0
      %v603 = vpop.f32.mrf.mxu0
      %v604 = vadd.f32 0.0, %v603
      %v605 = vpop.f32.mrf.mxu0
      %606 = vmatprep.mubr.bf16.mxu0 %v482
      %607 = vmatmul.mubr.bf16.gmra.mxu0 %v369
      %v608 = vpop.f32.mrf.mxu0
      %v609 = vadd.f32 0.0, %v608
      %v610 = vpop.f32.mrf.mxu0
      %v611 = vpop.f32.mrf.mxu0
      %v612 = vadd.f32 0.0, %v611
      %v613 = vpop.f32.mrf.mxu0
      %614 = vmatprep.mubr.bf16.mxu0 %v485
      %615 = vmatmul.mubr.bf16.gmra.mxu0 %v371
      %v616 = vpop.f32.mrf.mxu0
      %v617 = vadd.f32 0.0, %v616
      %v618 = vpop.f32.mrf.mxu0
      %v619 = vpop.f32.mrf.mxu0
      %v620 = vadd.f32 0.0, %v619
      %v621 = vpop.f32.mrf.mxu0
      %622 = vmatprep.mubr.bf16.mxu0 %v488
      %623 = vmatmul.mubr.bf16.gmra.mxu0 %v373
      %v624 = vpop.f32.mrf.mxu0
      %v625 = vadd.f32 0.0, %v624
      %v626 = vpop.f32.mrf.mxu0
      %v627 = vpop.f32.mrf.mxu0
      %v628 = vadd.f32 0.0, %v627
      %v629 = vpop.f32.mrf.mxu0
      %630 = vmatprep.mubr.bf16.mxu0 %v491
      %631 = vmatmul.mubr.bf16.gmra.mxu0 %v375
      %v632 = vpop.f32.mrf.mxu0
      %v633 = vadd.f32 0.0, %v632
      %v634 = vpop.f32.mrf.mxu0
      %v635 = vpop.f32.mrf.mxu0
      %v636 = vadd.f32 0.0, %v635
      %v637 = vpop.f32.mrf.mxu0
      %638 = vmatprep.mubr.bf16.mxu0 %v494
      %639 = vmatmul.mubr.bf16.gmra.mxu0 %v377
      %v640 = vpop.f32.mrf.mxu0
      %v641 = vadd.f32 0.0, %v640
      %v642 = vpop.f32.mrf.mxu0
      %v643 = vpop.f32.mrf.mxu0
      %v644 = vadd.f32 0.0, %v643
      %v645 = vpop.f32.mrf.mxu0
      %646 = vmatprep.mubr.bf16.mxu0 %v497
      %647 = vmatmul.mubr.bf16.gmra.mxu0 %v379
      %v648 = vpop.f32.mrf.mxu0
      %v649 = vadd.f32 0.0, %v648
      %v650 = vpop.f32.mrf.mxu0
      %v651 = vpop.f32.mrf.mxu0
      %v652 = vadd.f32 0.0, %v651
      %v653 = vpop.f32.mrf.mxu0
      %654 = vmatprep.mubr.bf16.mxu0 %v500
      %655 = vmatmul.mubr.bf16.gmra.mxu0 %v381
      %v656 = vpop.f32.mrf.mxu0
      %v657 = vadd.f32 0.0, %v656
      %v658 = vpop.f32.mrf.mxu0
      %v659 = vpop.f32.mrf.mxu0
      %v660 = vadd.f32 0.0, %v659
      %v661 = vpop.f32.mrf.mxu0
      %662 = vdwg.mxu0
      %v663 = vld [vmem:[%s2] sm:$0x1]
      %v665 = vlaneseq
      %v666 = vshrl.u32 %v665, 7
      %v667 = vsub.s32 0, %v666
      %v668 = vrot.slane %v663, %v667
      %v670 = vmul.f32 %v537, %v668
      %v671 = vmul.f32 %v540, %v668
      %v672 = vmul.f32 %v545, %v668
      %v673 = vmul.f32 %v548, %v668
      %v674 = vmul.f32 %v553, %v668
      %v675 = vmul.f32 %v556, %v668
      %v676 = vmul.f32 %v561, %v668
      %v677 = vmul.f32 %v564, %v668
      %v678 = vmul.f32 %v569, %v668
      %v679 = vmul.f32 %v572, %v668
      %v680 = vmul.f32 %v577, %v668
      %v681 = vmul.f32 %v580, %v668
      %v682 = vmul.f32 %v585, %v668
      %v683 = vmul.f32 %v588, %v668
      %v684 = vmul.f32 %v593, %v668
      %v685 = vmul.f32 %v596, %v668
      %v686 = vmul.f32 %v601, %v668
      %v687 = vmul.f32 %v604, %v668
      %v688 = vmul.f32 %v609, %v668
      %v689 = vmul.f32 %v612, %v668
      %v690 = vmul.f32 %v617, %v668
      %v691 = vmul.f32 %v620, %v668
      %v692 = vmul.f32 %v625, %v668
      %v693 = vmul.f32 %v628, %v668
      %v694 = vmul.f32 %v633, %v668
      %v695 = vmul.f32 %v636, %v668
      %v696 = vmul.f32 %v641, %v668
      %v697 = vmul.f32 %v644, %v668
      %v698 = vmul.f32 %v649, %v668
      %v699 = vmul.f32 %v652, %v668
      %v700 = vmul.f32 %v657, %v668
      %v701 = vmul.f32 %v660, %v668
      %v702 = vld [vmem:[%s3] sm:$0x1]
      %v704 = vlaneseq
      %v705 = vshrl.u32 %v704, 7
      %v706 = vsub.s32 0, %v705
      %v707 = vrot.slane %v702, %v706
      %v709 = vadd.f32 %v670, %v707
      %v710 = vadd.f32 %v671, %v707
      %v711 = vadd.f32 %v672, %v707
      %v712 = vadd.f32 %v673, %v707
      %v713 = vadd.f32 %v674, %v707
      %v714 = vadd.f32 %v675, %v707
      %v715 = vadd.f32 %v676, %v707
      %v716 = vadd.f32 %v677, %v707
      %v717 = vadd.f32 %v678, %v707
      %v718 = vadd.f32 %v679, %v707
      %v719 = vadd.f32 %v680, %v707
      %v720 = vadd.f32 %v681, %v707
      %v721 = vadd.f32 %v682, %v707
      %v722 = vadd.f32 %v683, %v707
      %v723 = vadd.f32 %v684, %v707
      %v724 = vadd.f32 %v685, %v707
      %v725 = vadd.f32 %v686, %v707
      %v726 = vadd.f32 %v687, %v707
      %v727 = vadd.f32 %v688, %v707
      %v728 = vadd.f32 %v689, %v707
      %v729 = vadd.f32 %v690, %v707
      %v730 = vadd.f32 %v691, %v707
      %v731 = vadd.f32 %v692, %v707
      %v732 = vadd.f32 %v693, %v707
      %v733 = vadd.f32 %v694, %v707
      %v734 = vadd.f32 %v695, %v707
      %v735 = vadd.f32 %v696, %v707
      %v736 = vadd.f32 %v697, %v707
      %v737 = vadd.f32 %v698, %v707
      %v738 = vadd.f32 %v699, %v707
      %v739 = vadd.f32 %v700, %v707
      %v740 = vadd.f32 %v701, %v707
      %vm741 = vcmp.gt.f32.partialorder %v709, 0.0
      %vm742 = vcmp.gt.f32.partialorder %v710, 0.0
      %vm743 = vcmp.gt.f32.partialorder %v711, 0.0
      %vm744 = vcmp.gt.f32.partialorder %v712, 0.0
      %vm745 = vcmp.gt.f32.partialorder %v713, 0.0
      %vm746 = vcmp.gt.f32.partialorder %v714, 0.0
      %vm747 = vcmp.gt.f32.partialorder %v715, 0.0
      %vm748 = vcmp.gt.f32.partialorder %v716, 0.0
      %vm749 = vcmp.gt.f32.partialorder %v717, 0.0
      %vm750 = vcmp.gt.f32.partialorder %v718, 0.0
      %vm751 = vcmp.gt.f32.partialorder %v719, 0.0
      %vm752 = vcmp.gt.f32.partialorder %v720, 0.0
      %vm753 = vcmp.gt.f32.partialorder %v721, 0.0
      %vm754 = vcmp.gt.f32.partialorder %v722, 0.0
      %vm755 = vcmp.gt.f32.partialorder %v723, 0.0
      %vm756 = vcmp.gt.f32.partialorder %v724, 0.0
      %vm757 = vcmp.gt.f32.partialorder %v725, 0.0
      %vm758 = vcmp.gt.f32.partialorder %v726, 0.0
      %vm759 = vcmp.gt.f32.partialorder %v727, 0.0
      %vm760 = vcmp.gt.f32.partialorder %v728, 0.0
      %vm761 = vcmp.gt.f32.partialorder %v729, 0.0
      %vm762 = vcmp.gt.f32.partialorder %v730, 0.0
      %vm763 = vcmp.gt.f32.partialorder %v731, 0.0
      %vm764 = vcmp.gt.f32.partialorder %v732, 0.0
      %vm765 = vcmp.gt.f32.partialorder %v733, 0.0
      %vm766 = vcmp.gt.f32.partialorder %v734, 0.0
      %vm767 = vcmp.gt.f32.partialorder %v735, 0.0
      %vm768 = vcmp.gt.f32.partialorder %v736, 0.0
      %vm769 = vcmp.gt.f32.partialorder %v737, 0.0
      %vm770 = vcmp.gt.f32.partialorder %v738, 0.0
      %vm771 = vcmp.gt.f32.partialorder %v739, 0.0
      %vm772 = vcmp.gt.f32.partialorder %v740, 0.0
      %v773 = vmul.f32 %v709, 0.1
      %v774 = vmul.f32 %v710, 0.1
      %v775 = vmul.f32 %v711, 0.1
      %v776 = vmul.f32 %v712, 0.1
      %v777 = vmul.f32 %v713, 0.1
      %v778 = vmul.f32 %v714, 0.1
      %v779 = vmul.f32 %v715, 0.1
      %v780 = vmul.f32 %v716, 0.1
      %v781 = vmul.f32 %v717, 0.1
      %v782 = vmul.f32 %v718, 0.1
      %v783 = vmul.f32 %v719, 0.1
      %v784 = vmul.f32 %v720, 0.1
      %v785 = vmul.f32 %v721, 0.1
      %v786 = vmul.f32 %v722, 0.1
      %v787 = vmul.f32 %v723, 0.1
      %v788 = vmul.f32 %v724, 0.1
      %v789 = vmul.f32 %v725, 0.1
      %v790 = vmul.f32 %v726, 0.1
      %v791 = vmul.f32 %v727, 0.1
      %v792 = vmul.f32 %v728, 0.1
      %v793 = vmul.f32 %v729, 0.1
      %v794 = vmul.f32 %v730, 0.1
      %v795 = vmul.f32 %v731, 0.1
      %v796 = vmul.f32 %v732, 0.1
      %v797 = vmul.f32 %v733, 0.1
      %v798 = vmul.f32 %v734, 0.1
      %v799 = vmul.f32 %v735, 0.1
      %v800 = vmul.f32 %v736, 0.1
      %v801 = vmul.f32 %v737, 0.1
      %v802 = vmul.f32 %v738, 0.1
      %v803 = vmul.f32 %v739, 0.1
      %v804 = vmul.f32 %v740, 0.1
      %v805 = vsel %vm741, %v709, %v773
      %v806 = vsel %vm742, %v710, %v774
      %v807 = vsel %vm743, %v711, %v775
      %v808 = vsel %vm744, %v712, %v776
      %v809 = vsel %vm745, %v713, %v777
      %v810 = vsel %vm746, %v714, %v778
      %v811 = vsel %vm747, %v715, %v779
      %v812 = vsel %vm748, %v716, %v780
      %v813 = vsel %vm749, %v717, %v781
      %v814 = vsel %vm750, %v718, %v782
      %v815 = vsel %vm751, %v719, %v783
      %v816 = vsel %vm752, %v720, %v784
      %v817 = vsel %vm753, %v721, %v785
      %v818 = vsel %vm754, %v722, %v786
      %v819 = vsel %vm755, %v723, %v787
      %v820 = vsel %vm756, %v724, %v788
      %v821 = vsel %vm757, %v725, %v789
      %v822 = vsel %vm758, %v726, %v790
      %v823 = vsel %vm759, %v727, %v791
      %v824 = vsel %vm760, %v728, %v792
      %v825 = vsel %vm761, %v729, %v793
      %v826 = vsel %vm762, %v730, %v794
      %v827 = vsel %vm763, %v731, %v795
      %v828 = vsel %vm764, %v732, %v796
      %v829 = vsel %vm765, %v733, %v797
      %v830 = vsel %vm766, %v734, %v798
      %v831 = vsel %vm767, %v735, %v799
      %v832 = vsel %vm768, %v736, %v800
      %v833 = vsel %vm769, %v737, %v801
      %v834 = vsel %vm770, %v738, %v802
      %v835 = vsel %vm771, %v739, %v803
      %v836 = vsel %vm772, %v740, %v804
      %837 = vst.msk [vmem:[%s202] sm:$0xff] %vm453, %v805
      %838 = vst.msk [vmem:[%s202 + $0x8] sm:$0xff] %vm453, %v806
      %839 = vst.msk [vmem:[%s202 + $0x10] sm:$0xff] %vm453, %v807
      %840 = vst.msk [vmem:[%s202 + $0x18] sm:$0xff] %vm453, %v808
      %841 = vst.msk [vmem:[%s202 + $0x20] sm:$0xff] %vm453, %v809
      %842 = vst.msk [vmem:[%s202 + $0x28] sm:$0xff] %vm453, %v810
      %843 = vst.msk [vmem:[%s202 + $0x30] sm:$0xff] %vm453, %v811
      %844 = vst.msk [vmem:[%s202 + $0x38] sm:$0xff] %vm453, %v812
      %845 = vst.msk [vmem:[%s202 + $0x40] sm:$0xff] %vm453, %v813
      %846 = vst.msk [vmem:[%s202 + $0x48] sm:$0xff] %vm453, %v814
      %847 = vst.msk [vmem:[%s202 + $0x50] sm:$0xff] %vm453, %v815
      %848 = vst.msk [vmem:[%s202 + $0x58] sm:$0xff] %vm453, %v816
      %849 = vst.msk [vmem:[%s202 + $0x60] sm:$0xff] %vm453, %v817
      %850 = vst.msk [vmem:[%s202 + $0x68] sm:$0xff] %vm453, %v818
      %851 = vst.msk [vmem:[%s202 + $0x70] sm:$0xff] %vm453, %v819
      %852 = vst.msk [vmem:[%s202 + $0x78] sm:$0xff] %vm453, %v820
      %853 = vst.msk [vmem:[%s202 + $0x80] sm:$0xff] %vm453, %v821
      %854 = vst.msk [vmem:[%s202 + $0x88] sm:$0xff] %vm453, %v822
      %855 = vst.msk [vmem:[%s202 + $0x90] sm:$0xff] %vm453, %v823
      %856 = vst.msk [vmem:[%s202 + $0x98] sm:$0xff] %vm453, %v824
      %857 = vst.msk [vmem:[%s202 + $0xa0] sm:$0xff] %vm453, %v825
      %858 = vst.msk [vmem:[%s202 + $0xa8] sm:$0xff] %vm453, %v826
      %859 = vst.msk [vmem:[%s202 + $0xb0] sm:$0xff] %vm453, %v827
      %860 = vst.msk [vmem:[%s202 + $0xb8] sm:$0xff] %vm453, %v828
      %861 = vst.msk [vmem:[%s202 + $0xc0] sm:$0xff] %vm453, %v829
      %862 = vst.msk [vmem:[%s202 + $0xc8] sm:$0xff] %vm453, %v830
      %863 = vst.msk [vmem:[%s202 + $0xd0] sm:$0xff] %vm453, %v831
      %864 = vst.msk [vmem:[%s202 + $0xd8] sm:$0xff] %vm453, %v832
      %865 = vst.msk [vmem:[%s202 + $0xe0] sm:$0xff] %vm453, %v833
      %866 = vst.msk [vmem:[%s202 + $0xe8] sm:$0xff] %vm453, %v834
      %867 = vst.msk [vmem:[%s202 + $0xf0] sm:$0xff] %vm453, %v835
      %868 = vst.msk [vmem:[%s202 + $0xf8] sm:$0xff] %vm453, %v836
      %s869 = smul.u32 32, %s15
      %p870 = scmp.lt.s32.totalorder %s869, 63
      %s871 = scalar_select %p870, %s869, 63
      %s872 = smul.addr %s871, 8
      %s873 = scalar_lea.vmem %s4, %s872
      // Predicated region
      $region37: #{_lambda_.17} parent=35 // pred_check
        %p874 = pneg %p122
      $region38: #{_lambda_.17} parent=35 // pred_check_branch
        %876 = sbr.rel (%p874) target = $region40
      $region39: #{_lambda_.17} parent=35 // pred_region
        %s877 = smul.u32 32, %s15
      $region40: #{_lambda_.17} parent=35 // pred_fallthru
        _
    $region36: #{_lambda_.17} parent=5 // pred_fallthru
      _
    %p878 = scmp.le.s32.totalorder 2, %s10
    // Predicated region
    $region41: #{_lambda_.17} parent=5 // pred_check
      %p879 = pneg %p878
    $region42: #{_lambda_.17} parent=5 // pred_check_branch
      %881 = sbr.rel (%p879) target = $region44
    $region43: #{_lambda_.17} parent=5 // pred_region
      %s882 = ssub.s32 %s10, 2
      // Predicated region
      $region45: #{_lambda_.17} parent=43 // pred_check
        %p883 = pneg %p128
      $region46: #{_lambda_.17} parent=43 // pred_check_branch
        %885 = sbr.rel (%p883) target = $region48
      $region47: #{_lambda_.17} parent=43 // pred_region
        %s886 = smul.u32 32, %s16
        %p887 = scmp.lt.s32.totalorder %s886, 63
        %s888 = scalar_select %p887, %s886, 63
        %s889 = smul.addr %s888, 8
        %s890 = scalar_lea.vmem %s4, %s889
      $region48: #{_lambda_.17} parent=43 // pred_fallthru
        _
    $region44: #{_lambda_.17} parent=5 // pred_fallthru
      _
  $region6: #{_lambda_.17} parent=0 // loop_footer
    %s14 = sadd.s32 1, %s10
  $region7: #{_lambda_.17} parent=0 // loop_footer_branch
    %9 = sbr.rel target = $region3
  $region8: #{_lambda_.17} parent=0 // loop_exit
    _

// kernel: _lambda_.18
$region0: #{_lambda_.18}
  #allocation0 [shape = 'u32[]', space=smem, size = 0x4, offset = 0x4, fixed_abs, tag = 'smem constant byte address 0x4 - core index']
  #allocation1 [shape = 'u32[144,128]{1,0:T(1,128)}', space=vmem, size = 0x12000, scoped, tag = 'internal scratch']
  %s0 = inlined_call_operand.vmem [shape: bf16[512,16], index: 0, kind: input, shape index: {}]
  %s1 = inlined_call_operand.vmem [shape: bf16[16,21], index: 1, kind: input, shape index: {}]
  %s2 = inlined_call_operand.vmem [shape: f32[1,21], index: 2, kind: input, shape index: {}]
  %s3 = inlined_call_operand.vmem [shape: f32[1,21], index: 3, kind: input, shape index: {}]
  %s4 = inlined_call_operand.vmem [shape: f32[512,21], index: 4, kind: output, shape index: {}]
  %s5 = sld [smem:[#allocation0]]
  $region49: #{_lambda_.18} parent=0
    _
  %s7 = ssub.s32 1, %s5
  %s8 = scalar_select 0, %s7, %s5
  loop: start=0, step=1, limit=4
  $region2: #{_lambda_.18} parent=0 // loop_pre_header
    _
  $region3: #{_lambda_.18} parent=0 // loop_header
    %s10 = sphi 0, %s14
    %p11 = scmp.ge.s32.totalorder %s10, 4
    %s20 = sphi 0, %s22
    %s23 = sphi 0, %s20
    %s24 = sphi 0, %s23
    %s40 = sphi 0, %s24
    %s44 = sphi 0, %s44
    %s46 = sphi 0, %s44
    %s47 = sphi 0, %s46
    %s61 = sphi 0, %s47
    %s65 = sphi 0, %s65
    %s67 = sphi 0, %s65
    %s68 = sphi 0, %s67
    %s82 = sphi 0, %s68
    %s86 = sphi 0, %s86
    %s88 = sphi 0, %s86
    %s89 = sphi 0, %s88
    %s103 = sphi 0, %s89
    %s109 = sphi 0, %s111
    %s112 = sphi 0, %s109
    %s113 = sphi 0, %s112
    %s129 = sphi 0, %s113
  $region4: #{_lambda_.18} parent=0 // loop_header_branch
    %13 = sbr.rel (%p11) target = $region8
  $region5: #{_lambda_.18} parent=0 // loop_body
    %s15 = ssub.s32 %s10, 1
    %s16 = ssub.s32 %s10, 2
    %s17 = sadd.s32 %s10, 1
    %s18 = ssub.s32 %s10, %s17
    %p19 = scmp.eq.s32.totalorder %s18, 0
    %s21 = sadd.s32 %s20, 1
    %s22 = scalar_select %p19, %s20, %s21
    %p25 = pneg %p19
    %p26 = scmp.eq.s32.totalorder %s10, 1
    %p27 = por %p25, %p26
    %p28 = scmp.ne.s32.totalorder %s20, %s23
    %p29 = scmp.eq.s32.totalorder %s10, 0
    %p30 = por %p28, %p29
    %p31 = scmp.ne.s32.totalorder %s20, %s23
    %p32 = scmp.eq.s32.totalorder %s15, 1
    %p33 = por %p31, %p32
    %p34 = scmp.ne.s32.totalorder %s23, %s24
    %p35 = scmp.eq.s32.totalorder %s15, 0
    %p36 = por %p34, %p35
    %p37 = scmp.ne.s32.totalorder %s23, %s24
    %p38 = scmp.eq.s32.totalorder %s16, 1
    %p39 = por %p37, %p38
    %p41 = scmp.ne.s32.totalorder %s24, %s40
    %p42 = scmp.eq.s32.totalorder %s16, 0
    %p43 = por %p41, %p42
    %s45 = sadd.s32 %s44, 1
    %p48 = scmp.eq.s32.totalorder %s10, 1
    %p49 = scmp.ne.s32.totalorder %s44, %s46
    %p50 = scmp.eq.s32.totalorder %s10, 0
    %p51 = por %p49, %p50
    %p52 = scmp.ne.s32.totalorder %s44, %s46
    %p53 = scmp.eq.s32.totalorder %s15, 1
    %p54 = por %p52, %p53
    %p55 = scmp.ne.s32.totalorder %s46, %s47
    %p56 = scmp.eq.s32.totalorder %s15, 0
    %p57 = por %p55, %p56
    %p58 = scmp.ne.s32.totalorder %s46, %s47
    %p59 = scmp.eq.s32.totalorder %s16, 1
    %p60 = por %p58, %p59
    %p62 = scmp.ne.s32.totalorder %s47, %s61
    %p63 = scmp.eq.s32.totalorder %s16, 0
    %p64 = por %p62, %p63
    %s66 = sadd.s32 %s65, 1
    %p69 = scmp.eq.s32.totalorder %s10, 1
    %p70 = scmp.ne.s32.totalorder %s65, %s67
    %p71 = scmp.eq.s32.totalorder %s10, 0
    %p72 = por %p70, %p71
    %p73 = scmp.ne.s32.totalorder %s65, %s67
    %p74 = scmp.eq.s32.totalorder %s15, 1
    %p75 = por %p73, %p74
    %p76 = scmp.ne.s32.totalorder %s67, %s68
    %p77 = scmp.eq.s32.totalorder %s15, 0
    %p78 = por %p76, %p77
    %p79 = scmp.ne.s32.totalorder %s67, %s68
    %p80 = scmp.eq.s32.totalorder %s16, 1
    %p81 = por %p79, %p80
    %p83 = scmp.ne.s32.totalorder %s68, %s82
    %p84 = scmp.eq.s32.totalorder %s16, 0
    %p85 = por %p83, %p84
    %s87 = sadd.s32 %s86, 1
    %p90 = scmp.eq.s32.totalorder %s10, 1
    %p91 = scmp.ne.s32.totalorder %s86, %s88
    %p92 = scmp.eq.s32.totalorder %s10, 0
    %p93 = por %p91, %p92
    %p94 = scmp.ne.s32.totalorder %s86, %s88
    %p95 = scmp.eq.s32.totalorder %s15, 1
    %p96 = por %p94, %p95
    %p97 = scmp.ne.s32.totalorder %s88, %s89
    %p98 = scmp.eq.s32.totalorder %s15, 0
    %p99 = por %p97, %p98
    %p100 = scmp.ne.s32.totalorder %s88, %s89
    %p101 = scmp.eq.s32.totalorder %s16, 1
    %p102 = por %p100, %p101
    %p104 = scmp.ne.s32.totalorder %s89, %s103
    %p105 = scmp.eq.s32.totalorder %s16, 0
    %p106 = por %p104, %p105
    %s107 = ssub.s32 %s10, %s17
    %p108 = scmp.eq.s32.totalorder %s107, 0
    %s110 = sadd.s32 %s109, 1
    %s111 = scalar_select %p108, %s109, %s110
    %p114 = pneg %p108
    %p115 = scmp.eq.s32.totalorder %s10, 1
    %p116 = por %p114, %p115
    %p117 = scmp.ne.s32.totalorder %s109, %s112
    %p118 = scmp.eq.s32.totalorder %s10, 0
    %p119 = por %p117, %p118
    %p120 = scmp.ne.s32.totalorder %s109, %s112
    %p121 = scmp.eq.s32.totalorder %s15, 1
    %p122 = por %p120, %p121
    %p123 = scmp.ne.s32.totalorder %s112, %s113
    %p124 = scmp.eq.s32.totalorder %s15, 0
    %p125 = por %p123, %p124
    %p126 = scmp.ne.s32.totalorder %s112, %s113
    %p127 = scmp.eq.s32.totalorder %s16, 1
    %p128 = por %p126, %p127
    %p130 = scmp.ne.s32.totalorder %s113, %s129
    %p131 = scmp.eq.s32.totalorder %s16, 0
    %p132 = por %p130, %p131
    %p133 = scmp.le.s32.totalorder 1, %s10
    %p134 = scmp.lt.s32.totalorder %s10, 3
    %p135 = pnand %p133, %p134
    %p136 = pneg %p135
    // Predicated region
    $region9: #{_lambda_.18} parent=5 // pred_check
      _
    $region10: #{_lambda_.18} parent=5 // pred_check_branch
      %138 = sbr.rel (%p135) target = $region12
    $region11: #{_lambda_.18} parent=5 // pred_region
      %s139 = ssub.s32 %s10, 1
      // Predicated region
      $region13: #{_lambda_.18} parent=11 // pred_check
        %p140 = pneg %p57
      $region14: #{_lambda_.18} parent=11 // pred_check_branch
        %142 = sbr.rel (%p140) target = $region16
      $region15: #{_lambda_.18} parent=11 // pred_region
        _
      $region16: #{_lambda_.18} parent=11 // pred_fallthru
        _
      // Predicated region
      $region17: #{_lambda_.18} parent=11 // pred_check
        %p143 = pneg %p78
      $region18: #{_lambda_.18} parent=11 // pred_check_branch
        %145 = sbr.rel (%p143) target = $region20
      $region19: #{_lambda_.18} parent=11 // pred_region
        _
      $region20: #{_lambda_.18} parent=11 // pred_fallthru
        _
      // Predicated region
      $region21: #{_lambda_.18} parent=11 // pred_check
        %p146 = pneg %p99
      $region22: #{_lambda_.18} parent=11 // pred_check_branch
        %148 = sbr.rel (%p146) target = $region24
      $region23: #{_lambda_.18} parent=11 // pred_region
        _
      $region24: #{_lambda_.18} parent=11 // pred_fallthru
        _
    $region12: #{_lambda_.18} parent=5 // pred_fallthru
      _
    %p149 = scmp.lt.s32.totalorder %s10, 2
    // Predicated region
    $region25: #{_lambda_.18} parent=5 // pred_check
      %p150 = pneg %p149
    $region26: #{_lambda_.18} parent=5 // pred_check_branch
      %152 = sbr.rel (%p150) target = $region28
    $region27: #{_lambda_.18} parent=5 // pred_region
      // Predicated region
      $region29: #{_lambda_.18} parent=27 // pred_check
        %p153 = pneg %p30
      $region30: #{_lambda_.18} parent=27 // pred_check_branch
        %155 = sbr.rel (%p153) target = $region32
      $region31: #{_lambda_.18} parent=27 // pred_region
        %s156 = smul.u32 32, %s10
        %p157 = scmp.lt.s32.totalorder %s156, 63
        %s158 = scalar_select %p157, %s156, 63
        %s159 = smul.addr %s158, 4
        %s160 = scalar_lea.vmem %s0, %s159
        %s161 = smul.u32 32, %s10
      $region32: #{_lambda_.18} parent=27 // pred_fallthru
        _
    $region28: #{_lambda_.18} parent=5 // pred_fallthru
      _
    %p162 = scmp.le.s32.totalorder 1, %s10
    %p163 = scmp.lt.s32.totalorder %s10, 3
    %p164 = pnand %p162, %p163
    %p165 = pneg %p164
    // Predicated region
    $region33: #{_lambda_.18} parent=5 // pred_check
      _
    $region34: #{_lambda_.18} parent=5 // pred_check_branch
      %167 = sbr.rel (%p164) target = $region36
    $region35: #{_lambda_.18} parent=5 // pred_region
      %s168 = ssub.s32 %s10, 1
      %s169 = smul.u32 32, %s15
      %p170 = scmp.lt.s32.totalorder %s169, 63
      %s171 = scalar_select %p170, %s169, 63
      %s172 = smul.addr %s171, 4
      %s173 = scalar_lea.vmem %s0, %s172
      %p174 = pneg %p36
      %p175 = pneg %p33
      %p176 = pneg %p57
      %p177 = pneg %p54
      %p178 = pneg %p78
      %p179 = pneg %p75
      %p180 = pneg %p99
      %p181 = pneg %p96
      %p182 = pneg %p125
      %p183 = pneg %p122
      %s184 = smul.u32 32, %s15
      %p185 = scmp.lt.s32.totalorder %s184, 63
      %s186 = scalar_select %p185, %s184, 63
      %s187 = smul.addr %s186, 8
      %s188 = scalar_lea.vmem %s4, %s187
      %s189 = smul.u32 32, %s15
      %p190 = scmp.lt.s32.totalorder %s189, 63
      %s191 = scalar_select %p190, %s189, 63
      %s192 = smul.addr %s191, 4
      %s193 = scalar_lea.vmem %s0, %s192
      %s194 = smul.u32 32, %s15
      %s195 = smul.u32 32, %s15
      %p196 = scmp.lt.s32.totalorder %s195, 63
      %s197 = scalar_select %p196, %s195, 63
      %s198 = smul.addr %s197, 8
      %s199 = scalar_lea.vmem %s4, %s198
      %s200 = smul.u32 32, %s15
      %v202 = vld [vmem:[%s193] sm:$0xf]
      %v203 = vld [vmem:[%s193 + $0x4] sm:$0xf]
      %v204 = vld [vmem:[%s193 + $0x8] sm:$0xf]
      %v205 = vld [vmem:[%s193 + $0xc] sm:$0xf]
      %v206 = vld [vmem:[%s193 + $0x10] sm:$0xf]
      %v207 = vld [vmem:[%s193 + $0x14] sm:$0xf]
      %v208 = vld [vmem:[%s193 + $0x18] sm:$0xf]
      %v209 = vld [vmem:[%s193 + $0x1c] sm:$0xf]
      %v210 = vld [vmem:[%s193 + $0x20] sm:$0xf]
      %v211 = vld [vmem:[%s193 + $0x24] sm:$0xf]
      %v212 = vld [vmem:[%s193 + $0x28] sm:$0xf]
      %v213 = vld [vmem:[%s193 + $0x2c] sm:$0xf]
      %v214 = vld [vmem:[%s193 + $0x30] sm:$0xf]
      %v215 = vld [vmem:[%s193 + $0x34] sm:$0xf]
      %v216 = vld [vmem:[%s193 + $0x38] sm:$0xf]
      %v217 = vld [vmem:[%s193 + $0x3c] sm:$0xf]
      %v218 = vld [vmem:[%s193 + $0x40] sm:$0xf]
      %v219 = vld [vmem:[%s193 + $0x44] sm:$0xf]
      %v220 = vld [vmem:[%s193 + $0x48] sm:$0xf]
      %v221 = vld [vmem:[%s193 + $0x4c] sm:$0xf]
      %v222 = vld [vmem:[%s193 + $0x50] sm:$0xf]
      %v223 = vld [vmem:[%s193 + $0x54] sm:$0xf]
      %v224 = vld [vmem:[%s193 + $0x58] sm:$0xf]
      %v225 = vld [vmem:[%s193 + $0x5c] sm:$0xf]
      %v226 = vld [vmem:[%s193 + $0x60] sm:$0xf]
      %v227 = vld [vmem:[%s193 + $0x64] sm:$0xf]
      %v228 = vld [vmem:[%s193 + $0x68] sm:$0xf]
      %v229 = vld [vmem:[%s193 + $0x6c] sm:$0xf]
      %v230 = vld [vmem:[%s193 + $0x70] sm:$0xf]
      %v231 = vld [vmem:[%s193 + $0x74] sm:$0xf]
      %v232 = vld [vmem:[%s193 + $0x78] sm:$0xf]
      %v233 = vld [vmem:[%s193 + $0x7c] sm:$0xf]
      %v234 = vld [vmem:[%s1] sm:$0xf]
      %v235 = vld [vmem:[%s1 + $0x4] sm:$0xf]
      %v268 = vunpack.c.l.b16 %v202
      %v269 = vunpack.c.l.b16 %v203
      %v270 = vunpack.c.l.b16 %v204
      %v271 = vunpack.c.l.b16 %v205
      %v272 = vunpack.c.l.b16 %v206
      %v273 = vunpack.c.l.b16 %v207
      %v274 = vunpack.c.l.b16 %v208
      %v275 = vunpack.c.l.b16 %v209
      %v276 = vunpack.c.l.b16 %v210
      %v277 = vunpack.c.l.b16 %v211
      %v278 = vunpack.c.l.b16 %v212
      %v279 = vunpack.c.l.b16 %v213
      %v280 = vunpack.c.l.b16 %v214
      %v281 = vunpack.c.l.b16 %v215
      %v282 = vunpack.c.l.b16 %v216
      %v283 = vunpack.c.l.b16 %v217
      %v284 = vunpack.c.l.b16 %v218
      %v285 = vunpack.c.l.b16 %v219
      %v286 = vunpack.c.l.b16 %v220
      %v287 = vunpack.c.l.b16 %v221
      %v288 = vunpack.c.l.b16 %v222
      %v289 = vunpack.c.l.b16 %v223
      %v290 = vunpack.c.l.b16 %v224
      %v291 = vunpack.c.l.b16 %v225
      %v292 = vunpack.c.l.b16 %v226
      %v293 = vunpack.c.l.b16 %v227
      %v294 = vunpack.c.l.b16 %v228
      %v295 = vunpack.c.l.b16 %v229
      %v296 = vunpack.c.l.b16 %v230
      %v297 = vunpack.c.l.b16 %v231
      %v298 = vunpack.c.l.b16 %v232
      %v299 = vunpack.c.l.b16 %v233
      %v300 = vpack.c.b16 %v269, %v268
      %v301 = vpack.c.b16 %v271, %v270
      %v302 = vpack.c.b16 %v273, %v272
      %v303 = vpack.c.b16 %v275, %v274
      %v304 = vpack.c.b16 %v277, %v276
      %v305 = vpack.c.b16 %v279, %v278
      %v306 = vpack.c.b16 %v281, %v280
      %v307 = vpack.c.b16 %v283, %v282
      %v308 = vpack.c.b16 %v285, %v284
      %v309 = vpack.c.b16 %v287, %v286
      %v310 = vpack.c.b16 %v289, %v288
      %v311 = vpack.c.b16 %v291, %v290
      %v312 = vpack.c.b16 %v293, %v292
      %v313 = vpack.c.b16 %v295, %v294
      %v314 = vpack.c.b16 %v297, %v296
      %v315 = vpack.c.b16 %v299, %v298
      %v318 = vunpack.c.l.b16 %v234
      %v319 = vunpack.c.l.b16 %v235
      %v320 = vpack.c.b16 %v319, %v318
      %vm322 = vcmask 130048
      %v324 = vsel %vm322, %v300, 0
      %v327 = vsel %vm322, %v301, 0
      %v330 = vsel %vm322, %v302, 0
      %v333 = vsel %vm322, %v303, 0
      %v336 = vsel %vm322, %v304, 0
      %v339 = vsel %vm322, %v305, 0
      %v342 = vsel %vm322, %v306, 0
      %v345 = vsel %vm322, %v307, 0
      %v348 = vsel %vm322, %v308, 0
      %v351 = vsel %vm322, %v309, 0
      %v354 = vsel %vm322, %v310, 0
      %v357 = vsel %vm322, %v311, 0
      %v360 = vsel %vm322, %v312, 0
      %v363 = vsel %vm322, %v313, 0
      %v366 = vsel %vm322, %v314, 0
      %v369 = vsel %vm322, %v315, 0
      %371 = vmatprep.subr.bf16.mxu0 0
      %372 = vmatpush1.bf16.msra.mxu0 0
      %373 = vmatprep.subr.bf16.mxu0 0
      %374 = vmatpush1.bf16.msra.mxu0 0
      %375 = vmatprep.subr.bf16.mxu0 0
      %376 = vmatpush1.bf16.msra.mxu0 0
      %377 = vmatprep.subr.bf16.mxu0 0
      %378 = vmatpush1.bf16.msra.mxu0 0
      %379 = vmatprep.subr.bf16.mxu0 0
      %380 = vmatpush1.bf16.msra.mxu0 0
      %381 = vmatprep.subr.bf16.mxu0 0
      %382 = vmatpush1.bf16.msra.mxu0 0
      %383 = vmatprep.subr.bf16.mxu0 0
      %384 = vmatpush1.bf16.msra.mxu0 0
      %385 = vmatprep.subr.bf16.mxu0 0
      %386 = vmatpush1.bf16.msra.mxu0 %v320
      %387 = vmatprep.subr.bf16.mxu0 0
      %388 = vmatpush2.bf16.msra.mxu0 0
      %389 = vmatprep.subr.bf16.mxu0 0
      %390 = vmatpush2.bf16.msra.mxu0 0
      %391 = vmatprep.subr.bf16.mxu0 0
      %392 = vmatpush2.bf16.msra.mxu0 0
      %393 = vmatprep.subr.bf16.mxu0 0
      %394 = vmatpush2.bf16.msra.mxu0 0
      %395 = vmatprep.subr.bf16.mxu0 0
      %396 = vmatpush2.bf16.msra.mxu0 0
      %397 = vmatprep.subr.bf16.mxu0 0
      %398 = vmatpush2.bf16.msra.mxu0 0
      %399 = vmatprep.subr.bf16.mxu0 0
      %400 = vmatpush2.bf16.msra.mxu0 0
      %401 = vmatprep.subr.bf16.mxu0 0
      %402 = vmatpush2.bf16.msra.mxu0 0
      %403 = vmatprep.mubr.bf16.mxu0 0
      %404 = vmatmul.mubr.bf16.gmra.mxu0 %v324
      %v405 = vpop.f32.mrf.mxu0
      %v406 = vadd.f32 0.0, %v405
      %v407 = vpop.f32.mrf.mxu0
      %v408 = vpop.f32.mrf.mxu0
      %v409 = vadd.f32 0.0, %v408
      %v410 = vpop.f32.mrf.mxu0
      %411 = vmatprep.mubr.bf16.mxu0 0
      %412 = vmatmul.mubr.bf16.gmra.mxu0 %v327
      %v413 = vpop.f32.mrf.mxu0
      %v414 = vadd.f32 0.0, %v413
      %v415 = vpop.f32.mrf.mxu0
      %v416 = vpop.f32.mrf.mxu0
      %v417 = vadd.f32 0.0, %v416
      %v418 = vpop.f32.mrf.mxu0
      %419 = vmatprep.mubr.bf16.mxu0 0
      %420 = vmatmul.mubr.bf16.gmra.mxu0 %v330
      %v421 = vpop.f32.mrf.mxu0
      %v422 = vadd.f32 0.0, %v421
      %v423 = vpop.f32.mrf.mxu0
      %v424 = vpop.f32.mrf.mxu0
      %v425 = vadd.f32 0.0, %v424
      %v426 = vpop.f32.mrf.mxu0
      %427 = vmatprep.mubr.bf16.mxu0 0
      %428 = vmatmul.mubr.bf16.gmra.mxu0 %v333
      %v429 = vpop.f32.mrf.mxu0
      %v430 = vadd.f32 0.0, %v429
      %v431 = vpop.f32.mrf.mxu0
      %v432 = vpop.f32.mrf.mxu0
      %v433 = vadd.f32 0.0, %v432
      %v434 = vpop.f32.mrf.mxu0
      %435 = vmatprep.mubr.bf16.mxu0 0
      %436 = vmatmul.mubr.bf16.gmra.mxu0 %v336
      %v437 = vpop.f32.mrf.mxu0
      %v438 = vadd.f32 0.0, %v437
      %v439 = vpop.f32.mrf.mxu0
      %v440 = vpop.f32.mrf.mxu0
      %v441 = vadd.f32 0.0, %v440
      %v442 = vpop.f32.mrf.mxu0
      %443 = vmatprep.mubr.bf16.mxu0 0
      %444 = vmatmul.mubr.bf16.gmra.mxu0 %v339
      %v445 = vpop.f32.mrf.mxu0
      %v446 = vadd.f32 0.0, %v445
      %v447 = vpop.f32.mrf.mxu0
      %v448 = vpop.f32.mrf.mxu0
      %v449 = vadd.f32 0.0, %v448
      %v450 = vpop.f32.mrf.mxu0
      %451 = vmatprep.mubr.bf16.mxu0 0
      %452 = vmatmul.mubr.bf16.gmra.mxu0 %v342
      %v453 = vpop.f32.mrf.mxu0
      %v454 = vadd.f32 0.0, %v453
      %v455 = vpop.f32.mrf.mxu0
      %v456 = vpop.f32.mrf.mxu0
      %v457 = vadd.f32 0.0, %v456
      %v458 = vpop.f32.mrf.mxu0
      %459 = vmatprep.mubr.bf16.mxu0 0
      %460 = vmatmul.mubr.bf16.gmra.mxu0 %v345
      %v461 = vpop.f32.mrf.mxu0
      %v462 = vadd.f32 0.0, %v461
      %v463 = vpop.f32.mrf.mxu0
      %v464 = vpop.f32.mrf.mxu0
      %v465 = vadd.f32 0.0, %v464
      %v466 = vpop.f32.mrf.mxu0
      %467 = vmatprep.mubr.bf16.mxu0 0
      %468 = vmatmul.mubr.bf16.gmra.mxu0 %v348
      %v469 = vpop.f32.mrf.mxu0
      %v470 = vadd.f32 0.0, %v469
      %v471 = vpop.f32.mrf.mxu0
      %v472 = vpop.f32.mrf.mxu0
      %v473 = vadd.f32 0.0, %v472
      %v474 = vpop.f32.mrf.mxu0
      %475 = vmatprep.mubr.bf16.mxu0 0
      %476 = vmatmul.mubr.bf16.gmra.mxu0 %v351
      %v477 = vpop.f32.mrf.mxu0
      %v478 = vadd.f32 0.0, %v477
      %v479 = vpop.f32.mrf.mxu0
      %v480 = vpop.f32.mrf.mxu0
      %v481 = vadd.f32 0.0, %v480
      %v482 = vpop.f32.mrf.mxu0
      %483 = vmatprep.mubr.bf16.mxu0 0
      %484 = vmatmul.mubr.bf16.gmra.mxu0 %v354
      %v485 = vpop.f32.mrf.mxu0
      %v486 = vadd.f32 0.0, %v485
      %v487 = vpop.f32.mrf.mxu0
      %v488 = vpop.f32.mrf.mxu0
      %v489 = vadd.f32 0.0, %v488
      %v490 = vpop.f32.mrf.mxu0
      %491 = vmatprep.mubr.bf16.mxu0 0
      %492 = vmatmul.mubr.bf16.gmra.mxu0 %v357
      %v493 = vpop.f32.mrf.mxu0
      %v494 = vadd.f32 0.0, %v493
      %v495 = vpop.f32.mrf.mxu0
      %v496 = vpop.f32.mrf.mxu0
      %v497 = vadd.f32 0.0, %v496
      %v498 = vpop.f32.mrf.mxu0
      %499 = vmatprep.mubr.bf16.mxu0 0
      %500 = vmatmul.mubr.bf16.gmra.mxu0 %v360
      %v501 = vpop.f32.mrf.mxu0
      %v502 = vadd.f32 0.0, %v501
      %v503 = vpop.f32.mrf.mxu0
      %v504 = vpop.f32.mrf.mxu0
      %v505 = vadd.f32 0.0, %v504
      %v506 = vpop.f32.mrf.mxu0
      %507 = vmatprep.mubr.bf16.mxu0 0
      %508 = vmatmul.mubr.bf16.gmra.mxu0 %v363
      %v509 = vpop.f32.mrf.mxu0
      %v510 = vadd.f32 0.0, %v509
      %v511 = vpop.f32.mrf.mxu0
      %v512 = vpop.f32.mrf.mxu0
      %v513 = vadd.f32 0.0, %v512
      %v514 = vpop.f32.mrf.mxu0
      %515 = vmatprep.mubr.bf16.mxu0 0
      %516 = vmatmul.mubr.bf16.gmra.mxu0 %v366
      %v517 = vpop.f32.mrf.mxu0
      %v518 = vadd.f32 0.0, %v517
      %v519 = vpop.f32.mrf.mxu0
      %v520 = vpop.f32.mrf.mxu0
      %v521 = vadd.f32 0.0, %v520
      %v522 = vpop.f32.mrf.mxu0
      %523 = vmatprep.mubr.bf16.mxu0 0
      %524 = vmatmul.mubr.bf16.gmra.mxu0 %v369
      %v525 = vpop.f32.mrf.mxu0
      %v526 = vadd.f32 0.0, %v525
      %v527 = vpop.f32.mrf.mxu0
      %v528 = vpop.f32.mrf.mxu0
      %v529 = vadd.f32 0.0, %v528
      %v530 = vpop.f32.mrf.mxu0
      %531 = vdwg.mxu0
      %v532 = vld [vmem:[%s2] sm:$0x1]
      %v534 = vlaneseq
      %v535 = vshrl.u32 %v534, 7
      %v536 = vsub.s32 0, %v535
      %v537 = vrot.slane %v532, %v536
      %v539 = vmul.f32 %v406, %v537
      %v540 = vmul.f32 %v409, %v537
      %v541 = vmul.f32 %v414, %v537
      %v542 = vmul.f32 %v417, %v537
      %v543 = vmul.f32 %v422, %v537
      %v544 = vmul.f32 %v425, %v537
      %v545 = vmul.f32 %v430, %v537
      %v546 = vmul.f32 %v433, %v537
      %v547 = vmul.f32 %v438, %v537
      %v548 = vmul.f32 %v441, %v537
      %v549 = vmul.f32 %v446, %v537
      %v550 = vmul.f32 %v449, %v537
      %v551 = vmul.f32 %v454, %v537
      %v552 = vmul.f32 %v457, %v537
      %v553 = vmul.f32 %v462, %v537
      %v554 = vmul.f32 %v465, %v537
      %v555 = vmul.f32 %v470, %v537
      %v556 = vmul.f32 %v473, %v537
      %v557 = vmul.f32 %v478, %v537
      %v558 = vmul.f32 %v481, %v537
      %v559 = vmul.f32 %v486, %v537
      %v560 = vmul.f32 %v489, %v537
      %v561 = vmul.f32 %v494, %v537
      %v562 = vmul.f32 %v497, %v537
      %v563 = vmul.f32 %v502, %v537
      %v564 = vmul.f32 %v505, %v537
      %v565 = vmul.f32 %v510, %v537
      %v566 = vmul.f32 %v513, %v537
      %v567 = vmul.f32 %v518, %v537
      %v568 = vmul.f32 %v521, %v537
      %v569 = vmul.f32 %v526, %v537
      %v570 = vmul.f32 %v529, %v537
      %v571 = vld [vmem:[%s3] sm:$0x1]
      %v573 = vlaneseq
      %v574 = vshrl.u32 %v573, 7
      %v575 = vsub.s32 0, %v574
      %v576 = vrot.slane %v571, %v575
      %v578 = vadd.f32 %v539, %v576
      %v579 = vadd.f32 %v540, %v576
      %v580 = vadd.f32 %v541, %v576
      %v581 = vadd.f32 %v542, %v576
      %v582 = vadd.f32 %v543, %v576
      %v583 = vadd.f32 %v544, %v576
      %v584 = vadd.f32 %v545, %v576
      %v585 = vadd.f32 %v546, %v576
      %v586 = vadd.f32 %v547, %v576
      %v587 = vadd.f32 %v548, %v576
      %v588 = vadd.f32 %v549, %v576
      %v589 = vadd.f32 %v550, %v576
      %v590 = vadd.f32 %v551, %v576
      %v591 = vadd.f32 %v552, %v576
      %v592 = vadd.f32 %v553, %v576
      %v593 = vadd.f32 %v554, %v576
      %v594 = vadd.f32 %v555, %v576
      %v595 = vadd.f32 %v556, %v576
      %v596 = vadd.f32 %v557, %v576
      %v597 = vadd.f32 %v558, %v576
      %v598 = vadd.f32 %v559, %v576
      %v599 = vadd.f32 %v560, %v576
      %v600 = vadd.f32 %v561, %v576
      %v601 = vadd.f32 %v562, %v576
      %v602 = vadd.f32 %v563, %v576
      %v603 = vadd.f32 %v564, %v576
      %v604 = vadd.f32 %v565, %v576
      %v605 = vadd.f32 %v566, %v576
      %v606 = vadd.f32 %v567, %v576
      %v607 = vadd.f32 %v568, %v576
      %v608 = vadd.f32 %v569, %v576
      %v609 = vadd.f32 %v570, %v576
      %vm610 = vcmask 171008
      %611 = vst.msk [vmem:[%s199] sm:$0xff] %vm610, %v578
      %612 = vst.msk [vmem:[%s199 + $0x8] sm:$0xff] %vm610, %v579
      %613 = vst.msk [vmem:[%s199 + $0x10] sm:$0xff] %vm610, %v580
      %614 = vst.msk [vmem:[%s199 + $0x18] sm:$0xff] %vm610, %v581
      %615 = vst.msk [vmem:[%s199 + $0x20] sm:$0xff] %vm610, %v582
      %616 = vst.msk [vmem:[%s199 + $0x28] sm:$0xff] %vm610, %v583
      %617 = vst.msk [vmem:[%s199 + $0x30] sm:$0xff] %vm610, %v584
      %618 = vst.msk [vmem:[%s199 + $0x38] sm:$0xff] %vm610, %v585
      %619 = vst.msk [vmem:[%s199 + $0x40] sm:$0xff] %vm610, %v586
      %620 = vst.msk [vmem:[%s199 + $0x48] sm:$0xff] %vm610, %v587
      %621 = vst.msk [vmem:[%s199 + $0x50] sm:$0xff] %vm610, %v588
      %622 = vst.msk [vmem:[%s199 + $0x58] sm:$0xff] %vm610, %v589
      %623 = vst.msk [vmem:[%s199 + $0x60] sm:$0xff] %vm610, %v590
      %624 = vst.msk [vmem:[%s199 + $0x68] sm:$0xff] %vm610, %v591
      %625 = vst.msk [vmem:[%s199 + $0x70] sm:$0xff] %vm610, %v592
      %626 = vst.msk [vmem:[%s199 + $0x78] sm:$0xff] %vm610, %v593
      %627 = vst.msk [vmem:[%s199 + $0x80] sm:$0xff] %vm610, %v594
      %628 = vst.msk [vmem:[%s199 + $0x88] sm:$0xff] %vm610, %v595
      %629 = vst.msk [vmem:[%s199 + $0x90] sm:$0xff] %vm610, %v596
      %630 = vst.msk [vmem:[%s199 + $0x98] sm:$0xff] %vm610, %v597
      %631 = vst.msk [vmem:[%s199 + $0xa0] sm:$0xff] %vm610, %v598
      %632 = vst.msk [vmem:[%s199 + $0xa8] sm:$0xff] %vm610, %v599
      %633 = vst.msk [vmem:[%s199 + $0xb0] sm:$0xff] %vm610, %v600
      %634 = vst.msk [vmem:[%s199 + $0xb8] sm:$0xff] %vm610, %v601
      %635 = vst.msk [vmem:[%s199 + $0xc0] sm:$0xff] %vm610, %v602
      %636 = vst.msk [vmem:[%s199 + $0xc8] sm:$0xff] %vm610, %v603
      %637 = vst.msk [vmem:[%s199 + $0xd0] sm:$0xff] %vm610, %v604
      %638 = vst.msk [vmem:[%s199 + $0xd8] sm:$0xff] %vm610, %v605
      %639 = vst.msk [vmem:[%s199 + $0xe0] sm:$0xff] %vm610, %v606
      %640 = vst.msk [vmem:[%s199 + $0xe8] sm:$0xff] %vm610, %v607
      %641 = vst.msk [vmem:[%s199 + $0xf0] sm:$0xff] %vm610, %v608
      %642 = vst.msk [vmem:[%s199 + $0xf8] sm:$0xff] %vm610, %v609
      %s643 = smul.u32 32, %s15
      %p644 = scmp.lt.s32.totalorder %s643, 63
      %s645 = scalar_select %p644, %s643, 63
      %s646 = smul.addr %s645, 8
      %s647 = scalar_lea.vmem %s4, %s646
      // Predicated region
      $region37: #{_lambda_.18} parent=35 // pred_check
        %p648 = pneg %p122
      $region38: #{_lambda_.18} parent=35 // pred_check_branch
        %650 = sbr.rel (%p648) target = $region40
      $region39: #{_lambda_.18} parent=35 // pred_region
        %s651 = smul.u32 32, %s15
      $region40: #{_lambda_.18} parent=35 // pred_fallthru
        _
    $region36: #{_lambda_.18} parent=5 // pred_fallthru
      _
    %p652 = scmp.le.s32.totalorder 2, %s10
    // Predicated region
    $region41: #{_lambda_.18} parent=5 // pred_check
      %p653 = pneg %p652
    $region42: #{_lambda_.18} parent=5 // pred_check_branch
      %655 = sbr.rel (%p653) target = $region44
    $region43: #{_lambda_.18} parent=5 // pred_region
      %s656 = ssub.s32 %s10, 2
      // Predicated region
      $region45: #{_lambda_.18} parent=43 // pred_check
        %p657 = pneg %p128
      $region46: #{_lambda_.18} parent=43 // pred_check_branch
        %659 = sbr.rel (%p657) target = $region48
      $region47: #{_lambda_.18} parent=43 // pred_region
        %s660 = smul.u32 32, %s16
        %p661 = scmp.lt.s32.totalorder %s660, 63
        %s662 = scalar_select %p661, %s660, 63
        %s663 = smul.addr %s662, 8
        %s664 = scalar_lea.vmem %s4, %s663
      $region48: #{_lambda_.18} parent=43 // pred_fallthru
        _
    $region44: #{_lambda_.18} parent=5 // pred_fallthru
      _
  $region6: #{_lambda_.18} parent=0 // loop_footer
    %s14 = sadd.s32 1, %s10
  $region7: #{_lambda_.18} parent=0 // loop_footer_branch
    %9 = sbr.rel target = $region3
  $region8: #{_lambda_.18} parent=0 // loop_exit
    _

// kernel: _lambda_.19
$region0: #{_lambda_.19}
  #allocation0 [shape = 'u32[]', space=smem, size = 0x4, offset = 0x4, fixed_abs, tag = 'smem constant byte address 0x4 - core index']
  #allocation1 [shape = 'u32[144,128]{1,0:T(1,128)}', space=vmem, size = 0x12000, scoped, tag = 'internal scratch']
  %s0 = inlined_call_operand.vmem [shape: f32[2,7,768], index: 0, kind: input, shape index: {}]
  %s1 = inlined_call_operand.vmem [shape: f32[4,768], index: 1, kind: input, shape index: {}]
  %s2 = inlined_call_operand.vmem [shape: f32[2,7,768], index: 2, kind: output, shape index: {}]
  %s3 = sld [smem:[#allocation0]]
  $region18: #{_lambda_.19} parent=0
    _
  %s5 = ssub.s32 1, %s3
  %s6 = scalar_select 0, %s5, %s3
  // Predicated region
  $region2: #{_lambda_.19} parent=0 // pred_check
    _
  $region3: #{_lambda_.19} parent=0 // pred_check_branch
    %8 = sbr.rel (0) target = $region5
  $region4: #{_lambda_.19} parent=0 // pred_region
    _
  $region5: #{_lambda_.19} parent=0 // pred_fallthru
    _
  // Predicated region
  $region6: #{_lambda_.19} parent=0 // pred_check
    _
  $region7: #{_lambda_.19} parent=0 // pred_check_branch
    %10 = sbr.rel (0) target = $region9
  $region8: #{_lambda_.19} parent=0 // pred_region
    _
  $region9: #{_lambda_.19} parent=0 // pred_fallthru
    _
  %v11 = vld [vmem:[%s0] sm:$0x7f]
  %v12 = vld [vmem:[%s0 + $0x8] sm:$0x7f]
  %v13 = vld [vmem:[%s0 + $0x10] sm:$0x7f]
  %v14 = vld [vmem:[%s0 + $0x18] sm:$0x7f]
  %v15 = vld [vmem:[%s0 + $0x20] sm:$0x7f]
  %v16 = vld [vmem:[%s0 + $0x28] sm:$0x7f]
  %v17 = vld [vmem:[%s0 + $0x30] sm:$0x7f]
  %v18 = vld [vmem:[%s0 + $0x38] sm:$0x7f]
  %v19 = vld [vmem:[%s0 + $0x40] sm:$0x7f]
  %v20 = vld [vmem:[%s0 + $0x48] sm:$0x7f]
  %v21 = vld [vmem:[%s0 + $0x50] sm:$0x7f]
  %v22 = vld [vmem:[%s0 + $0x58] sm:$0x7f]
  %v23 = vld [vmem:[%s1] sm:$0xff]
  %v24 = vld [vmem:[%s1 + $0x8] sm:$0xff]
  %v25 = vld [vmem:[%s1 + $0x10] sm:$0xff]
  %v26 = vxor.u32 %v11, 2147483648
  %v27 = vxor.u32 %v12, 2147483648
  %v28 = vxor.u32 %v13, 2147483648
  %v29 = vxor.u32 %v14, 2147483648
  %v30 = vxor.u32 %v15, 2147483648
  %v31 = vxor.u32 %v16, 2147483648
  %v32 = vxor.u32 %v17, 2147483648
  %v33 = vxor.u32 %v18, 2147483648
  %v34 = vxor.u32 %v19, 2147483648
  %v35 = vxor.u32 %v20, 2147483648
  %v36 = vxor.u32 %v21, 2147483648
  %v37 = vxor.u32 %v22, 2147483648
  %v38 = vmul.f32 %v26, 1.442695
  %v39 = vpow.pop %v38
  %v40 = vmul.f32 %v27, 1.442695
  %v41 = vpow.pop %v40
  %v42 = vmul.f32 %v28, 1.442695
  %v43 = vpow.pop %v42
  %v44 = vmul.f32 %v29, 1.442695
  %v45 = vpow.pop %v44
  %v46 = vmul.f32 %v30, 1.442695
  %v47 = vpow.pop %v46
  %v48 = vmul.f32 %v31, 1.442695
  %v49 = vpow.pop %v48
  %v50 = vmul.f32 %v32, 1.442695
  %v51 = vpow.pop %v50
  %v52 = vmul.f32 %v33, 1.442695
  %v53 = vpow.pop %v52
  %v54 = vmul.f32 %v34, 1.442695
  %v55 = vpow.pop %v54
  %v56 = vmul.f32 %v35, 1.442695
  %v57 = vpow.pop %v56
  %v58 = vmul.f32 %v36, 1.442695
  %v59 = vpow.pop %v58
  %v60 = vmul.f32 %v37, 1.442695
  %v61 = vpow.pop %v60
  %v62 = vadd.f32 %v39, 1.0
  %v63 = vadd.f32 %v41, 1.0
  %v64 = vadd.f32 %v43, 1.0
  %v65 = vadd.f32 %v45, 1.0
  %v66 = vadd.f32 %v47, 1.0
  %v67 = vadd.f32 %v49, 1.0
  %v68 = vadd.f32 %v51, 1.0
  %v69 = vadd.f32 %v53, 1.0
  %v70 = vadd.f32 %v55, 1.0
  %v71 = vadd.f32 %v57, 1.0
  %v72 = vadd.f32 %v59, 1.0
  %v73 = vadd.f32 %v61, 1.0
  %v74 = vrcp.pop %v62
  %v75 = vmul.f32 1.0, %v74
  %v76 = vrcp.pop %v63
  %v77 = vmul.f32 1.0, %v76
  %v78 = vrcp.pop %v64
  %v79 = vmul.f32 1.0, %v78
  %v80 = vrcp.pop %v65
  %v81 = vmul.f32 1.0, %v80
  %v82 = vrcp.pop %v66
  %v83 = vmul.f32 1.0, %v82
  %v84 = vrcp.pop %v67
  %v85 = vmul.f32 1.0, %v84
  %v86 = vrcp.pop %v68
  %v87 = vmul.f32 1.0, %v86
  %v88 = vrcp.pop %v69
  %v89 = vmul.f32 1.0, %v88
  %v90 = vrcp.pop %v70
  %v91 = vmul.f32 1.0, %v90
  %v92 = vrcp.pop %v71
  %v93 = vmul.f32 1.0, %v92
  %v94 = vrcp.pop %v72
  %v95 = vmul.f32 1.0, %v94
  %v96 = vrcp.pop %v73
  %v97 = vmul.f32 1.0, %v96
  %v98 = vmul.f32 %v11, 1.442695
  %v99 = vpow.pop %v98
  %v100 = vmul.f32 %v12, 1.442695
  %v101 = vpow.pop %v100
  %v102 = vmul.f32 %v13, 1.442695
  %v103 = vpow.pop %v102
  %v104 = vmul.f32 %v14, 1.442695
  %v105 = vpow.pop %v104
  %v106 = vmul.f32 %v15, 1.442695
  %v107 = vpow.pop %v106
  %v108 = vmul.f32 %v16, 1.442695
  %v109 = vpow.pop %v108
  %v110 = vmul.f32 %v17, 1.442695
  %v111 = vpow.pop %v110
  %v112 = vmul.f32 %v18, 1.442695
  %v113 = vpow.pop %v112
  %v114 = vmul.f32 %v19, 1.442695
  %v115 = vpow.pop %v114
  %v116 = vmul.f32 %v20, 1.442695
  %v117 = vpow.pop %v116
  %v118 = vmul.f32 %v21, 1.442695
  %v119 = vpow.pop %v118
  %v120 = vmul.f32 %v22, 1.442695
  %v121 = vpow.pop %v120
  %v125 = vlaneseq
  %v126 = vshrl.u32 %v125, 7
  %v127 = vsub.s32 0, %v126
  %v128 = vrot.slane %v23, %v127
  %v129 = vlaneseq
  %v130 = vshrl.u32 %v129, 7
  %v131 = vsub.s32 4, %v130
  %v132 = vrot.slane %v23, %v131
  %v133 = vlaneseq
  %v134 = vshrl.u32 %v133, 7
  %v135 = vsub.s32 0, %v134
  %v136 = vrot.slane %v24, %v135
  %v137 = vlaneseq
  %v138 = vshrl.u32 %v137, 7
  %v139 = vsub.s32 4, %v138
  %v140 = vrot.slane %v24, %v139
  %v141 = vlaneseq
  %v142 = vshrl.u32 %v141, 7
  %v143 = vsub.s32 0, %v142
  %v144 = vrot.slane %v25, %v143
  %v145 = vlaneseq
  %v146 = vshrl.u32 %v145, 7
  %v147 = vsub.s32 4, %v146
  %v148 = vrot.slane %v25, %v147
  %v155 = vlaneseq
  %v156 = vshrl.u32 %v155, 7
  %v157 = vsub.s32 0, %v156
  %v158 = vrot.slane %v128, %v157
  %v159 = vlaneseq
  %v160 = vshrl.u32 %v159, 7
  %v161 = vsub.s32 0, %v160
  %v162 = vrot.slane %v132, %v161
  %v163 = vlaneseq
  %v164 = vshrl.u32 %v163, 7
  %v165 = vsub.s32 0, %v164
  %v166 = vrot.slane %v136, %v165
  %v167 = vlaneseq
  %v168 = vshrl.u32 %v167, 7
  %v169 = vsub.s32 0, %v168
  %v170 = vrot.slane %v140, %v169
  %v171 = vlaneseq
  %v172 = vshrl.u32 %v171, 7
  %v173 = vsub.s32 0, %v172
  %v174 = vrot.slane %v144, %v173
  %v175 = vlaneseq
  %v176 = vshrl.u32 %v175, 7
  %v177 = vsub.s32 0, %v176
  %v178 = vrot.slane %v148, %v177
  %v179 = vadd.f32 %v75, %v158
  %v180 = vadd.f32 %v77, %v162
  %v181 = vadd.f32 %v79, %v166
  %v182 = vadd.f32 %v81, %v170
  %v183 = vadd.f32 %v83, %v174
  %v184 = vadd.f32 %v85, %v178
  %v185 = vadd.f32 %v87, %v158
  %v186 = vadd.f32 %v89, %v162
  %v187 = vadd.f32 %v91, %v166
  %v188 = vadd.f32 %v93, %v170
  %v189 = vadd.f32 %v95, %v174
  %v190 = vadd.f32 %v97, %v178
  %v191 = vlaneseq
  %v192 = vshrl.u32 %v191, 7
  %v193 = vsub.s32 1, %v192
  %v194 = vrot.slane %v23, %v193
  %v195 = vlaneseq
  %v196 = vshrl.u32 %v195, 7
  %v197 = vsub.s32 5, %v196
  %v198 = vrot.slane %v23, %v197
  %v199 = vlaneseq
  %v200 = vshrl.u32 %v199, 7
  %v201 = vsub.s32 1, %v200
  %v202 = vrot.slane %v24, %v201
  %v203 = vlaneseq
  %v204 = vshrl.u32 %v203, 7
  %v205 = vsub.s32 5, %v204
  %v206 = vrot.slane %v24, %v205
  %v207 = vlaneseq
  %v208 = vshrl.u32 %v207, 7
  %v209 = vsub.s32 1, %v208
  %v210 = vrot.slane %v25, %v209
  %v211 = vlaneseq
  %v212 = vshrl.u32 %v211, 7
  %v213 = vsub.s32 5, %v212
  %v214 = vrot.slane %v25, %v213
  %v221 = vlaneseq
  %v222 = vshrl.u32 %v221, 7
  %v223 = vsub.s32 1, %v222
  %v224 = vrot.slane %v194, %v223
  %v225 = vlaneseq
  %v226 = vshrl.u32 %v225, 7
  %v227 = vsub.s32 1, %v226
  %v228 = vrot.slane %v198, %v227
  %v229 = vlaneseq
  %v230 = vshrl.u32 %v229, 7
  %v231 = vsub.s32 1, %v230
  %v232 = vrot.slane %v202, %v231
  %v233 = vlaneseq
  %v234 = vshrl.u32 %v233, 7
  %v235 = vsub.s32 1, %v234
  %v236 = vrot.slane %v206, %v235
  %v237 = vlaneseq
  %v238 = vshrl.u32 %v237, 7
  %v239 = vsub.s32 1, %v238
  %v240 = vrot.slane %v210, %v239
  %v241 = vlaneseq
  %v242 = vshrl.u32 %v241, 7
  %v243 = vsub.s32 1, %v242
  %v244 = vrot.slane %v214, %v243
  %v245 = vadd.f32 %v75, %v224
  %v246 = vadd.f32 %v77, %v228
  %v247 = vadd.f32 %v79, %v232
  %v248 = vadd.f32 %v81, %v236
  %v249 = vadd.f32 %v83, %v240
  %v250 = vadd.f32 %v85, %v244
  %v251 = vadd.f32 %v87, %v224
  %v252 = vadd.f32 %v89, %v228
  %v253 = vadd.f32 %v91, %v232
  %v254 = vadd.f32 %v93, %v236
  %v255 = vadd.f32 %v95, %v240
  %v256 = vadd.f32 %v97, %v244
  %v257 = vlaneseq
  %v258 = vshrl.u32 %v257, 7
  %v259 = vsub.s32 2, %v258
  %v260 = vrot.slane %v23, %v259
  %v261 = vlaneseq
  %v262 = vshrl.u32 %v261, 7
  %v263 = vsub.s32 6, %v262
  %v264 = vrot.slane %v23, %v263
  %v265 = vlaneseq
  %v266 = vshrl.u32 %v265, 7
  %v267 = vsub.s32 2, %v266
  %v268 = vrot.slane %v24, %v267
  %v269 = vlaneseq
  %v270 = vshrl.u32 %v269, 7
  %v271 = vsub.s32 6, %v270
  %v272 = vrot.slane %v24, %v271
  %v273 = vlaneseq
  %v274 = vshrl.u32 %v273, 7
  %v275 = vsub.s32 2, %v274
  %v276 = vrot.slane %v25, %v275
  %v277 = vlaneseq
  %v278 = vshrl.u32 %v277, 7
  %v279 = vsub.s32 6, %v278
  %v280 = vrot.slane %v25, %v279
  %v287 = vlaneseq
  %v288 = vshrl.u32 %v287, 7
  %v289 = vsub.s32 2, %v288
  %v290 = vrot.slane %v260, %v289
  %v291 = vlaneseq
  %v292 = vshrl.u32 %v291, 7
  %v293 = vsub.s32 2, %v292
  %v294 = vrot.slane %v264, %v293
  %v295 = vlaneseq
  %v296 = vshrl.u32 %v295, 7
  %v297 = vsub.s32 2, %v296
  %v298 = vrot.slane %v268, %v297
  %v299 = vlaneseq
  %v300 = vshrl.u32 %v299, 7
  %v301 = vsub.s32 2, %v300
  %v302 = vrot.slane %v272, %v301
  %v303 = vlaneseq
  %v304 = vshrl.u32 %v303, 7
  %v305 = vsub.s32 2, %v304
  %v306 = vrot.slane %v276, %v305
  %v307 = vlaneseq
  %v308 = vshrl.u32 %v307, 7
  %v309 = vsub.s32 2, %v308
  %v310 = vrot.slane %v280, %v309
  %v311 = vmul.f32 %v99, %v290
  %v312 = vmul.f32 %v101, %v294
  %v313 = vmul.f32 %v103, %v298
  %v314 = vmul.f32 %v105, %v302
  %v315 = vmul.f32 %v107, %v306
  %v316 = vmul.f32 %v109, %v310
  %v317 = vmul.f32 %v111, %v290
  %v318 = vmul.f32 %v113, %v294
  %v319 = vmul.f32 %v115, %v298
  %v320 = vmul.f32 %v117, %v302
  %v321 = vmul.f32 %v119, %v306
  %v322 = vmul.f32 %v121, %v310
  %v323 = vlaneseq
  %v324 = vshrl.u32 %v323, 7
  %v325 = vsub.s32 3, %v324
  %v326 = vrot.slane %v23, %v325
  %v327 = vlaneseq
  %v328 = vshrl.u32 %v327, 7
  %v329 = vsub.s32 7, %v328
  %v330 = vrot.slane %v23, %v329
  %v331 = vlaneseq
  %v332 = vshrl.u32 %v331, 7
  %v333 = vsub.s32 3, %v332
  %v334 = vrot.slane %v24, %v333
  %v335 = vlaneseq
  %v336 = vshrl.u32 %v335, 7
  %v337 = vsub.s32 7, %v336
  %v338 = vrot.slane %v24, %v337
  %v339 = vlaneseq
  %v340 = vshrl.u32 %v339, 7
  %v341 = vsub.s32 3, %v340
  %v342 = vrot.slane %v25, %v341
  %v343 = vlaneseq
  %v344 = vshrl.u32 %v343, 7
  %v345 = vsub.s32 7, %v344
  %v346 = vrot.slane %v25, %v345
  %v353 = vlaneseq
  %v354 = vshrl.u32 %v353, 7
  %v355 = vsub.s32 3, %v354
  %v356 = vrot.slane %v326, %v355
  %v357 = vlaneseq
  %v358 = vshrl.u32 %v357, 7
  %v359 = vsub.s32 3, %v358
  %v360 = vrot.slane %v330, %v359
  %v361 = vlaneseq
  %v362 = vshrl.u32 %v361, 7
  %v363 = vsub.s32 3, %v362
  %v364 = vrot.slane %v334, %v363
  %v365 = vlaneseq
  %v366 = vshrl.u32 %v365, 7
  %v367 = vsub.s32 3, %v366
  %v368 = vrot.slane %v338, %v367
  %v369 = vlaneseq
  %v370 = vshrl.u32 %v369, 7
  %v371 = vsub.s32 3, %v370
  %v372 = vrot.slane %v342, %v371
  %v373 = vlaneseq
  %v374 = vshrl.u32 %v373, 7
  %v375 = vsub.s32 3, %v374
  %v376 = vrot.slane %v346, %v375
  %v377 = vmul.f32 %v99, %v356
  %v378 = vmul.f32 %v101, %v360
  %v379 = vmul.f32 %v103, %v364
  %v380 = vmul.f32 %v105, %v368
  %v381 = vmul.f32 %v107, %v372
  %v382 = vmul.f32 %v109, %v376
  %v383 = vmul.f32 %v111, %v356
  %v384 = vmul.f32 %v113, %v360
  %v385 = vmul.f32 %v115, %v364
  %v386 = vmul.f32 %v117, %v368
  %v387 = vmul.f32 %v119, %v372
  %v388 = vmul.f32 %v121, %v376
  %v389 = vlaneseq
  %v390 = vshrl.u32 %v389, 7
  %vm391 = vcmp.eq.s32.totalorder %v390, 0
  %vm392 = vcmp.eq.s32.totalorder %v390, 1
  %vm393 = vcmp.eq.s32.totalorder %v390, 2
  %vm394 = vcmp.eq.s32.totalorder %v390, 3
  %v395 = vsel %vm394, %v377, %v75
  %v396 = vsel %vm394, %v378, %v77
  %v397 = vsel %vm394, %v379, %v79
  %v398 = vsel %vm394, %v380, %v81
  %v399 = vsel %vm394, %v381, %v83
  %v400 = vsel %vm394, %v382, %v85
  %v401 = vsel %vm394, %v383, %v87
  %v402 = vsel %vm394, %v384, %v89
  %v403 = vsel %vm394, %v385, %v91
  %v404 = vsel %vm394, %v386, %v93
  %v405 = vsel %vm394, %v387, %v95
  %v406 = vsel %vm394, %v388, %v97
  %v407 = vsel %vm393, %v311, %v395
  %v408 = vsel %vm393, %v312, %v396
  %v409 = vsel %vm393, %v313, %v397
  %v410 = vsel %vm393, %v314, %v398
  %v411 = vsel %vm393, %v315, %v399
  %v412 = vsel %vm393, %v316, %v400
  %v413 = vsel %vm393, %v317, %v401
  %v414 = vsel %vm393, %v318, %v402
  %v415 = vsel %vm393, %v319, %v403
  %v416 = vsel %vm393, %v320, %v404
  %v417 = vsel %vm393, %v321, %v405
  %v418 = vsel %vm393, %v322, %v406
  %v419 = vsel %vm392, %v245, %v407
  %v420 = vsel %vm392, %v246, %v408
  %v421 = vsel %vm392, %v247, %v409
  %v422 = vsel %vm392, %v248, %v410
  %v423 = vsel %vm392, %v249, %v411
  %v424 = vsel %vm392, %v250, %v412
  %v425 = vsel %vm392, %v251, %v413
  %v426 = vsel %vm392, %v252, %v414
  %v427 = vsel %vm392, %v253, %v415
  %v428 = vsel %vm392, %v254, %v416
  %v429 = vsel %vm392, %v255, %v417
  %v430 = vsel %vm392, %v256, %v418
  %v431 = vsel %vm391, %v179, %v419
  %v432 = vsel %vm391, %v180, %v420
  %v433 = vsel %vm391, %v181, %v421
  %v434 = vsel %vm391, %v182, %v422
  %v435 = vsel %vm391, %v183, %v423
  %v436 = vsel %vm391, %v184, %v424
  %v437 = vsel %vm391, %v185, %v425
  %v438 = vsel %vm391, %v186, %v426
  %v439 = vsel %vm391, %v187, %v427
  %v440 = vsel %vm391, %v188, %v428
  %v441 = vsel %vm391, %v189, %v429
  %v442 = vsel %vm391, %v190, %v430
  %443 = vst [vmem:[%s2] sm:$0x7f] %v431
  %444 = vst [vmem:[%s2 + $0x8] sm:$0x7f] %v432
  %445 = vst [vmem:[%s2 + $0x10] sm:$0x7f] %v433
  %446 = vst [vmem:[%s2 + $0x18] sm:$0x7f] %v434
  %447 = vst [vmem:[%s2 + $0x20] sm:$0x7f] %v435
  %448 = vst [vmem:[%s2 + $0x28] sm:$0x7f] %v436
  %449 = vst [vmem:[%s2 + $0x30] sm:$0x7f] %v437
  %450 = vst [vmem:[%s2 + $0x38] sm:$0x7f] %v438
  %451 = vst [vmem:[%s2 + $0x40] sm:$0x7f] %v439
  %452 = vst [vmem:[%s2 + $0x48] sm:$0x7f] %v440
  %453 = vst [vmem:[%s2 + $0x50] sm:$0x7f] %v441
  %454 = vst [vmem:[%s2 + $0x58] sm:$0x7f] %v442
  // Predicated region
  $region10: #{_lambda_.19} parent=0 // pred_check
    _
  $region11: #{_lambda_.19} parent=0 // pred_check_branch
    %456 = sbr.rel (0) target = $region13
  $region12: #{_lambda_.19} parent=0 // pred_region
    _
  $region13: #{_lambda_.19} parent=0 // pred_fallthru
    _
  // Predicated region
  $region14: #{_lambda_.19} parent=0 // pred_check
    _
  $region15: #{_lambda_.19} parent=0 // pred_check_branch
    %458 = sbr.rel (0) target = $region17
  $region16: #{_lambda_.19} parent=0 // pred_region
    _
  $region17: #{_lambda_.19} parent=0 // pred_fallthru
    _

</llo_original>
